<compile_context>
chip_gen: v7x
topology: tpu7x:2x2x1
jax: 0.10.0
libtpu: 0.0.40
codegen_flags: <defaults>
</compile_context>

<pallas_src>
import functools

import jax
import jax.numpy as jnp
from jax.experimental import pallas as pl
from jax.experimental.pallas import tpu as pltpu

_EPS = 1e-5


def _round_up(x, m):
    return (x + m - 1) // m * m


# --------------------------------------------------------------------------- #
# Kernel A: tiled per-channel partial sums / sums of squares (BatchNorm stats). #
# --------------------------------------------------------------------------- #

def _bn_partial_stats_kernel(x_ref, o_ref, *, total_rows):
    tm = x_ref.shape[0]
    row = jax.lax.broadcasted_iota(jnp.int32, (tm, 1), 0) + pl.program_id(0) * tm
    x = jnp.where(row < total_rows, x_ref[...], 0.0)   # mask padded / OOB rows
    o_ref[...] = jnp.zeros_like(o_ref)
    o_ref[0:1, :] = jnp.sum(x, axis=0, keepdims=True)
    o_ref[1:2, :] = jnp.sum(x * x, axis=0, keepdims=True)


def bn_partial_stats(x2d, *, tm=1024):
    """x2d: (M, C) f32 -> (sum, sumsq) per channel, each (C,) f32."""
    m, c = x2d.shape
    mp = _round_up(m, 8)
    if mp != m:                       # zero rows do not perturb sum / sumsq
        x2d = jnp.pad(x2d, ((0, mp - m), (0, 0)))
    tm = min(tm, mp)
    grid = pl.cdiv(mp, tm)
    partial = pl.pallas_call(
        functools.partial(_bn_partial_stats_kernel, total_rows=m),
        out_shape=jax.ShapeDtypeStruct((grid, 8, c), jnp.float32),
        grid=(grid,),
        in_specs=[pl.BlockSpec((tm, c), lambda i: (i, 0))],
        out_specs=pl.BlockSpec((None, 8, c), lambda i: (i, 0, 0)),
        compiler_params=pltpu.CompilerParams(
            dimension_semantics=("parallel",)),
    )(x2d)
    tot = jnp.sum(partial, axis=0)
    return tot[0], tot[1]


# --------------------------------------------------------------------------- #
# Shared in-kernel helpers (contiguous slices + MXU matmuls only).             #
# --------------------------------------------------------------------------- #

def _affine_softsign_to_pad(x_ref, scale_ref, shift_ref, pad_ref):
    hg, wg, _ = x_ref.shape
    # Zero every step: the conv's zero padding applies *after* bn + softsign and
    # with a "parallel" grid we cannot rely on a program_id == 0 init.
    pad_ref[...] = jnp.zeros_like(pad_ref)
    a = x_ref[...] * scale_ref[...] + shift_ref[...]
    pad_ref[1:hg + 1, 1:wg + 1, :] = a / (1.0 + jnp.abs(a))   # F.softsign


def _conv_from_pad(pad_ref, w, hg, wg):
    kh, kw, ct, planes = w.shape
    acc = jnp.zeros((hg * wg, planes), jnp.float32)
    for dy in range(kh):
        for dx in range(kw):
            win = pad_ref[dy:dy + hg, dx:dx + wg, :]
            acc = acc + jnp.dot(win.reshape(hg * wg, ct), w[dy, dx],
                                preferred_element_type=jnp.float32)
    return acc


def _store_bn_partials(st_ref, acc):
    st_ref[...] = jnp.zeros_like(st_ref)
    st_ref[0:1, :] = jnp.sum(acc, axis=0, keepdims=True)
    st_ref[1:2, :] = jnp.sum(acc * acc, axis=0, keepdims=True)


# --------------------------------------------------------------------------- #
# Kernel B: fused bn1-affine + softsign + conv1 (+1x1 shortcut) + bn2 partials. #
# --------------------------------------------------------------------------- #

def _conv1_sc_kernel(x_ref, scale_ref, shift_ref, w_ref, wsc_ref,
                     c1_ref, sc_ref, st_ref, pad_ref, *, cin):
    hg, wg, _ = x_ref.shape
    planes = w_ref.shape[-1]
    _affine_softsign_to_pad(x_ref, scale_ref, shift_ref, pad_ref)
    acc = _conv_from_pad(pad_ref, w_ref[...], hg, wg)
    c1_ref[...] = acc.reshape(hg, wg, planes)
    _store_bn_partials(st_ref, acc)
    # 1x1 strided shortcut conv == matmul on the phase-(0,0) channels.
    ctr = pad_ref[1:hg + 1, 1:wg + 1, 0:cin]
    sc = jnp.dot(ctr.reshape(hg * wg, cin), wsc_ref[...],
                 preferred_element_type=jnp.float32)
    sc_ref[...] = sc.reshape(hg, wg, planes)


def _conv1_id_kernel(x_ref, scale_ref, shift_ref, w_ref,
                     c1_ref, st_ref, pad_ref):
    hg, wg, _ = x_ref.shape
    planes = w_ref.shape[-1]
    _affine_softsign_to_pad(x_ref, scale_ref, shift_ref, pad_ref)
    acc = _conv_from_pad(pad_ref, w_ref[...], hg, wg)
    c1_ref[...] = acc.reshape(hg, wg, planes)
    _store_bn_partials(st_ref, acc)


# --------------------------------------------------------------------------- #
# Kernel C: fused bn2-affine + conv2 (3x3, stride 1) + softsign + residual add. #
# --------------------------------------------------------------------------- #

def _conv2_kernel(c1_ref, scale_ref, shift_ref, w_ref, sc_ref, o_ref, pad_ref):
    ho, wo, planes = c1_ref.shape
    pad_ref[...] = jnp.zeros_like(pad_ref)
    pad_ref[1:ho + 1, 1:wo + 1, :] = (c1_ref[...] * scale_ref[...]
                                      + shift_ref[...])          # bn2 (no act)
    acc = _conv_from_pad(pad_ref, w_ref[...], ho, wo)
    y = acc / (1.0 + jnp.abs(acc))                                # softsign
    o_ref[...] = y.reshape(ho, wo, planes) + sc_ref[...]          # residual add


# --------------------------------------------------------------------------- #
# Wrapper                                                                      #
# --------------------------------------------------------------------------- #

def _s2d_weights_3x3_s2(w):
    """(3,3,Cin,P) stride-2 conv weights -> equivalent (2,2,4*Cin,P) stride-1
    weights over the space-to-depth grid (channel order = (py, px, cin))."""
    _, _, cin, planes = w.shape
    wt = jnp.zeros((2, 2, 2, 2, cin, planes), w.dtype)   # (ay, ax, py, px, c, p)
    amap = {(0, 1): 0, (1, 0): 1, (1, 1): 2}             # (grid offset, phase) -> tap
    for (ay, py), dy in amap.items():
        for (ax, px), dx in amap.items():
            wt = wt.at[ay, ax, py, px].set(w[dy, dx])
    return wt.reshape(2, 2, 4 * cin, planes)


def preact_block_forward(x_nchw, params, *, stride):
    """Pallas-backed PreActBlock forward.  x_nchw: (N, Cin, H, W) float32."""
    gamma1, beta1, w1, gamma2, beta2, w2, w_sc = params
    n, cin, h, w = x_nchw.shape
    planes = w1.shape[-1]
    has_shortcut = (stride != 1) or (cin != planes)

    x_nhwc = jnp.transpose(x_nchw, (0, 2, 3, 1))

    # Fold the conv stride into a space-to-depth layout so the kernels only need
    # contiguous (stride-1) taps.  This is fused into the NCHW->NHWC transpose.
    if stride == 1:
        hg, wg, ct, kh = h, w, cin, 3
        xt, wt = x_nhwc, w1
        tile = 1
    elif stride == 2:
        assert h % 2 == 0 and w % 2 == 0, "stride-2 path needs even H, W"
        hg, wg, ct, kh = h // 2, w // 2, 4 * cin, 2
        xt = x_nhwc.reshape(n, hg, 2, wg, 2, cin).transpose(0, 1, 3, 2, 4, 5)
        xt = xt.reshape(n, hg, wg, ct)
        wt = _s2d_weights_3x3_s2(w1)
        tile = 4
    else:
        raise NotImplementedError("PreActBlock kernels support stride in {1, 2}")

    # -- bn1 batch statistics (tiled Pallas reduction over all pixels) --
    m1_rows = n * h * w
    s_t, ss_t = bn_partial_stats(xt.reshape(n * hg * wg, ct))
    s1 = s_t.reshape(tile, cin).sum(axis=0)
    ss1 = ss_t.reshape(tile, cin).sum(axis=0)
    mean1 = s1 / m1_rows
    # NOTE: single-pass E[x^2]-E[x]^2 in f32 (torch training-mode biased var).
    var1 = ss1 / m1_rows - mean1 * mean1
    scale1 = gamma1 * jax.lax.rsqrt(var1 + _EPS)
    shift1 = beta1 - mean1 * scale1
    scale_t = jnp.tile(scale1, tile).reshape(1, 1, ct)
    shift_t = jnp.tile(shift1, tile).reshape(1, 1, ct)

    # -- fused bn1+softsign+conv1(+shortcut)+bn2-stats, one image per grid step --
    x_spec = pl.BlockSpec((None, hg, wg, ct), lambda i: (i, 0, 0, 0))
    vec_t = pl.BlockSpec((1, 1, ct), lambda i: (0, 0, 0))
    w_spec = pl.BlockSpec((kh, kh, ct, planes), lambda i: (0, 0, 0, 0))
    act_spec = pl.BlockSpec((None, hg, wg, planes), lambda i: (i, 0, 0, 0))
    st_spec = pl.BlockSpec((None, 8, planes), lambda i: (i, 0, 0))
    pad_scratch = pltpu.VMEM((hg + kh - 1, wg + kh - 1, ct), jnp.float32)
    cparams = pltpu.CompilerParams(dimension_semantics=("parallel",),
                                   vmem_limit_bytes=32 * 1024 * 1024)

    c1_shape = jax.ShapeDtypeStruct((n, hg, wg, planes), jnp.float32)
    st_shape = jax.ShapeDtypeStruct((n, 8, planes), jnp.float32)

    if has_shortcut:
        c1, shortcut, st2 = pl.pallas_call(
            functools.partial(_conv1_sc_kernel, cin=cin),
            out_shape=(c1_shape, c1_shape, st_shape),
            grid=(n,),
            in_specs=[x_spec, vec_t, vec_t, w_spec,
                      pl.BlockSpec((cin, planes), lambda i: (0, 0))],
            out_specs=(act_spec, act_spec, st_spec),
            scratch_shapes=[pad_scratch],
            compiler_params=cparams,
        )(xt, scale_t, shift_t, wt, w_sc)
    else:
        c1, st2 = pl.pallas_call(
            _conv1_id_kernel,
            out_shape=(c1_shape, st_shape),
            grid=(n,),
            in_specs=[x_spec, vec_t, vec_t, w_spec],
            out_specs=(act_spec, st_spec),
            scratch_shapes=[pad_scratch],
            compiler_params=cparams,
        )(xt, scale_t, shift_t, wt)
        shortcut = xt          # identity shortcut: the raw input itself

    # -- bn2 scale/shift from the conv1 kernel's per-image partial statistics --
    m2_rows = n * hg * wg
    tot2 = jnp.sum(st2, axis=0)
    mean2 = tot2[0] / m2_rows
    var2 = tot2[1] / m2_rows - mean2 * mean2
    scale2 = gamma2 * jax.lax.rsqrt(var2 + _EPS)
    shift2 = beta2 - mean2 * scale2

    # -- fused bn2 + conv2 + softsign + residual add; shortcut aliased to output --
    io_spec = pl.BlockSpec((None, hg, wg, planes), lambda i: (i, 0, 0, 0))
    vec_p = pl.BlockSpec((1, 1, planes), lambda i: (0, 0, 0))
    out = pl.pallas_call(
        _conv2_kernel,
        out_shape=jax.ShapeDtypeStruct((n, hg, wg, planes), jnp.float32),
        grid=(n,),
        in_specs=[io_spec, vec_p, vec_p,
                  pl.BlockSpec((3, 3, planes, planes), lambda i: (0, 0, 0, 0)),
                  io_spec],
        out_specs=io_spec,
        scratch_shapes=[pltpu.VMEM((hg + 2, wg + 2, planes), jnp.float32)],
        input_output_aliases={4: 0},
        compiler_params=cparams,
    )(c1, scale2.reshape(1, 1, planes), shift2.reshape(1, 1, planes), w2, shortcut)

    return jnp.transpose(out, (0, 3, 1, 2))        # NHWC -> NCHW


# ---------------------------- pure-JAX reference ---------------------------- #

def _im2col_3x3(x_nhwc, stride):   # reference only
    N, H, W, C = x_nhwc.shape
    xp = jnp.pad(x_nhwc, ((0, 0), (1, 1), (1, 1), (0, 0)))
    Ho = (H + 2 - 3) // stride + 1
    Wo = (W + 2 - 3) // stride + 1
    cols = []
    for dy in range(3):
        for dx in range(3):
            cols.append(xp[:, dy:dy + stride * (Ho - 1) + 1:stride,
                           dx:dx + stride * (Wo - 1) + 1:stride, :])
    patches = jnp.concatenate(cols, axis=-1)
    return patches.reshape(N * Ho * Wo, 9 * C), (N, Ho, Wo)


def _ref_forward(x_nchw, params, *, stride):
    gamma1, beta1, w1, gamma2, beta2, w2, w_sc = params
    planes = w1.shape[-1]
    x = jnp.transpose(x_nchw, (0, 2, 3, 1))
    N, H, W, Cin = x.shape

    def bn(z2d, g, b):
        m = jnp.mean(z2d, axis=0, keepdims=True)
        v = jnp.mean(z2d * z2d, axis=0, keepdims=True) - m * m
        return (z2d - m) * jax.lax.rsqrt(v + _EPS) * g.reshape(1, -1) + b.reshape(1, -1)

    def ss(z):
        return z / (1.0 + jnp.abs(z))

    out1 = ss(bn(x.reshape(-1, Cin), gamma1, beta1)).reshape(N, H, W, Cin)
    if (stride != 1) or (Cin != planes):
        sub = out1[:, ::stride, ::stride, :]
        shortcut = jnp.dot(sub.reshape(-1, Cin), w_sc)
    else:
        shortcut = x.reshape(-1, Cin)
    p1, _ = _im2col_3x3(out1, stride)
    c1 = jnp.dot(p1, w1.reshape(9 * Cin, planes))
    Ho, Wo = (H + 2 - 3) // stride + 1, (W + 2 - 3) // stride + 1
    u = bn(c1, gamma2, beta2)
    p2, _ = _im2col_3x3(u.reshape(N, Ho, Wo, planes), 1)
    out = ss(jnp.dot(p2, w2.reshape(9 * planes, planes))) + shortcut
    return jnp.transpose(out.reshape(N, Ho, Wo, planes), (0, 3, 1, 2))


# ----------------------------------- main ----------------------------------- #

if __name__ == "__main__":
    B, Cin, H, W = 2, 4, 16, 16
    planes, stride = 8, 2                       # stride != 1 -> shortcut conv path

    key = jax.random.PRNGKey(0)
    ks = jax.random.split(key, 8)
    x = jax.random.normal(ks[0], (B, Cin, H, W), jnp.float32)

    # Deterministic parameter init (shapes per nn.Module __init__); weights stored
    # directly in (kh, kw, cin, cout) / (cin, cout) layout used by the kernels.
    gamma1 = 1.0 + 0.1 * jax.random.normal(ks[1], (Cin,), jnp.float32)
    beta1 = 0.1 * jax.random.normal(ks[2], (Cin,), jnp.float32)
    w1 = 0.2 * jax.random.normal(ks[3], (3, 3, Cin, planes), jnp.float32)
    gamma2 = 1.0 + 0.1 * jax.random.normal(ks[4], (planes,), jnp.float32)
    beta2 = 0.1 * jax.random.normal(ks[5], (planes,), jnp.float32)
    w2 = 0.2 * jax.random.normal(ks[6], (3, 3, planes, planes), jnp.float32)
    w_sc = 0.3 * jax.random.normal(ks[7], (Cin, planes), jnp.float32)
    params = (gamma1, beta1, w1, gamma2, beta2, w2, w_sc)

    fwd = jax.jit(functools.partial(preact_block_forward, stride=stride))
    out = jax.block_until_ready(fwd(x, params))
    assert out.shape == (B, planes, H // stride, W // stride), out.shape

    ref = jax.block_until_ready(_ref_forward(x, params, stride=stride))
    err = float(jnp.max(jnp.abs(out - ref)))
    assert err < 5e-3, err

    print("KERNEL_OK")
</pallas_src>

<mosaic_0001>
module attributes {stable_mosaic.version = 11 : i64} {
  func.func @_bn_partial_stats_kernel(%arg0: i32, %arg1: memref<128x16xf32, #tpu.memory_space<vmem>>, %arg2: memref<1x8x16xf32, #tpu.memory_space<vmem>>) attributes {dimension_semantics = [#tpu.dimension_semantics<parallel>], iteration_bounds = array<i64: 1>, scalar_prefetch = 0 : i64, scratch_operands = 0 : i64, tpu.core_type = #tpu.core_type<tc>, window_params = [{transform_indices = @transform_0, window_bounds = array<i64: 128, 16>}, {transform_indices = @transform_1, window_bounds = array<i64: 1, 8, 16>}]} {
    %0 = tpu.iota {dimensions = array<i32: 0>} : vector<128x1xi32>
    %c128_i32 = arith.constant 128 : i32
    %1 = arith.muli %arg0, %c128_i32 : i32
    %2 = vector.broadcast %1 : i32 to vector<128x1xi32>
    %3 = arith.addi %0, %2 : vector<128x1xi32>
    %c128_i32_0 = arith.constant 128 : i32
    %4 = vector.broadcast %c128_i32_0 : i32 to vector<128x1xi32>
    %5 = arith.cmpi slt, %3, %4 : vector<128x1xi32>
    %c0 = arith.constant 0 : index
    %c0_1 = arith.constant 0 : index
    %6 = vector.load %arg1[%c0, %c0_1] : memref<128x16xf32, #tpu.memory_space<vmem>>, vector<128x16xf32>
    %cst = arith.constant 0.000000e+00 : f32
    %7 = vector.shape_cast %5 : vector<128x1xi1> to vector<128x1xi1>
    %8 = vector.broadcast %7 : vector<128x1xi1> to vector<128x16xi1>
    %9 = vector.broadcast %cst : f32 to vector<128x16xf32>
    %10 = arith.select %8, %6, %9 : vector<128x16xi1>, vector<128x16xf32>
    %cst_2 = arith.constant 0.000000e+00 : f32
    %11 = vector.broadcast %cst_2 : f32 to vector<8x16xf32>
    %c0_3 = arith.constant 0 : index
    %c0_4 = arith.constant 0 : index
    %c0_5 = arith.constant 0 : index
    %12 = vector.load %arg2[%c0_3, %c0_4, %c0_5] : memref<1x8x16xf32, #tpu.memory_space<vmem>>, vector<1x8x16xf32>
    %13 = vector.shape_cast %12 : vector<1x8x16xf32> to vector<8x16xf32>
    %14 = vector.shape_cast %11 : vector<8x16xf32> to vector<1x8x16xf32>
    tpu.vector_store %arg2[%c0_3, %c0_4, %c0_5], %14 {strides = array<i32>} : memref<1x8x16xf32, #tpu.memory_space<vmem>>, vector<1x8x16xf32>,
    %cst_6 = arith.constant dense<0.000000e+00> : vector<16xf32>
    %15 = vector.multi_reduction <add>, %10, %cst_6 [0] : vector<128x16xf32> to vector<16xf32>
    %16 = vector.shape_cast %15 : vector<16xf32> to vector<1x16xf32>
    %c0_7 = arith.constant 0 : index
    %c0_8 = arith.constant 0 : index
    %c0_9 = arith.constant 0 : index
    %17 = vector.load %arg2[%c0_7, %c0_8, %c0_9] : memref<1x8x16xf32, #tpu.memory_space<vmem>>, vector<1x1x16xf32>
    %18 = vector.shape_cast %17 : vector<1x1x16xf32> to vector<1x16xf32>
    %19 = vector.shape_cast %16 : vector<1x16xf32> to vector<1x1x16xf32>
    tpu.vector_store %arg2[%c0_7, %c0_8, %c0_9], %19 {strides = array<i32>} : memref<1x8x16xf32, #tpu.memory_space<vmem>>, vector<1x1x16xf32>,
    %20 = arith.mulf %10, %10 : vector<128x16xf32>
    %cst_10 = arith.constant dense<0.000000e+00> : vector<16xf32>
    %21 = vector.multi_reduction <add>, %20, %cst_10 [0] : vector<128x16xf32> to vector<16xf32>
    %22 = vector.shape_cast %21 : vector<16xf32> to vector<1x16xf32>
    %c0_11 = arith.constant 0 : index
    %c1 = arith.constant 1 : index
    %c0_12 = arith.constant 0 : index
    %23 = vector.load %arg2[%c0_11, %c1, %c0_12] : memref<1x8x16xf32, #tpu.memory_space<vmem>>, vector<1x1x16xf32>
    %24 = vector.shape_cast %23 : vector<1x1x16xf32> to vector<1x16xf32>
    %25 = vector.shape_cast %22 : vector<1x16xf32> to vector<1x1x16xf32>
    tpu.vector_store %arg2[%c0_11, %c1, %c0_12], %25 {strides = array<i32>} : memref<1x8x16xf32, #tpu.memory_space<vmem>>, vector<1x1x16xf32>,
    return
  }
  func.func @transform_0(%arg0: i32) -> (i32, i32) {
    %c0_i32 = arith.constant 0 : i32
    %c0_i32_0 = arith.constant 0 : i32
    return %arg0, %c0_i32 : i32, i32
  }
  func.func @transform_1(%arg0: i32) -> (i32, i32, i32) {
    %c0_i32 = arith.constant 0 : i32
    %c0_i32_0 = arith.constant 0 : i32
    %c0_i32_1 = arith.constant 0 : i32
    return %arg0, %c0_i32, %c0_i32_0 : i32, i32, i32
  }
}

module attributes {stable_mosaic.version = 11 : i64} {
  func.func @_conv2_kernel(%arg0: i32, %arg1: memref<1x8x8x8xf32, #tpu.memory_space<vmem>>, %arg2: memref<1x1x8xf32, #tpu.memory_space<vmem>>, %arg3: memref<1x1x8xf32, #tpu.memory_space<vmem>>, %arg4: memref<3x3x8x8xf32, #tpu.memory_space<vmem>>, %arg5: memref<1x8x8x8xf32, #tpu.memory_space<vmem>>, %arg6: memref<1x8x8x8xf32, #tpu.memory_space<vmem>>, %arg7: memref<10x10x8xf32, #tpu.memory_space<vmem>>) attributes {dimension_semantics = [#tpu.dimension_semantics<parallel>], iteration_bounds = array<i64: 2>, scalar_prefetch = 0 : i64, scratch_operands = 1 : i64, tpu.core_type = #tpu.core_type<tc>, window_params = [{transform_indices = @transform_0, window_bounds = array<i64: 1, 8, 8, 8>}, {pipeline_mode = #tpu.pipeline_mode<synchronous>, transform_indices = @transform_1, window_bounds = array<i64: 1, 1, 8>}, {pipeline_mode = #tpu.pipeline_mode<synchronous>, transform_indices = @transform_2, window_bounds = array<i64: 1, 1, 8>}, {pipeline_mode = #tpu.pipeline_mode<synchronous>, transform_indices = @transform_3, window_bounds = array<i64: 3, 3, 8, 8>}, {transform_indices = @transform_4, window_bounds = array<i64: 1, 8, 8, 8>}, {transform_indices = @transform_5, window_bounds = array<i64: 1, 8, 8, 8>}]} {
    %cst = arith.constant 0.000000e+00 : f32
    %0 = vector.broadcast %cst : f32 to vector<10x10x8xf32>
    %c0 = arith.constant 0 : index
    %c0_0 = arith.constant 0 : index
    %c0_1 = arith.constant 0 : index
    %1 = vector.load %arg7[%c0, %c0_0, %c0_1] : memref<10x10x8xf32, #tpu.memory_space<vmem>>, vector<10x10x8xf32>
    tpu.vector_store %arg7[%c0, %c0_0, %c0_1], %0 {strides = array<i32>} : memref<10x10x8xf32, #tpu.memory_space<vmem>>, vector<10x10x8xf32>,
    %c0_2 = arith.constant 0 : index
    %c0_3 = arith.constant 0 : index
    %c0_4 = arith.constant 0 : index
    %c0_5 = arith.constant 0 : index
    %2 = vector.load %arg1[%c0_2, %c0_3, %c0_4, %c0_5] : memref<1x8x8x8xf32, #tpu.memory_space<vmem>>, vector<1x8x8x8xf32>
    %3 = vector.shape_cast %2 : vector<1x8x8x8xf32> to vector<8x8x8xf32>
    %c0_6 = arith.constant 0 : index
    %c0_7 = arith.constant 0 : index
    %c0_8 = arith.constant 0 : index
    %4 = vector.load %arg2[%c0_6, %c0_7, %c0_8] : memref<1x1x8xf32, #tpu.memory_space<vmem>>, vector<1x1x8xf32>
    %5 = vector.broadcast %4 : vector<1x1x8xf32> to vector<8x8x8xf32>
    %6 = arith.mulf %3, %5 : vector<8x8x8xf32>
    %c0_9 = arith.constant 0 : index
    %c0_10 = arith.constant 0 : index
    %c0_11 = arith.constant 0 : index
    %7 = vector.load %arg3[%c0_9, %c0_10, %c0_11] : memref<1x1x8xf32, #tpu.memory_space<vmem>>, vector<1x1x8xf32>
    %8 = vector.broadcast %7 : vector<1x1x8xf32> to vector<8x8x8xf32>
    %9 = arith.addf %6, %8 : vector<8x8x8xf32>
    %c1 = arith.constant 1 : index
    %c1_12 = arith.constant 1 : index
    %c0_13 = arith.constant 0 : index
    %10 = vector.load %arg7[%c1, %c1_12, %c0_13] : memref<10x10x8xf32, #tpu.memory_space<vmem>>, vector<8x8x8xf32>
    tpu.vector_store %arg7[%c1, %c1_12, %c0_13], %9 {strides = array<i32>} : memref<10x10x8xf32, #tpu.memory_space<vmem>>, vector<8x8x8xf32>,
    %c0_14 = arith.constant 0 : index
    %c0_15 = arith.constant 0 : index
    %c0_16 = arith.constant 0 : index
    %c0_17 = arith.constant 0 : index
    %11 = vector.load %arg4[%c0_14, %c0_15, %c0_16, %c0_17] : memref<3x3x8x8xf32, #tpu.memory_space<vmem>>, vector<3x3x8x8xf32>
    %cst_18 = arith.constant 0.000000e+00 : f32
    %12 = vector.broadcast %cst_18 : f32 to vector<64x8xf32>
    %c0_19 = arith.constant 0 : index
    %c0_20 = arith.constant 0 : index
    %c0_21 = arith.constant 0 : index
    %13 = vector.load %arg7[%c0_19, %c0_20, %c0_21] : memref<10x10x8xf32, #tpu.memory_space<vmem>>, vector<8x8x8xf32>
    %14 = vector.shape_cast %13 : vector<8x8x8xf32> to vector<64x8xf32>
    %15 = vector.extract_strided_slice %11 {offsets = [0, 0, 0, 0], sizes = [1, 1, 8, 8], strides = [1, 1, 1, 1]} : vector<3x3x8x8xf32> to vector<1x1x8x8xf32>
    %16 = vector.shape_cast %15 : vector<1x1x8x8xf32> to vector<8x8xf32>
    %cst_22 = arith.constant dense<0.000000e+00> : vector<64x8xf32>
    %17 = tpu.matmul %14, %16, %cst_22 {dimension_numbers = #tpu.dot_dimension_numbers<[1], [0], [0], [1], [0, 0, 1, 1], [], []>} : vector<64x8xf32>, vector<8x8xf32>, vector<64x8xf32> -> vector<64x8xf32>
    %18 = arith.addf %12, %17 : vector<64x8xf32>
    %c0_23 = arith.constant 0 : index
    %c1_24 = arith.constant 1 : index
    %c0_25 = arith.constant 0 : index
    %19 = vector.load %arg7[%c0_23, %c1_24, %c0_25] : memref<10x10x8xf32, #tpu.memory_space<vmem>>, vector<8x8x8xf32>
    %20 = vector.shape_cast %19 : vector<8x8x8xf32> to vector<64x8xf32>
    %21 = vector.extract_strided_slice %11 {offsets = [0, 1, 0, 0], sizes = [1, 1, 8, 8], strides = [1, 1, 1, 1]} : vector<3x3x8x8xf32> to vector<1x1x8x8xf32>
    %22 = vector.shape_cast %21 : vector<1x1x8x8xf32> to vector<8x8xf32>
    %cst_26 = arith.constant dense<0.000000e+00> : vector<64x8xf32>
    %23 = tpu.matmul %20, %22, %cst_26 {dimension_numbers = #tpu.dot_dimension_numbers<[1], [0], [0], [1], [0, 0, 1, 1], [], []>} : vector<64x8xf32>, vector<8x8xf32>, vector<64x8xf32> -> vector<64x8xf32>
    %24 = arith.addf %18, %23 : vector<64x8xf32>
    %c0_27 = arith.constant 0 : index
    %c2 = arith.constant 2 : index
    %c0_28 = arith.constant 0 : index
    %25 = vector.load %arg7[%c0_27, %c2, %c0_28] : memref<10x10x8xf32, #tpu.memory_space<vmem>>, vector<8x8x8xf32>
    %26 = vector.shape_cast %25 : vector<8x8x8xf32> to vector<64x8xf32>
    %27 = vector.extract_strided_slice %11 {offsets = [0, 2, 0, 0], sizes = [1, 1, 8, 8], strides = [1, 1, 1, 1]} : vector<3x3x8x8xf32> to vector<1x1x8x8xf32>
    %28 = vector.shape_cast %27 : vector<1x1x8x8xf32> to vector<8x8xf32>
    %cst_29 = arith.constant dense<0.000000e+00> : vector<64x8xf32>
    %29 = tpu.matmul %26, %28, %cst_29 {dimension_numbers = #tpu.dot_dimension_numbers<[1], [0], [0], [1], [0, 0, 1, 1], [], []>} : vector<64x8xf32>, vector<8x8xf32>, vector<64x8xf32> -> vector<64x8xf32>
    %30 = arith.addf %24, %29 : vector<64x8xf32>
    %c1_30 = arith.constant 1 : index
    %c0_31 = arith.constant 0 : index
    %c0_32 = arith.constant 0 : index
    %31 = vector.load %arg7[%c1_30, %c0_31, %c0_32] : memref<10x10x8xf32, #tpu.memory_space<vmem>>, vector<8x8x8xf32>
    %32 = vector.shape_cast %31 : vector<8x8x8xf32> to vector<64x8xf32>
    %33 = vector.extract_strided_slice %11 {offsets = [1, 0, 0, 0], sizes = [1, 1, 8, 8], strides = [1, 1, 1, 1]} : vector<3x3x8x8xf32> to vector<1x1x8x8xf32>
    %34 = vector.shape_cast %33 : vector<1x1x8x8xf32> to vector<8x8xf32>
    %cst_33 = arith.constant dense<0.000000e+00> : vector<64x8xf32>
    %35 = tpu.matmul %32, %34, %cst_33 {dimension_numbers = #tpu.dot_dimension_numbers<[1], [0], [0], [1], [0, 0, 1, 1], [], []>} : vector<64x8xf32>, vector<8x8xf32>, vector<64x8xf32> -> vector<64x8xf32>
    %36 = arith.addf %30, %35 : vector<64x8xf32>
    %c1_34 = arith.constant 1 : index
    %c1_35 = arith.constant 1 : index
    %c0_36 = arith.constant 0 : index
    %37 = vector.load %arg7[%c1_34, %c1_35, %c0_36] : memref<10x10x8xf32, #tpu.memory_space<vmem>>, vector<8x8x8xf32>
    %38 = vector.shape_cast %37 : vector<8x8x8xf32> to vector<64x8xf32>
    %39 = vector.extract_strided_slice %11 {offsets = [1, 1, 0, 0], sizes = [1, 1, 8, 8], strides = [1, 1, 1, 1]} : vector<3x3x8x8xf32> to vector<1x1x8x8xf32>
    %40 = vector.shape_cast %39 : vector<1x1x8x8xf32> to vector<8x8xf32>
    %cst_37 = arith.constant dense<0.000000e+00> : vector<64x8xf32>
    %41 = tpu.matmul %38, %40, %cst_37 {dimension_numbers = #tpu.dot_dimension_numbers<[1], [0], [0], [1], [0, 0, 1, 1], [], []>} : vector<64x8xf32>, vector<8x8xf32>, vector<64x8xf32> -> vector<64x8xf32>
    %42 = arith.addf %36, %41 : vector<64x8xf32>
    %c1_38 = arith.constant 1 : index
    %c2_39 = arith.constant 2 : index
    %c0_40 = arith.constant 0 : index
    %43 = vector.load %arg7[%c1_38, %c2_39, %c0_40] : memref<10x10x8xf32, #tpu.memory_space<vmem>>, vector<8x8x8xf32>
    %44 = vector.shape_cast %43 : vector<8x8x8xf32> to vector<64x8xf32>
    %45 = vector.extract_strided_slice %11 {offsets = [1, 2, 0, 0], sizes = [1, 1, 8, 8], strides = [1, 1, 1, 1]} : vector<3x3x8x8xf32> to vector<1x1x8x8xf32>
    %46 = vector.shape_cast %45 : vector<1x1x8x8xf32> to vector<8x8xf32>
    %cst_41 = arith.constant dense<0.000000e+00> : vector<64x8xf32>
    %47 = tpu.matmul %44, %46, %cst_41 {dimension_numbers = #tpu.dot_dimension_numbers<[1], [0], [0], [1], [0, 0, 1, 1], [], []>} : vector<64x8xf32>, vector<8x8xf32>, vector<64x8xf32> -> vector<64x8xf32>
    %48 = arith.addf %42, %47 : vector<64x8xf32>
    %c2_42 = arith.constant 2 : index
    %c0_43 = arith.constant 0 : index
    %c0_44 = arith.constant 0 : index
    %49 = vector.load %arg7[%c2_42, %c0_43, %c0_44] : memref<10x10x8xf32, #tpu.memory_space<vmem>>, vector<8x8x8xf32>
    %50 = vector.shape_cast %49 : vector<8x8x8xf32> to vector<64x8xf32>
    %51 = vector.extract_strided_slice %11 {offsets = [2, 0, 0, 0], sizes = [1, 1, 8, 8], strides = [1, 1, 1, 1]} : vector<3x3x8x8xf32> to vector<1x1x8x8xf32>
    %52 = vector.shape_cast %51 : vector<1x1x8x8xf32> to vector<8x8xf32>
    %cst_45 = arith.constant dense<0.000000e+00> : vector<64x8xf32>
    %53 = tpu.matmul %50, %52, %cst_45 {dimension_numbers = #tpu.dot_dimension_numbers<[1], [0], [0], [1], [0, 0, 1, 1], [], []>} : vector<64x8xf32>, vector<8x8xf32>, vector<64x8xf32> -> vector<64x8xf32>
    %54 = arith.addf %48, %53 : vector<64x8xf32>
    %c2_46 = arith.constant 2 : index
    %c1_47 = arith.constant 1 : index
    %c0_48 = arith.constant 0 : index
    %55 = vector.load %arg7[%c2_46, %c1_47, %c0_48] : memref<10x10x8xf32, #tpu.memory_space<vmem>>, vector<8x8x8xf32>
    %56 = vector.shape_cast %55 : vector<8x8x8xf32> to vector<64x8xf32>
    %57 = vector.extract_strided_slice %11 {offsets = [2, 1, 0, 0], sizes = [1, 1, 8, 8], strides = [1, 1, 1, 1]} : vector<3x3x8x8xf32> to vector<1x1x8x8xf32>
    %58 = vector.shape_cast %57 : vector<1x1x8x8xf32> to vector<8x8xf32>
    %cst_49 = arith.constant dense<0.000000e+00> : vector<64x8xf32>
    %59 = tpu.matmul %56, %58, %cst_49 {dimension_numbers = #tpu.dot_dimension_numbers<[1], [0], [0], [1], [0, 0, 1, 1], [], []>} : vector<64x8xf32>, vector<8x8xf32>, vector<64x8xf32> -> vector<64x8xf32>
    %60 = arith.addf %54, %59 : vector<64x8xf32>
    %c2_50 = arith.constant 2 : index
    %c2_51 = arith.constant 2 : index
    %c0_52 = arith.constant 0 : index
    %61 = vector.load %arg7[%c2_50, %c2_51, %c0_52] : memref<10x10x8xf32, #tpu.memory_space<vmem>>, vector<8x8x8xf32>
    %62 = vector.shape_cast %61 : vector<8x8x8xf32> to vector<64x8xf32>
    %63 = vector.extract_strided_slice %11 {offsets = [2, 2, 0, 0], sizes = [1, 1, 8, 8], strides = [1, 1, 1, 1]} : vector<3x3x8x8xf32> to vector<1x1x8x8xf32>
    %64 = vector.shape_cast %63 : vector<1x1x8x8xf32> to vector<8x8xf32>
    %cst_53 = arith.constant dense<0.000000e+00> : vector<64x8xf32>
    %65 = tpu.matmul %62, %64, %cst_53 {dimension_numbers = #tpu.dot_dimension_numbers<[1], [0], [0], [1], [0, 0, 1, 1], [], []>} : vector<64x8xf32>, vector<8x8xf32>, vector<64x8xf32> -> vector<64x8xf32>
    %66 = arith.addf %60, %65 : vector<64x8xf32>
    %67 = math.absf %66 : vector<64x8xf32>
    %cst_54 = arith.constant 1.000000e+00 : f32
    %68 = vector.broadcast %cst_54 : f32 to vector<64x8xf32>
    %69 = arith.addf %68, %67 : vector<64x8xf32>
    %70 = arith.divf %66, %69 : vector<64x8xf32>
    %71 = vector.shape_cast %70 : vector<64x8xf32> to vector<8x8x8xf32>
    %c0_55 = arith.constant 0 : index
    %c0_56 = arith.constant 0 : index
    %c0_57 = arith.constant 0 : index
    %c0_58 = arith.constant 0 : index
    %72 = vector.load %arg5[%c0_55, %c0_56, %c0_57, %c0_58] : memref<1x8x8x8xf32, #tpu.memory_space<vmem>>, vector<1x8x8x8xf32>
    %73 = vector.shape_cast %72 : vector<1x8x8x8xf32> to vector<8x8x8xf32>
    %74 = arith.addf %71, %73 : vector<8x8x8xf32>
    %c0_59 = arith.constant 0 : index
    %c0_60 = arith.constant 0 : index
    %c0_61 = arith.constant 0 : index
    %c0_62 = arith.constant 0 : index
    %75 = vector.load %arg6[%c0_59, %c0_60, %c0_61, %c0_62] : memref<1x8x8x8xf32, #tpu.memory_space<vmem>>, vector<1x8x8x8xf32>
    %76 = vector.shape_cast %75 : vector<1x8x8x8xf32> to vector<8x8x8xf32>
    %77 = vector.shape_cast %74 : vector<8x8x8xf32> to vector<1x8x8x8xf32>
    tpu.vector_store %arg6[%c0_59, %c0_60, %c0_61, %c0_62], %77 {strides = array<i32>} : memref<1x8x8x8xf32, #tpu.memory_space<vmem>>, vector<1x8x8x8xf32>,
    return
  }
  func.func @transform_0(%arg0: i32) -> (i32, i32, i32, i32) {
    %c0_i32 = arith.constant 0 : i32
    %c0_i32_0 = arith.constant 0 : i32
    %c0_i32_1 = arith.constant 0 : i32
    %c0_i32_2 = arith.constant 0 : i32
    return %arg0, %c0_i32, %c0_i32_0, %c0_i32_1 : i32, i32, i32, i32
  }
  func.func @transform_1(%arg0: i32) -> (i32, i32, i32) {
    %c0_i32 = arith.constant 0 : i32
    %c0_i32_0 = arith.constant 0 : i32
    %c0_i32_1 = arith.constant 0 : i32
    %c0_i32_2 = arith.constant 0 : i32
    return %c0_i32, %c0_i32_0, %c0_i32_1 : i32, i32, i32
  }
  func.func @transform_2(%arg0: i32) -> (i32, i32, i32) {
    %c0_i32 = arith.constant 0 : i32
    %c0_i32_0 = arith.constant 0 : i32
    %c0_i32_1 = arith.constant 0 : i32
    %c0_i32_2 = arith.constant 0 : i32
    return %c0_i32, %c0_i32_0, %c0_i32_1 : i32, i32, i32
  }
  func.func @transform_3(%arg0: i32) -> (i32, i32, i32, i32) {
    %c0_i32 = arith.constant 0 : i32
    %c0_i32_0 = arith.constant 0 : i32
    %c0_i32_1 = arith.constant 0 : i32
    %c0_i32_2 = arith.constant 0 : i32
    %c0_i32_3 = arith.constant 0 : i32
    return %c0_i32, %c0_i32_0, %c0_i32_1, %c0_i32_2 : i32, i32, i32, i32
  }
  func.func @transform_4(%arg0: i32) -> (i32, i32, i32, i32) {
    %c0_i32 = arith.constant 0 : i32
    %c0_i32_0 = arith.constant 0 : i32
    %c0_i32_1 = arith.constant 0 : i32
    %c0_i32_2 = arith.constant 0 : i32
    return %arg0, %c0_i32, %c0_i32_0, %c0_i32_1 : i32, i32, i32, i32
  }
  func.func @transform_5(%arg0: i32) -> (i32, i32, i32, i32) {
    %c0_i32 = arith.constant 0 : i32
    %c0_i32_0 = arith.constant 0 : i32
    %c0_i32_1 = arith.constant 0 : i32
    %c0_i32_2 = arith.constant 0 : i32
    return %arg0, %c0_i32, %c0_i32_0, %c0_i32_1 : i32, i32, i32, i32
  }
}

module attributes {stable_mosaic.version = 11 : i64} {
  func.func @_conv1_sc_kernel(%arg0: i32, %arg1: memref<1x8x8x16xf32, #tpu.memory_space<vmem>>, %arg2: memref<1x1x16xf32, #tpu.memory_space<vmem>>, %arg3: memref<1x1x16xf32, #tpu.memory_space<vmem>>, %arg4: memref<2x2x16x8xf32, #tpu.memory_space<vmem>>, %arg5: memref<4x8xf32, #tpu.memory_space<vmem>>, %arg6: memref<1x8x8x8xf32, #tpu.memory_space<vmem>>, %arg7: memref<1x8x8x8xf32, #tpu.memory_space<vmem>>, %arg8: memref<1x8x8xf32, #tpu.memory_space<vmem>>, %arg9: memref<9x9x16xf32, #tpu.memory_space<vmem>>) attributes {dimension_semantics = [#tpu.dimension_semantics<parallel>], iteration_bounds = array<i64: 2>, scalar_prefetch = 0 : i64, scratch_operands = 1 : i64, tpu.core_type = #tpu.core_type<tc>, window_params = [{transform_indices = @transform_0, window_bounds = array<i64: 1, 8, 8, 16>}, {pipeline_mode = #tpu.pipeline_mode<synchronous>, transform_indices = @transform_1, window_bounds = array<i64: 1, 1, 16>}, {pipeline_mode = #tpu.pipeline_mode<synchronous>, transform_indices = @transform_2, window_bounds = array<i64: 1, 1, 16>}, {pipeline_mode = #tpu.pipeline_mode<synchronous>, transform_indices = @transform_3, window_bounds = array<i64: 2, 2, 16, 8>}, {pipeline_mode = #tpu.pipeline_mode<synchronous>, transform_indices = @transform_4, window_bounds = array<i64: 4, 8>}, {transform_indices = @transform_5, window_bounds = array<i64: 1, 8, 8, 8>}, {transform_indices = @transform_6, window_bounds = array<i64: 1, 8, 8, 8>}, {transform_indices = @transform_7, window_bounds = array<i64: 1, 8, 8>}]} {
    %cst = arith.constant 0.000000e+00 : f32
    %0 = vector.broadcast %cst : f32 to vector<9x9x16xf32>
    %c0 = arith.constant 0 : index
    %c0_0 = arith.constant 0 : index
    %c0_1 = arith.constant 0 : index
    %1 = vector.load %arg9[%c0, %c0_0, %c0_1] : memref<9x9x16xf32, #tpu.memory_space<vmem>>, vector<9x9x16xf32>
    tpu.vector_store %arg9[%c0, %c0_0, %c0_1], %0 {strides = array<i32>} : memref<9x9x16xf32, #tpu.memory_space<vmem>>, vector<9x9x16xf32>,
    %c0_2 = arith.constant 0 : index
    %c0_3 = arith.constant 0 : index
    %c0_4 = arith.constant 0 : index
    %c0_5 = arith.constant 0 : index
    %2 = vector.load %arg1[%c0_2, %c0_3, %c0_4, %c0_5] : memref<1x8x8x16xf32, #tpu.memory_space<vmem>>, vector<1x8x8x16xf32>
    %3 = vector.shape_cast %2 : vector<1x8x8x16xf32> to vector<8x8x16xf32>
    %c0_6 = arith.constant 0 : index
    %c0_7 = arith.constant 0 : index
    %c0_8 = arith.constant 0 : index
    %4 = vector.load %arg2[%c0_6, %c0_7, %c0_8] : memref<1x1x16xf32, #tpu.memory_space<vmem>>, vector<1x1x16xf32>
    %5 = vector.broadcast %4 : vector<1x1x16xf32> to vector<8x8x16xf32>
    %6 = arith.mulf %3, %5 : vector<8x8x16xf32>
    %c0_9 = arith.constant 0 : index
    %c0_10 = arith.constant 0 : index
    %c0_11 = arith.constant 0 : index
    %7 = vector.load %arg3[%c0_9, %c0_10, %c0_11] : memref<1x1x16xf32, #tpu.memory_space<vmem>>, vector<1x1x16xf32>
    %8 = vector.broadcast %7 : vector<1x1x16xf32> to vector<8x8x16xf32>
    %9 = arith.addf %6, %8 : vector<8x8x16xf32>
    %10 = math.absf %9 : vector<8x8x16xf32>
    %cst_12 = arith.constant 1.000000e+00 : f32
    %11 = vector.broadcast %cst_12 : f32 to vector<8x8x16xf32>
    %12 = arith.addf %11, %10 : vector<8x8x16xf32>
    %13 = arith.divf %9, %12 : vector<8x8x16xf32>
    %c1 = arith.constant 1 : index
    %c1_13 = arith.constant 1 : index
    %c0_14 = arith.constant 0 : index
    %14 = vector.load %arg9[%c1, %c1_13, %c0_14] : memref<9x9x16xf32, #tpu.memory_space<vmem>>, vector<8x8x16xf32>
    tpu.vector_store %arg9[%c1, %c1_13, %c0_14], %13 {strides = array<i32>} : memref<9x9x16xf32, #tpu.memory_space<vmem>>, vector<8x8x16xf32>,
    %c0_15 = arith.constant 0 : index
    %c0_16 = arith.constant 0 : index
    %c0_17 = arith.constant 0 : index
    %c0_18 = arith.constant 0 : index
    %15 = vector.load %arg4[%c0_15, %c0_16, %c0_17, %c0_18] : memref<2x2x16x8xf32, #tpu.memory_space<vmem>>, vector<2x2x16x8xf32>
    %cst_19 = arith.constant 0.000000e+00 : f32
    %16 = vector.broadcast %cst_19 : f32 to vector<64x8xf32>
    %c0_20 = arith.constant 0 : index
    %c0_21 = arith.constant 0 : index
    %c0_22 = arith.constant 0 : index
    %17 = vector.load %arg9[%c0_20, %c0_21, %c0_22] : memref<9x9x16xf32, #tpu.memory_space<vmem>>, vector<8x8x16xf32>
    %18 = vector.shape_cast %17 : vector<8x8x16xf32> to vector<64x16xf32>
    %19 = vector.extract_strided_slice %15 {offsets = [0, 0, 0, 0], sizes = [1, 1, 16, 8], strides = [1, 1, 1, 1]} : vector<2x2x16x8xf32> to vector<1x1x16x8xf32>
    %20 = vector.shape_cast %19 : vector<1x1x16x8xf32> to vector<16x8xf32>
    %cst_23 = arith.constant dense<0.000000e+00> : vector<64x8xf32>
    %21 = tpu.matmul %18, %20, %cst_23 {dimension_numbers = #tpu.dot_dimension_numbers<[1], [0], [0], [1], [0, 0, 1, 1], [], []>} : vector<64x16xf32>, vector<16x8xf32>, vector<64x8xf32> -> vector<64x8xf32>
    %22 = arith.addf %16, %21 : vector<64x8xf32>
    %c0_24 = arith.constant 0 : index
    %c1_25 = arith.constant 1 : index
    %c0_26 = arith.constant 0 : index
    %23 = vector.load %arg9[%c0_24, %c1_25, %c0_26] : memref<9x9x16xf32, #tpu.memory_space<vmem>>, vector<8x8x16xf32>
    %24 = vector.shape_cast %23 : vector<8x8x16xf32> to vector<64x16xf32>
    %25 = vector.extract_strided_slice %15 {offsets = [0, 1, 0, 0], sizes = [1, 1, 16, 8], strides = [1, 1, 1, 1]} : vector<2x2x16x8xf32> to vector<1x1x16x8xf32>
    %26 = vector.shape_cast %25 : vector<1x1x16x8xf32> to vector<16x8xf32>
    %cst_27 = arith.constant dense<0.000000e+00> : vector<64x8xf32>
    %27 = tpu.matmul %24, %26, %cst_27 {dimension_numbers = #tpu.dot_dimension_numbers<[1], [0], [0], [1], [0, 0, 1, 1], [], []>} : vector<64x16xf32>, vector<16x8xf32>, vector<64x8xf32> -> vector<64x8xf32>
    %28 = arith.addf %22, %27 : vector<64x8xf32>
    %c1_28 = arith.constant 1 : index
    %c0_29 = arith.constant 0 : index
    %c0_30 = arith.constant 0 : index
    %29 = vector.load %arg9[%c1_28, %c0_29, %c0_30] : memref<9x9x16xf32, #tpu.memory_space<vmem>>, vector<8x8x16xf32>
    %30 = vector.shape_cast %29 : vector<8x8x16xf32> to vector<64x16xf32>
    %31 = vector.extract_strided_slice %15 {offsets = [1, 0, 0, 0], sizes = [1, 1, 16, 8], strides = [1, 1, 1, 1]} : vector<2x2x16x8xf32> to vector<1x1x16x8xf32>
    %32 = vector.shape_cast %31 : vector<1x1x16x8xf32> to vector<16x8xf32>
    %cst_31 = arith.constant dense<0.000000e+00> : vector<64x8xf32>
    %33 = tpu.matmul %30, %32, %cst_31 {dimension_numbers = #tpu.dot_dimension_numbers<[1], [0], [0], [1], [0, 0, 1, 1], [], []>} : vector<64x16xf32>, vector<16x8xf32>, vector<64x8xf32> -> vector<64x8xf32>
    %34 = arith.addf %28, %33 : vector<64x8xf32>
    %c1_32 = arith.constant 1 : index
    %c1_33 = arith.constant 1 : index
    %c0_34 = arith.constant 0 : index
    %35 = vector.load %arg9[%c1_32, %c1_33, %c0_34] : memref<9x9x16xf32, #tpu.memory_space<vmem>>, vector<8x8x16xf32>
    %36 = vector.shape_cast %35 : vector<8x8x16xf32> to vector<64x16xf32>
    %37 = vector.extract_strided_slice %15 {offsets = [1, 1, 0, 0], sizes = [1, 1, 16, 8], strides = [1, 1, 1, 1]} : vector<2x2x16x8xf32> to vector<1x1x16x8xf32>
    %38 = vector.shape_cast %37 : vector<1x1x16x8xf32> to vector<16x8xf32>
    %cst_35 = arith.constant dense<0.000000e+00> : vector<64x8xf32>
    %39 = tpu.matmul %36, %38, %cst_35 {dimension_numbers = #tpu.dot_dimension_numbers<[1], [0], [0], [1], [0, 0, 1, 1], [], []>} : vector<64x16xf32>, vector<16x8xf32>, vector<64x8xf32> -> vector<64x8xf32>
    %40 = arith.addf %34, %39 : vector<64x8xf32>
    %41 = vector.shape_cast %40 : vector<64x8xf32> to vector<8x8x8xf32>
    %c0_36 = arith.constant 0 : index
    %c0_37 = arith.constant 0 : index
    %c0_38 = arith.constant 0 : index
    %c0_39 = arith.constant 0 : index
    %42 = vector.load %arg6[%c0_36, %c0_37, %c0_38, %c0_39] : memref<1x8x8x8xf32, #tpu.memory_space<vmem>>, vector<1x8x8x8xf32>
    %43 = vector.shape_cast %42 : vector<1x8x8x8xf32> to vector<8x8x8xf32>
    %44 = vector.shape_cast %41 : vector<8x8x8xf32> to vector<1x8x8x8xf32>
    tpu.vector_store %arg6[%c0_36, %c0_37, %c0_38, %c0_39], %44 {strides = array<i32>} : memref<1x8x8x8xf32, #tpu.memory_space<vmem>>, vector<1x8x8x8xf32>,
    %cst_40 = arith.constant 0.000000e+00 : f32
    %45 = vector.broadcast %cst_40 : f32 to vector<8x8xf32>
    %c0_41 = arith.constant 0 : index
    %c0_42 = arith.constant 0 : index
    %c0_43 = arith.constant 0 : index
    %46 = vector.load %arg8[%c0_41, %c0_42, %c0_43] : memref<1x8x8xf32, #tpu.memory_space<vmem>>, vector<1x8x8xf32>
    %47 = vector.shape_cast %46 : vector<1x8x8xf32> to vector<8x8xf32>
    %48 = vector.shape_cast %45 : vector<8x8xf32> to vector<1x8x8xf32>
    tpu.vector_store %arg8[%c0_41, %c0_42, %c0_43], %48 {strides = array<i32>} : memref<1x8x8xf32, #tpu.memory_space<vmem>>, vector<1x8x8xf32>,
    %cst_44 = arith.constant dense<0.000000e+00> : vector<8xf32>
    %49 = vector.multi_reduction <add>, %40, %cst_44 [0] : vector<64x8xf32> to vector<8xf32>
    %50 = vector.shape_cast %49 : vector<8xf32> to vector<1x8xf32>
    %c0_45 = arith.constant 0 : index
    %c0_46 = arith.constant 0 : index
    %c0_47 = arith.constant 0 : index
    %51 = vector.load %arg8[%c0_45, %c0_46, %c0_47] : memref<1x8x8xf32, #tpu.memory_space<vmem>>, vector<1x1x8xf32>
    %52 = vector.shape_cast %51 : vector<1x1x8xf32> to vector<1x8xf32>
    %53 = vector.shape_cast %50 : vector<1x8xf32> to vector<1x1x8xf32>
    tpu.vector_store %arg8[%c0_45, %c0_46, %c0_47], %53 {strides = array<i32>} : memref<1x8x8xf32, #tpu.memory_space<vmem>>, vector<1x1x8xf32>,
    %54 = arith.mulf %40, %40 : vector<64x8xf32>
    %cst_48 = arith.constant dense<0.000000e+00> : vector<8xf32>
    %55 = vector.multi_reduction <add>, %54, %cst_48 [0] : vector<64x8xf32> to vector<8xf32>
    %56 = vector.shape_cast %55 : vector<8xf32> to vector<1x8xf32>
    %c0_49 = arith.constant 0 : index
    %c1_50 = arith.constant 1 : index
    %c0_51 = arith.constant 0 : index
    %57 = vector.load %arg8[%c0_49, %c1_50, %c0_51] : memref<1x8x8xf32, #tpu.memory_space<vmem>>, vector<1x1x8xf32>
    %58 = vector.shape_cast %57 : vector<1x1x8xf32> to vector<1x8xf32>
    %59 = vector.shape_cast %56 : vector<1x8xf32> to vector<1x1x8xf32>
    tpu.vector_store %arg8[%c0_49, %c1_50, %c0_51], %59 {strides = array<i32>} : memref<1x8x8xf32, #tpu.memory_space<vmem>>, vector<1x1x8xf32>,
    %c1_52 = arith.constant 1 : index
    %c1_53 = arith.constant 1 : index
    %c0_54 = arith.constant 0 : index
    %60 = vector.load %arg9[%c1_52, %c1_53, %c0_54] : memref<9x9x16xf32, #tpu.memory_space<vmem>>, vector<8x8x4xf32>
    %61 = vector.shape_cast %60 : vector<8x8x4xf32> to vector<64x4xf32>
    %c0_55 = arith.constant 0 : index
    %c0_56 = arith.constant 0 : index
    %62 = vector.load %arg5[%c0_55, %c0_56] : memref<4x8xf32, #tpu.memory_space<vmem>>, vector<4x8xf32>
    %cst_57 = arith.constant dense<0.000000e+00> : vector<64x8xf32>
    %63 = tpu.matmul %61, %62, %cst_57 {dimension_numbers = #tpu.dot_dimension_numbers<[1], [0], [0], [1], [0, 0, 1, 1], [], []>} : vector<64x4xf32>, vector<4x8xf32>, vector<64x8xf32> -> vector<64x8xf32>
    %64 = vector.shape_cast %63 : vector<64x8xf32> to vector<8x8x8xf32>
    %c0_58 = arith.constant 0 : index
    %c0_59 = arith.constant 0 : index
    %c0_60 = arith.constant 0 : index
    %c0_61 = arith.constant 0 : index
    %65 = vector.load %arg7[%c0_58, %c0_59, %c0_60, %c0_61] : memref<1x8x8x8xf32, #tpu.memory_space<vmem>>, vector<1x8x8x8xf32>
    %66 = vector.shape_cast %65 : vector<1x8x8x8xf32> to vector<8x8x8xf32>
    %67 = vector.shape_cast %64 : vector<8x8x8xf32> to vector<1x8x8x8xf32>
    tpu.vector_store %arg7[%c0_58, %c0_59, %c0_60, %c0_61], %67 {strides = array<i32>} : memref<1x8x8x8xf32, #tpu.memory_space<vmem>>, vector<1x8x8x8xf32>,
    return
  }
  func.func @transform_0(%arg0: i32) -> (i32, i32, i32, i32) {
    %c0_i32 = arith.constant 0 : i32
    %c0_i32_0 = arith.constant 0 : i32
    %c0_i32_1 = arith.constant 0 : i32
    %c0_i32_2 = arith.constant 0 : i32
    return %arg0, %c0_i32, %c0_i32_0, %c0_i32_1 : i32, i32, i32, i32
  }
  func.func @transform_1(%arg0: i32) -> (i32, i32, i32) {
    %c0_i32 = arith.constant 0 : i32
    %c0_i32_0 = arith.constant 0 : i32
    %c0_i32_1 = arith.constant 0 : i32
    %c0_i32_2 = arith.constant 0 : i32
    return %c0_i32, %c0_i32_0, %c0_i32_1 : i32, i32, i32
  }
  func.func @transform_2(%arg0: i32) -> (i32, i32, i32) {
    %c0_i32 = arith.constant 0 : i32
    %c0_i32_0 = arith.constant 0 : i32
    %c0_i32_1 = arith.constant 0 : i32
    %c0_i32_2 = arith.constant 0 : i32
    return %c0_i32, %c0_i32_0, %c0_i32_1 : i32, i32, i32
  }
  func.func @transform_3(%arg0: i32) -> (i32, i32, i32, i32) {
    %c0_i32 = arith.constant 0 : i32
    %c0_i32_0 = arith.constant 0 : i32
    %c0_i32_1 = arith.constant 0 : i32
    %c0_i32_2 = arith.constant 0 : i32
    %c0_i32_3 = arith.constant 0 : i32
    return %c0_i32, %c0_i32_0, %c0_i32_1, %c0_i32_2 : i32, i32, i32, i32
  }
  func.func @transform_4(%arg0: i32) -> (i32, i32) {
    %c0_i32 = arith.constant 0 : i32
    %c0_i32_0 = arith.constant 0 : i32
    %c0_i32_1 = arith.constant 0 : i32
    return %c0_i32, %c0_i32_0 : i32, i32
  }
  func.func @transform_5(%arg0: i32) -> (i32, i32, i32, i32) {
    %c0_i32 = arith.constant 0 : i32
    %c0_i32_0 = arith.constant 0 : i32
    %c0_i32_1 = arith.constant 0 : i32
    %c0_i32_2 = arith.constant 0 : i32
    return %arg0, %c0_i32, %c0_i32_0, %c0_i32_1 : i32, i32, i32, i32
  }
  func.func @transform_6(%arg0: i32) -> (i32, i32, i32, i32) {
    %c0_i32 = arith.constant 0 : i32
    %c0_i32_0 = arith.constant 0 : i32
    %c0_i32_1 = arith.constant 0 : i32
    %c0_i32_2 = arith.constant 0 : i32
    return %arg0, %c0_i32, %c0_i32_0, %c0_i32_1 : i32, i32, i32, i32
  }
  func.func @transform_7(%arg0: i32) -> (i32, i32, i32) {
    %c0_i32 = arith.constant 0 : i32
    %c0_i32_0 = arith.constant 0 : i32
    %c0_i32_1 = arith.constant 0 : i32
    return %arg0, %c0_i32, %c0_i32_0 : i32, i32, i32
  }
}

</mosaic_0001>

<llo_original>
// kernel: squeeze.22
$region0: #{squeeze.22}
  %s0 = inlined_call_operand.vmem [shape: f32[16], index: 0, kind: input, shape index: {}]
  %s1 = inlined_call_operand.vmem [shape: f32[4,4], index: 1, kind: output, shape index: {}]
  $region1: #{squeeze.22} parent=0
    #allocation0 [shape = 'u8[4096]{0}', space=vmem, size = 0x1000, scoped, tag = 'scoped mem for output reshape']
    #allocation1 [shape = 'u8[4096]{0}', space=vmem, size = 0x1000, scoped, tag = 'scoped mem for input reshape']
    %s3 = sshllo.u32 0, 1
    %v4 = vld [vmem:[%s0] sm:%s3]
    %5 = vst [vmem:[#allocation1] sm:%s3] %v4
    %v6 = vld [vmem:[#allocation1] sm:$0x1]
    %vm7 = vcmask 31744
    %8 = vst.msk [vmem:[#allocation0] sm:$0x1] %vm7, %v6
    %v9 = vld [vmem:[#allocation1] sm:$0x1]
    %10 = vrot.lane.b32.xlu0 %v9, 124
    %v11 = vpop.permute.xlu0 %10
    %vm12 = vcmask 31744
    %s13 = scalar_lea.vmem [#allocation0], 1
    %14 = vst.msk [vmem:[%s13] sm:$0x1] %vm12, %v11
    %v15 = vld [vmem:[#allocation1] sm:$0x1]
    %16 = vrot.lane.b32.xlu0 %v15, 120
    %v17 = vpop.permute.xlu0 %16
    %vm18 = vcmask 31744
    %s19 = scalar_lea.vmem [#allocation0], 2
    %20 = vst.msk [vmem:[%s19] sm:$0x1] %vm18, %v17
    %v21 = vld [vmem:[#allocation1] sm:$0x1]
    %22 = vrot.lane.b32.xlu0 %v21, 116
    %v23 = vpop.permute.xlu0 %22
    %vm24 = vcmask 31744
    %s25 = scalar_lea.vmem [#allocation0], 3
    %26 = vst.msk [vmem:[%s25] sm:$0x1] %vm24, %v23
    %s28 = sshllo.u32 0, 4
    %v30 = vld [vmem:[#allocation0] sm:%s28]
    %s31 = sshllo.u32 0, 4
    %32 = vst [vmem:[%s1] sm:%s31] %v30

// kernel: tile.13
$region0: #{tile.13}
  #allocation0 [shape = 's32[1]{0}', space=sflag, size = 0x4, scoped, tag = 'scoped memory for tile.13']
  %s0 = inlined_call_operand.vmem [shape: f32[4], index: 0, kind: input, shape index: {}]
  %s1 = inlined_call_operand.vmem [shape: f32[4,4], index: 1, kind: output, shape index: {}]
  // Predicated region
  $region2: #{tile.13} parent=0 // pred_check
    _
  $region3: #{tile.13} parent=0 // pred_check_branch
    %3 = sbr.rel (0) target = $region5
  $region4: #{tile.13} parent=0 // pred_region
    _
  $region5: #{tile.13} parent=0 // pred_fallthru
    _
  %v4 = vld [vmem:[%s0] ss:$0 sm:$0xff]
  %5 = vst [vmem:[%s1] sm:$0xf] %v4

// kernel: tile.14
$region0: #{tile.14}
  %s0 = inlined_call_operand.vmem [shape: f32[4,4], index: 0, kind: input, shape index: {}]
  %s1 = inlined_call_operand.vmem [shape: f32[1,1,16], index: 1, kind: output, shape index: {}]
  $region1: #{tile.14} parent=0
    #allocation0 [shape = 'u8[4096]{0}', space=vmem, size = 0x1000, scoped, tag = 'scoped mem for output reshape']
    #allocation1 [shape = 'u8[4096]{0}', space=vmem, size = 0x1000, scoped, tag = 'scoped mem for input reshape']
    %s3 = sshllo.u32 0, 4
    %v4 = vld [vmem:[%s0] sm:%s3]
    %5 = vst [vmem:[#allocation1] sm:%s3] %v4
    %v6 = vld [vmem:[#allocation1] sm:$0x1]
    %vm7 = vcmask 31744
    %8 = vst.msk [vmem:[#allocation0] sm:$0x1] %vm7, %v6
    %s9 = scalar_lea.vmem [#allocation1], 3
    %v10 = vld [vmem:[%s9] sm:$0x1]
    %11 = vrot.lane.b32.xlu0 %v10, 12
    %v12 = vpop.permute.xlu0 %11
    %vm13 = vcmask 130144
    %14 = vst.msk [vmem:[#allocation0] sm:$0x1] %vm13, %v12
    %s15 = scalar_lea.vmem [#allocation1], 2
    %v16 = vld [vmem:[%s15] sm:$0x1]
    %17 = vrot.lane.b32.xlu0 %v16, 8
    %v18 = vpop.permute.xlu0 %17
    %vm19 = vcmask 97344
    %20 = vst.msk [vmem:[#allocation0] sm:$0x1] %vm19, %v18
    %s21 = scalar_lea.vmem [#allocation1], 1
    %v22 = vld [vmem:[%s21] sm:$0x1]
    %23 = vrot.lane.b32.xlu0 %v22, 4
    %v24 = vpop.permute.xlu0 %23
    %vm25 = vcmask 64544
    %26 = vst.msk [vmem:[#allocation0] sm:$0x1] %vm25, %v24
    %s28 = sshllo.u32 0, 1
    %v30 = vld [vmem:[#allocation0] sm:%s28]
    %s31 = sshllo.u32 0, 1
    %32 = vst [vmem:[%s1] sm:%s31] %v30

// kernel: preact_block_forward.3
$region0: #{preact_block_forward.3}
  #allocation0 [shape = 'u32[]', space=smem, size = 0x4, offset = 0x4, fixed_abs, tag = 'smem constant byte address 0x4 - core index']
  #allocation1 [shape = 'u32[144,128]{1,0:T(1,128)}', space=vmem, size = 0x12000, scoped, tag = 'internal scratch']
  %s0 = inlined_call_operand.vmem [shape: f32[128,16], index: 0, kind: input, shape index: {}]
  %s1 = inlined_call_operand.vmem [shape: f32[1,8,16], index: 1, kind: output, shape index: {}]
  %s2 = sld [smem:[#allocation0]]
  $region14: #{preact_block_forward.3} parent=0
    _
  %s4 = ssub.s32 1, %s2
  %s5 = scalar_select 0, %s4, %s2
  // Predicated region
  $region2: #{preact_block_forward.3} parent=0 // pred_check
    _
  $region3: #{preact_block_forward.3} parent=0 // pred_check_branch
    %7 = sbr.rel (0) target = $region5
  $region4: #{preact_block_forward.3} parent=0 // pred_region
    _
  $region5: #{preact_block_forward.3} parent=0 // pred_fallthru
    _
  %v8 = vlaneseq
  %v9 = vshrl.u32 %v8, 7
  %v10 = vadd.s32 %v9, 8
  %v11 = vadd.s32 %v9, 16
  %v12 = vadd.s32 %v9, 24
  %v13 = vadd.s32 %v9, 32
  %v14 = vadd.s32 %v9, 40
  %v15 = vadd.s32 %v9, 48
  %v16 = vadd.s32 %v9, 56
  %v17 = vadd.s32 %v9, 64
  %v18 = vadd.s32 %v9, 72
  %v19 = vadd.s32 %v9, 80
  %v20 = vadd.s32 %v9, 88
  %v21 = vadd.s32 %v9, 96
  %v22 = vadd.s32 %v9, 104
  %v23 = vadd.s32 %v9, 112
  %v24 = vadd.s32 %v9, 120
  %s25 = smul.u32 0, 128
  %v26 = vstv %s25
  %v27 = vadd.s32 %v9, %v26
  %v28 = vadd.s32 %v10, %v26
  %v29 = vadd.s32 %v11, %v26
  %v30 = vadd.s32 %v12, %v26
  %v31 = vadd.s32 %v13, %v26
  %v32 = vadd.s32 %v14, %v26
  %v33 = vadd.s32 %v15, %v26
  %v34 = vadd.s32 %v16, %v26
  %v35 = vadd.s32 %v17, %v26
  %v36 = vadd.s32 %v18, %v26
  %v37 = vadd.s32 %v19, %v26
  %v38 = vadd.s32 %v20, %v26
  %v39 = vadd.s32 %v21, %v26
  %v40 = vadd.s32 %v22, %v26
  %v41 = vadd.s32 %v23, %v26
  %v42 = vadd.s32 %v24, %v26
  %vm43 = vcmp.lt.s32.totalorder %v27, 128
  %vm44 = vcmp.lt.s32.totalorder %v28, 128
  %vm45 = vcmp.lt.s32.totalorder %v29, 128
  %vm46 = vcmp.lt.s32.totalorder %v30, 128
  %vm47 = vcmp.lt.s32.totalorder %v31, 128
  %vm48 = vcmp.lt.s32.totalorder %v32, 128
  %vm49 = vcmp.lt.s32.totalorder %v33, 128
  %vm50 = vcmp.lt.s32.totalorder %v34, 128
  %vm51 = vcmp.lt.s32.totalorder %v35, 128
  %vm52 = vcmp.lt.s32.totalorder %v36, 128
  %vm53 = vcmp.lt.s32.totalorder %v37, 128
  %vm54 = vcmp.lt.s32.totalorder %v38, 128
  %vm55 = vcmp.lt.s32.totalorder %v39, 128
  %vm56 = vcmp.lt.s32.totalorder %v40, 128
  %vm57 = vcmp.lt.s32.totalorder %v41, 128
  %vm58 = vcmp.lt.s32.totalorder %v42, 128
  %v59 = vld [vmem:[%s0] sm:$0xff]
  %v60 = vld [vmem:[%s0 + $0x8] sm:$0xff]
  %v61 = vld [vmem:[%s0 + $0x10] sm:$0xff]
  %v62 = vld [vmem:[%s0 + $0x18] sm:$0xff]
  %v63 = vld [vmem:[%s0 + $0x20] sm:$0xff]
  %v64 = vld [vmem:[%s0 + $0x28] sm:$0xff]
  %v65 = vld [vmem:[%s0 + $0x30] sm:$0xff]
  %v66 = vld [vmem:[%s0 + $0x38] sm:$0xff]
  %v67 = vld [vmem:[%s0 + $0x40] sm:$0xff]
  %v68 = vld [vmem:[%s0 + $0x48] sm:$0xff]
  %v69 = vld [vmem:[%s0 + $0x50] sm:$0xff]
  %v70 = vld [vmem:[%s0 + $0x58] sm:$0xff]
  %v71 = vld [vmem:[%s0 + $0x60] sm:$0xff]
  %v72 = vld [vmem:[%s0 + $0x68] sm:$0xff]
  %v73 = vld [vmem:[%s0 + $0x70] sm:$0xff]
  %v74 = vld [vmem:[%s0 + $0x78] sm:$0xff]
  %v75 = vsel %vm43, 1, 0
  %v76 = vsel %vm44, 1, 0
  %v77 = vsel %vm45, 1, 0
  %v78 = vsel %vm46, 1, 0
  %v79 = vsel %vm47, 1, 0
  %v80 = vsel %vm48, 1, 0
  %v81 = vsel %vm49, 1, 0
  %v82 = vsel %vm50, 1, 0
  %v83 = vsel %vm51, 1, 0
  %v84 = vsel %vm52, 1, 0
  %v85 = vsel %vm53, 1, 0
  %v86 = vsel %vm54, 1, 0
  %v87 = vsel %vm55, 1, 0
  %v88 = vsel %vm56, 1, 0
  %v89 = vsel %vm57, 1, 0
  %v90 = vsel %vm58, 1, 0
  %vm91 = vcmp.eq.s32.totalorder %v75, 1
  %vm92 = vcmp.eq.s32.totalorder %v76, 1
  %vm93 = vcmp.eq.s32.totalorder %v77, 1
  %vm94 = vcmp.eq.s32.totalorder %v78, 1
  %vm95 = vcmp.eq.s32.totalorder %v79, 1
  %vm96 = vcmp.eq.s32.totalorder %v80, 1
  %vm97 = vcmp.eq.s32.totalorder %v81, 1
  %vm98 = vcmp.eq.s32.totalorder %v82, 1
  %vm99 = vcmp.eq.s32.totalorder %v83, 1
  %vm100 = vcmp.eq.s32.totalorder %v84, 1
  %vm101 = vcmp.eq.s32.totalorder %v85, 1
  %vm102 = vcmp.eq.s32.totalorder %v86, 1
  %vm103 = vcmp.eq.s32.totalorder %v87, 1
  %vm104 = vcmp.eq.s32.totalorder %v88, 1
  %vm105 = vcmp.eq.s32.totalorder %v89, 1
  %vm106 = vcmp.eq.s32.totalorder %v90, 1
  %v107 = vsel %vm91, %v59, 0.0
  %v108 = vsel %vm92, %v60, 0.0
  %v109 = vsel %vm93, %v61, 0.0
  %v110 = vsel %vm94, %v62, 0.0
  %v111 = vsel %vm95, %v63, 0.0
  %v112 = vsel %vm96, %v64, 0.0
  %v113 = vsel %vm97, %v65, 0.0
  %v114 = vsel %vm98, %v66, 0.0
  %v115 = vsel %vm99, %v67, 0.0
  %v116 = vsel %vm100, %v68, 0.0
  %v117 = vsel %vm101, %v69, 0.0
  %v118 = vsel %vm102, %v70, 0.0
  %v119 = vsel %vm103, %v71, 0.0
  %v120 = vsel %vm104, %v72, 0.0
  %v121 = vsel %vm105, %v73, 0.0
  %v122 = vsel %vm106, %v74, 0.0
  %vm123 = vcmask 130048
  %124 = vst.msk [vmem:[%s1] sm:$0xff] %vm123, 0.0
  %v125 = vsel %vm123, %v107, 0.0
  %v126 = vsel %vm123, %v108, 0.0
  %v127 = vadd.f32 %v125, %v126
  %v128 = vsel %vm123, %v109, 0.0
  %v129 = vadd.f32 %v127, %v128
  %v130 = vsel %vm123, %v110, 0.0
  %v131 = vadd.f32 %v129, %v130
  %v132 = vsel %vm123, %v111, 0.0
  %v133 = vadd.f32 %v131, %v132
  %v134 = vsel %vm123, %v112, 0.0
  %v135 = vadd.f32 %v133, %v134
  %v136 = vsel %vm123, %v113, 0.0
  %v137 = vadd.f32 %v135, %v136
  %v138 = vsel %vm123, %v114, 0.0
  %v139 = vadd.f32 %v137, %v138
  %v140 = vsel %vm123, %v115, 0.0
  %v141 = vadd.f32 %v139, %v140
  %v142 = vsel %vm123, %v116, 0.0
  %v143 = vadd.f32 %v141, %v142
  %v144 = vsel %vm123, %v117, 0.0
  %v145 = vadd.f32 %v143, %v144
  %v146 = vsel %vm123, %v118, 0.0
  %v147 = vadd.f32 %v145, %v146
  %v148 = vsel %vm123, %v119, 0.0
  %v149 = vadd.f32 %v147, %v148
  %v150 = vsel %vm123, %v120, 0.0
  %v151 = vadd.f32 %v149, %v150
  %v152 = vsel %vm123, %v121, 0.0
  %v153 = vadd.f32 %v151, %v152
  %v154 = vsel %vm123, %v122, 0.0
  %v155 = vadd.f32 %v153, %v154
  %v156 = vrot.slane %v155, 4
  %v157 = vadd.f32 %v155, %v156
  %v158 = vrot.slane %v157, 2
  %v159 = vadd.f32 %v157, %v158
  %v160 = vrot.slane %v159, 1
  %v161 = vadd.f32 %v159, %v160
  %vm162 = vcmask 122880
  %163 = vst.msk [vmem:[%s1] sm:$0x1] %vm162, %v161
  %v164 = vmul.f32 %v107, %v107
  %v165 = vmul.f32 %v108, %v108
  %v166 = vmul.f32 %v109, %v109
  %v167 = vmul.f32 %v110, %v110
  %v168 = vmul.f32 %v111, %v111
  %v169 = vmul.f32 %v112, %v112
  %v170 = vmul.f32 %v113, %v113
  %v171 = vmul.f32 %v114, %v114
  %v172 = vmul.f32 %v115, %v115
  %v173 = vmul.f32 %v116, %v116
  %v174 = vmul.f32 %v117, %v117
  %v175 = vmul.f32 %v118, %v118
  %v176 = vmul.f32 %v119, %v119
  %v177 = vmul.f32 %v120, %v120
  %v178 = vmul.f32 %v121, %v121
  %v179 = vmul.f32 %v122, %v122
  %v180 = vsel %vm123, %v164, 0.0
  %v181 = vsel %vm123, %v165, 0.0
  %v182 = vadd.f32 %v180, %v181
  %v183 = vsel %vm123, %v166, 0.0
  %v184 = vadd.f32 %v182, %v183
  %v185 = vsel %vm123, %v167, 0.0
  %v186 = vadd.f32 %v184, %v185
  %v187 = vsel %vm123, %v168, 0.0
  %v188 = vadd.f32 %v186, %v187
  %v189 = vsel %vm123, %v169, 0.0
  %v190 = vadd.f32 %v188, %v189
  %v191 = vsel %vm123, %v170, 0.0
  %v192 = vadd.f32 %v190, %v191
  %v193 = vsel %vm123, %v171, 0.0
  %v194 = vadd.f32 %v192, %v193
  %v195 = vsel %vm123, %v172, 0.0
  %v196 = vadd.f32 %v194, %v195
  %v197 = vsel %vm123, %v173, 0.0
  %v198 = vadd.f32 %v196, %v197
  %v199 = vsel %vm123, %v174, 0.0
  %v200 = vadd.f32 %v198, %v199
  %v201 = vsel %vm123, %v175, 0.0
  %v202 = vadd.f32 %v200, %v201
  %v203 = vsel %vm123, %v176, 0.0
  %v204 = vadd.f32 %v202, %v203
  %v205 = vsel %vm123, %v177, 0.0
  %v206 = vadd.f32 %v204, %v205
  %v207 = vsel %vm123, %v178, 0.0
  %v208 = vadd.f32 %v206, %v207
  %v209 = vsel %vm123, %v179, 0.0
  %v210 = vadd.f32 %v208, %v209
  %v211 = vrot.slane %v210, 4
  %v212 = vadd.f32 %v210, %v211
  %v213 = vrot.slane %v212, 2
  %v214 = vadd.f32 %v212, %v213
  %v215 = vrot.slane %v214, 1
  %v216 = vadd.f32 %v214, %v215
  %217 = vst.msk [vmem:[%s1 + $0x1] sm:$0x1] %vm162, %v216
  // Predicated region
  $region6: #{preact_block_forward.3} parent=0 // pred_check
    _
  $region7: #{preact_block_forward.3} parent=0 // pred_check_branch
    %219 = sbr.rel (0) target = $region9
  $region8: #{preact_block_forward.3} parent=0 // pred_region
    _
  $region9: #{preact_block_forward.3} parent=0 // pred_fallthru
    _
  // Predicated region
  $region10: #{preact_block_forward.3} parent=0 // pred_check
    _
  $region11: #{preact_block_forward.3} parent=0 // pred_check_branch
    %221 = sbr.rel (0) target = $region13
  $region12: #{preact_block_forward.3} parent=0 // pred_region
    _
  $region13: #{preact_block_forward.3} parent=0 // pred_fallthru
    _

// kernel: preact_block_forward.4
$region0: #{preact_block_forward.4}
  #allocation0 [shape = 'u32[]', space=smem, size = 0x4, offset = 0x4, fixed_abs, tag = 'smem constant byte address 0x4 - core index']
  #allocation1 [shape = 'u32[144,128]{1,0:T(1,128)}', space=vmem, size = 0x12000, scoped, tag = 'internal scratch']
  #allocation2 [shape = 'f32[9,9,16]{2,1,0:T(8,128)}', space=vmem, size = 0x12000, scoped, tag = 'scratch operand']
  %s0 = inlined_call_operand.vmem [shape: f32[2,8,8,16], index: 0, kind: input, shape index: {}]
  %s1 = inlined_call_operand.vmem [shape: f32[1,1,16], index: 1, kind: input, shape index: {}]
  %s2 = inlined_call_operand.vmem [shape: f32[1,1,16], index: 2, kind: input, shape index: {}]
  %s3 = inlined_call_operand.vmem [shape: f32[2,2,16,8], index: 3, kind: input, shape index: {}]
  %s4 = inlined_call_operand.vmem [shape: f32[4,8], index: 4, kind: input, shape index: {}]
  %s5 = inlined_call_operand.vmem [shape: f32[2,8,8,8], index: 5, kind: output, shape index: {0}]
  %s6 = inlined_call_operand.vmem [shape: f32[2,8,8,8], index: 6, kind: output, shape index: {1}]
  %s7 = inlined_call_operand.vmem [shape: f32[2,8,8], index: 7, kind: output, shape index: {2}]
  %8 = xla_tuple %s5, %s6, %s7
  %s9 = sld [smem:[#allocation0]]
  $region69: #{preact_block_forward.4} parent=0
    _
  %s11 = ssub.s32 1, %s9
  %s12 = scalar_select 0, %s11, %s9
  loop: start=0, step=1, limit=4
  $region2: #{preact_block_forward.4} parent=0 // loop_pre_header
    _
  $region3: #{preact_block_forward.4} parent=0 // loop_header
    %s14 = sphi 0, %s18
    %p15 = scmp.ge.s32.totalorder %s14, 4
    %s24 = sphi 0, %s26
    %s27 = sphi 0, %s24
    %s28 = sphi 0, %s27
    %s44 = sphi 0, %s28
    %s48 = sphi 0, %s48
    %s50 = sphi 0, %s48
    %s51 = sphi 0, %s50
    %s65 = sphi 0, %s51
    %s69 = sphi 0, %s69
    %s71 = sphi 0, %s69
    %s72 = sphi 0, %s71
    %s86 = sphi 0, %s72
    %s90 = sphi 0, %s90
    %s92 = sphi 0, %s90
    %s93 = sphi 0, %s92
    %s107 = sphi 0, %s93
    %s111 = sphi 0, %s111
    %s113 = sphi 0, %s111
    %s114 = sphi 0, %s113
    %s128 = sphi 0, %s114
    %s134 = sphi 0, %s136
    %s137 = sphi 0, %s134
    %s138 = sphi 0, %s137
    %s154 = sphi 0, %s138
    %s160 = sphi 0, %s162
    %s163 = sphi 0, %s160
    %s164 = sphi 0, %s163
    %s180 = sphi 0, %s164
    %s186 = sphi 0, %s188
    %s189 = sphi 0, %s186
    %s190 = sphi 0, %s189
    %s206 = sphi 0, %s190
  $region4: #{preact_block_forward.4} parent=0 // loop_header_branch
    %17 = sbr.rel (%p15) target = $region8
  $region5: #{preact_block_forward.4} parent=0 // loop_body
    %s19 = ssub.s32 %s14, 1
    %s20 = ssub.s32 %s14, 2
    %s21 = sadd.s32 %s14, 1
    %s22 = ssub.s32 %s14, %s21
    %p23 = scmp.eq.s32.totalorder %s22, 0
    %s25 = sadd.s32 %s24, 1
    %s26 = scalar_select %p23, %s24, %s25
    %p29 = pneg %p23
    %p30 = scmp.eq.s32.totalorder %s14, 1
    %p31 = por %p29, %p30
    %p32 = scmp.ne.s32.totalorder %s24, %s27
    %p33 = scmp.eq.s32.totalorder %s14, 0
    %p34 = por %p32, %p33
    %p35 = scmp.ne.s32.totalorder %s24, %s27
    %p36 = scmp.eq.s32.totalorder %s19, 1
    %p37 = por %p35, %p36
    %p38 = scmp.ne.s32.totalorder %s27, %s28
    %p39 = scmp.eq.s32.totalorder %s19, 0
    %p40 = por %p38, %p39
    %p41 = scmp.ne.s32.totalorder %s27, %s28
    %p42 = scmp.eq.s32.totalorder %s20, 1
    %p43 = por %p41, %p42
    %p45 = scmp.ne.s32.totalorder %s28, %s44
    %p46 = scmp.eq.s32.totalorder %s20, 0
    %p47 = por %p45, %p46
    %s49 = sadd.s32 %s48, 1
    %p52 = scmp.eq.s32.totalorder %s14, 1
    %p53 = scmp.ne.s32.totalorder %s48, %s50
    %p54 = scmp.eq.s32.totalorder %s14, 0
    %p55 = por %p53, %p54
    %p56 = scmp.ne.s32.totalorder %s48, %s50
    %p57 = scmp.eq.s32.totalorder %s19, 1
    %p58 = por %p56, %p57
    %p59 = scmp.ne.s32.totalorder %s50, %s51
    %p60 = scmp.eq.s32.totalorder %s19, 0
    %p61 = por %p59, %p60
    %p62 = scmp.ne.s32.totalorder %s50, %s51
    %p63 = scmp.eq.s32.totalorder %s20, 1
    %p64 = por %p62, %p63
    %p66 = scmp.ne.s32.totalorder %s51, %s65
    %p67 = scmp.eq.s32.totalorder %s20, 0
    %p68 = por %p66, %p67
    %s70 = sadd.s32 %s69, 1
    %p73 = scmp.eq.s32.totalorder %s14, 1
    %p74 = scmp.ne.s32.totalorder %s69, %s71
    %p75 = scmp.eq.s32.totalorder %s14, 0
    %p76 = por %p74, %p75
    %p77 = scmp.ne.s32.totalorder %s69, %s71
    %p78 = scmp.eq.s32.totalorder %s19, 1
    %p79 = por %p77, %p78
    %p80 = scmp.ne.s32.totalorder %s71, %s72
    %p81 = scmp.eq.s32.totalorder %s19, 0
    %p82 = por %p80, %p81
    %p83 = scmp.ne.s32.totalorder %s71, %s72
    %p84 = scmp.eq.s32.totalorder %s20, 1
    %p85 = por %p83, %p84
    %p87 = scmp.ne.s32.totalorder %s72, %s86
    %p88 = scmp.eq.s32.totalorder %s20, 0
    %p89 = por %p87, %p88
    %s91 = sadd.s32 %s90, 1
    %p94 = scmp.eq.s32.totalorder %s14, 1
    %p95 = scmp.ne.s32.totalorder %s90, %s92
    %p96 = scmp.eq.s32.totalorder %s14, 0
    %p97 = por %p95, %p96
    %p98 = scmp.ne.s32.totalorder %s90, %s92
    %p99 = scmp.eq.s32.totalorder %s19, 1
    %p100 = por %p98, %p99
    %p101 = scmp.ne.s32.totalorder %s92, %s93
    %p102 = scmp.eq.s32.totalorder %s19, 0
    %p103 = por %p101, %p102
    %p104 = scmp.ne.s32.totalorder %s92, %s93
    %p105 = scmp.eq.s32.totalorder %s20, 1
    %p106 = por %p104, %p105
    %p108 = scmp.ne.s32.totalorder %s93, %s107
    %p109 = scmp.eq.s32.totalorder %s20, 0
    %p110 = por %p108, %p109
    %s112 = sadd.s32 %s111, 1
    %p115 = scmp.eq.s32.totalorder %s14, 1
    %p116 = scmp.ne.s32.totalorder %s111, %s113
    %p117 = scmp.eq.s32.totalorder %s14, 0
    %p118 = por %p116, %p117
    %p119 = scmp.ne.s32.totalorder %s111, %s113
    %p120 = scmp.eq.s32.totalorder %s19, 1
    %p121 = por %p119, %p120
    %p122 = scmp.ne.s32.totalorder %s113, %s114
    %p123 = scmp.eq.s32.totalorder %s19, 0
    %p124 = por %p122, %p123
    %p125 = scmp.ne.s32.totalorder %s113, %s114
    %p126 = scmp.eq.s32.totalorder %s20, 1
    %p127 = por %p125, %p126
    %p129 = scmp.ne.s32.totalorder %s114, %s128
    %p130 = scmp.eq.s32.totalorder %s20, 0
    %p131 = por %p129, %p130
    %s132 = ssub.s32 %s14, %s21
    %p133 = scmp.eq.s32.totalorder %s132, 0
    %s135 = sadd.s32 %s134, 1
    %s136 = scalar_select %p133, %s134, %s135
    %p139 = pneg %p133
    %p140 = scmp.eq.s32.totalorder %s14, 1
    %p141 = por %p139, %p140
    %p142 = scmp.ne.s32.totalorder %s134, %s137
    %p143 = scmp.eq.s32.totalorder %s14, 0
    %p144 = por %p142, %p143
    %p145 = scmp.ne.s32.totalorder %s134, %s137
    %p146 = scmp.eq.s32.totalorder %s19, 1
    %p147 = por %p145, %p146
    %p148 = scmp.ne.s32.totalorder %s137, %s138
    %p149 = scmp.eq.s32.totalorder %s19, 0
    %p150 = por %p148, %p149
    %p151 = scmp.ne.s32.totalorder %s137, %s138
    %p152 = scmp.eq.s32.totalorder %s20, 1
    %p153 = por %p151, %p152
    %p155 = scmp.ne.s32.totalorder %s138, %s154
    %p156 = scmp.eq.s32.totalorder %s20, 0
    %p157 = por %p155, %p156
    %s158 = ssub.s32 %s14, %s21
    %p159 = scmp.eq.s32.totalorder %s158, 0
    %s161 = sadd.s32 %s160, 1
    %s162 = scalar_select %p159, %s160, %s161
    %p165 = pneg %p159
    %p166 = scmp.eq.s32.totalorder %s14, 1
    %p167 = por %p165, %p166
    %p168 = scmp.ne.s32.totalorder %s160, %s163
    %p169 = scmp.eq.s32.totalorder %s14, 0
    %p170 = por %p168, %p169
    %p171 = scmp.ne.s32.totalorder %s160, %s163
    %p172 = scmp.eq.s32.totalorder %s19, 1
    %p173 = por %p171, %p172
    %p174 = scmp.ne.s32.totalorder %s163, %s164
    %p175 = scmp.eq.s32.totalorder %s19, 0
    %p176 = por %p174, %p175
    %p177 = scmp.ne.s32.totalorder %s163, %s164
    %p178 = scmp.eq.s32.totalorder %s20, 1
    %p179 = por %p177, %p178
    %p181 = scmp.ne.s32.totalorder %s164, %s180
    %p182 = scmp.eq.s32.totalorder %s20, 0
    %p183 = por %p181, %p182
    %s184 = ssub.s32 %s14, %s21
    %p185 = scmp.eq.s32.totalorder %s184, 0
    %s187 = sadd.s32 %s186, 1
    %s188 = scalar_select %p185, %s186, %s187
    %p191 = pneg %p185
    %p192 = scmp.eq.s32.totalorder %s14, 1
    %p193 = por %p191, %p192
    %p194 = scmp.ne.s32.totalorder %s186, %s189
    %p195 = scmp.eq.s32.totalorder %s14, 0
    %p196 = por %p194, %p195
    %p197 = scmp.ne.s32.totalorder %s186, %s189
    %p198 = scmp.eq.s32.totalorder %s19, 1
    %p199 = por %p197, %p198
    %p200 = scmp.ne.s32.totalorder %s189, %s190
    %p201 = scmp.eq.s32.totalorder %s19, 0
    %p202 = por %p200, %p201
    %p203 = scmp.ne.s32.totalorder %s189, %s190
    %p204 = scmp.eq.s32.totalorder %s20, 1
    %p205 = por %p203, %p204
    %p207 = scmp.ne.s32.totalorder %s190, %s206
    %p208 = scmp.eq.s32.totalorder %s20, 0
    %p209 = por %p207, %p208
    %p210 = scmp.le.s32.totalorder 1, %s14
    %p211 = scmp.lt.s32.totalorder %s14, 3
    %p212 = pnand %p210, %p211
    %p213 = pneg %p212
    // Predicated region
    $region9: #{preact_block_forward.4} parent=5 // pred_check
      _
    $region10: #{preact_block_forward.4} parent=5 // pred_check_branch
      %215 = sbr.rel (%p212) target = $region12
    $region11: #{preact_block_forward.4} parent=5 // pred_region
      %s216 = ssub.s32 %s14, 1
      // Predicated region
      $region13: #{preact_block_forward.4} parent=11 // pred_check
        %p217 = pneg %p61
      $region14: #{preact_block_forward.4} parent=11 // pred_check_branch
        %219 = sbr.rel (%p217) target = $region16
      $region15: #{preact_block_forward.4} parent=11 // pred_region
        _
      $region16: #{preact_block_forward.4} parent=11 // pred_fallthru
        _
      // Predicated region
      $region17: #{preact_block_forward.4} parent=11 // pred_check
        %p220 = pneg %p82
      $region18: #{preact_block_forward.4} parent=11 // pred_check_branch
        %222 = sbr.rel (%p220) target = $region20
      $region19: #{preact_block_forward.4} parent=11 // pred_region
        _
      $region20: #{preact_block_forward.4} parent=11 // pred_fallthru
        _
      // Predicated region
      $region21: #{preact_block_forward.4} parent=11 // pred_check
        %p223 = pneg %p103
      $region22: #{preact_block_forward.4} parent=11 // pred_check_branch
        %225 = sbr.rel (%p223) target = $region24
      $region23: #{preact_block_forward.4} parent=11 // pred_region
        _
      $region24: #{preact_block_forward.4} parent=11 // pred_fallthru
        _
      // Predicated region
      $region25: #{preact_block_forward.4} parent=11 // pred_check
        %p226 = pneg %p124
      $region26: #{preact_block_forward.4} parent=11 // pred_check_branch
        %228 = sbr.rel (%p226) target = $region28
      $region27: #{preact_block_forward.4} parent=11 // pred_region
        _
      $region28: #{preact_block_forward.4} parent=11 // pred_fallthru
        _
    $region12: #{preact_block_forward.4} parent=5 // pred_fallthru
      _
    %p229 = scmp.lt.s32.totalorder %s14, 2
    // Predicated region
    $region29: #{preact_block_forward.4} parent=5 // pred_check
      %p230 = pneg %p229
    $region30: #{preact_block_forward.4} parent=5 // pred_check_branch
      %232 = sbr.rel (%p230) target = $region32
    $region31: #{preact_block_forward.4} parent=5 // pred_region
      // Predicated region
      $region33: #{preact_block_forward.4} parent=31 // pred_check
        %p233 = pneg %p34
      $region34: #{preact_block_forward.4} parent=31 // pred_check_branch
        %235 = sbr.rel (%p233) target = $region36
      $region35: #{preact_block_forward.4} parent=31 // pred_region
        %p236 = scmp.lt.s32.totalorder %s14, 1
        %s237 = scalar_select %p236, %s14, 1
        %s238 = smul.addr %s237, 8
        %s239 = smul.addr %s238, 8
        %s240 = scalar_lea.vmem %s0, %s239
      $region36: #{preact_block_forward.4} parent=31 // pred_fallthru
        _
    $region32: #{preact_block_forward.4} parent=5 // pred_fallthru
      _
    %p241 = scmp.le.s32.totalorder 1, %s14
    %p242 = scmp.lt.s32.totalorder %s14, 3
    %p243 = pnand %p241, %p242
    %p244 = pneg %p243
    // Predicated region
    $region37: #{preact_block_forward.4} parent=5 // pred_check
      _
    $region38: #{preact_block_forward.4} parent=5 // pred_check_branch
      %246 = sbr.rel (%p243) target = $region40
    $region39: #{preact_block_forward.4} parent=5 // pred_region
      %s247 = ssub.s32 %s14, 1
      %p248 = scmp.lt.s32.totalorder %s19, 1
      %s249 = scalar_select %p248, %s19, 1
      %s250 = smul.addr %s249, 8
      %s251 = smul.addr %s250, 8
      %s252 = scalar_lea.vmem %s0, %s251
      %p253 = pneg %p40
      %p254 = pneg %p37
      %p255 = pneg %p61
      %p256 = pneg %p58
      %p257 = pneg %p82
      %p258 = pneg %p79
      %p259 = pneg %p103
      %p260 = pneg %p100
      %p261 = pneg %p124
      %p262 = pneg %p121
      %p263 = pneg %p150
      %p264 = pneg %p147
      %p265 = scmp.lt.s32.totalorder %s19, 1
      %s266 = scalar_select %p265, %s19, 1
      %s267 = smul.addr %s266, 8
      %s268 = smul.addr %s267, 8
      %s269 = scalar_lea.vmem %s5, %s268
      %p270 = pneg %p176
      %p271 = pneg %p173
      %p272 = scmp.lt.s32.totalorder %s19, 1
      %s273 = scalar_select %p272, %s19, 1
      %s274 = smul.addr %s273, 8
      %s275 = smul.addr %s274, 8
      %s276 = scalar_lea.vmem %s6, %s275
      %p277 = pneg %p202
      %p278 = pneg %p199
      %p279 = scmp.lt.s32.totalorder %s19, 1
      %s280 = scalar_select %p279, %s19, 1
      %s281 = smul.addr %s280, 8
      %s282 = scalar_lea.vmem %s7, %s281
      %p283 = scmp.lt.s32.totalorder %s19, 1
      %s284 = scalar_select %p283, %s19, 1
      %s285 = smul.addr %s284, 8
      %s286 = smul.addr %s285, 8
      %s287 = scalar_lea.vmem %s0, %s286
      %p288 = scmp.lt.s32.totalorder %s19, 1
      %s289 = scalar_select %p288, %s19, 1
      %s290 = smul.addr %s289, 8
      %s291 = smul.addr %s290, 8
      %s292 = scalar_lea.vmem %s5, %s291
      %p293 = scmp.lt.s32.totalorder %s19, 1
      %s294 = scalar_select %p293, %s19, 1
      %s295 = smul.addr %s294, 8
      %s296 = smul.addr %s295, 8
      %s297 = scalar_lea.vmem %s6, %s296
      %p298 = scmp.lt.s32.totalorder %s19, 1
      %s299 = scalar_select %p298, %s19, 1
      %s300 = smul.addr %s299, 8
      %s301 = scalar_lea.vmem %s7, %s300
      %vm302 = vcmask 130048
      %303 = vst.msk [vmem:[#allocation2] sm:$0xff] %vm302, 0.0
      %vm304 = vcmask 122880
      %305 = vst.msk [vmem:[#allocation2 + $0x8] sm:$0x1] %vm304, 0.0
      %306 = vst.msk [vmem:[#allocation2 + $0x10] sm:$0xff] %vm302, 0.0
      %307 = vst.msk [vmem:[#allocation2 + $0x18] sm:$0x1] %vm304, 0.0
      %308 = vst.msk [vmem:[#allocation2 + $0x20] sm:$0xff] %vm302, 0.0
      %309 = vst.msk [vmem:[#allocation2 + $0x28] sm:$0x1] %vm304, 0.0
      %310 = vst.msk [vmem:[#allocation2 + $0x30] sm:$0xff] %vm302, 0.0
      %311 = vst.msk [vmem:[#allocation2 + $0x38] sm:$0x1] %vm304, 0.0
      %312 = vst.msk [vmem:[#allocation2 + $0x40] sm:$0xff] %vm302, 0.0
      %313 = vst.msk [vmem:[#allocation2 + $0x48] sm:$0x1] %vm304, 0.0
      %314 = vst.msk [vmem:[#allocation2 + $0x50] sm:$0xff] %vm302, 0.0
      %315 = vst.msk [vmem:[#allocation2 + $0x58] sm:$0x1] %vm304, 0.0
      %316 = vst.msk [vmem:[#allocation2 + $0x60] sm:$0xff] %vm302, 0.0
      %317 = vst.msk [vmem:[#allocation2 + $0x68] sm:$0x1] %vm304, 0.0
      %318 = vst.msk [vmem:[#allocation2 + $0x70] sm:$0xff] %vm302, 0.0
      %319 = vst.msk [vmem:[#allocation2 + $0x78] sm:$0x1] %vm304, 0.0
      %320 = vst.msk [vmem:[#allocation2 + $0x80] sm:$0xff] %vm302, 0.0
      %321 = vst.msk [vmem:[#allocation2 + $0x88] sm:$0x1] %vm304, 0.0
      %v322 = vld [vmem:[%s287] sm:$0xff]
      %v323 = vld [vmem:[%s287 + $0x8] sm:$0xff]
      %v324 = vld [vmem:[%s287 + $0x10] sm:$0xff]
      %v325 = vld [vmem:[%s287 + $0x18] sm:$0xff]
      %v326 = vld [vmem:[%s287 + $0x20] sm:$0xff]
      %v327 = vld [vmem:[%s287 + $0x28] sm:$0xff]
      %v328 = vld [vmem:[%s287 + $0x30] sm:$0xff]
      %v329 = vld [vmem:[%s287 + $0x38] sm:$0xff]
      %v330 = vld [vmem:[%s1] sm:$0x1]
      %v332 = vlaneseq
      %v333 = vshrl.u32 %v332, 7
      %v334 = vsub.s32 0, %v333
      %v335 = vrot.slane %v330, %v334
      %v337 = vmul.f32 %v322, %v335
      %v338 = vmul.f32 %v323, %v335
      %v339 = vmul.f32 %v324, %v335
      %v340 = vmul.f32 %v325, %v335
      %v341 = vmul.f32 %v326, %v335
      %v342 = vmul.f32 %v327, %v335
      %v343 = vmul.f32 %v328, %v335
      %v344 = vmul.f32 %v329, %v335
      %v345 = vld [vmem:[%s2] sm:$0x1]
      %v347 = vlaneseq
      %v348 = vshrl.u32 %v347, 7
      %v349 = vsub.s32 0, %v348
      %v350 = vrot.slane %v345, %v349
      %v352 = vadd.f32 %v337, %v350
      %v353 = vadd.f32 %v338, %v350
      %v354 = vadd.f32 %v339, %v350
      %v355 = vadd.f32 %v340, %v350
      %v356 = vadd.f32 %v341, %v350
      %v357 = vadd.f32 %v342, %v350
      %v358 = vadd.f32 %v343, %v350
      %v359 = vadd.f32 %v344, %v350
      %v360 = vand.u32 2147483647, %v352
      %v361 = vand.u32 2147483647, %v353
      %v362 = vand.u32 2147483647, %v354
      %v363 = vand.u32 2147483647, %v355
      %v364 = vand.u32 2147483647, %v356
      %v365 = vand.u32 2147483647, %v357
      %v366 = vand.u32 2147483647, %v358
      %v367 = vand.u32 2147483647, %v359
      %v368 = vadd.f32 %v360, 1.0
      %v369 = vadd.f32 %v361, 1.0
      %v370 = vadd.f32 %v362, 1.0
      %v371 = vadd.f32 %v363, 1.0
      %v372 = vadd.f32 %v364, 1.0
      %v373 = vadd.f32 %v365, 1.0
      %v374 = vadd.f32 %v366, 1.0
      %v375 = vadd.f32 %v367, 1.0
      %v376 = vrcp.pop %v368
      %v377 = vmul.f32 %v352, %v376
      %v378 = vrcp.pop %v369
      %v379 = vmul.f32 %v353, %v378
      %v380 = vrcp.pop %v370
      %v381 = vmul.f32 %v354, %v380
      %v382 = vrcp.pop %v371
      %v383 = vmul.f32 %v355, %v382
      %v384 = vrcp.pop %v372
      %v385 = vmul.f32 %v356, %v384
      %v386 = vrcp.pop %v373
      %v387 = vmul.f32 %v357, %v386
      %v388 = vrcp.pop %v374
      %v389 = vmul.f32 %v358, %v388
      %v390 = vrcp.pop %v375
      %v391 = vmul.f32 %v359, %v390
      %s392 = scalar_lea.vmem [#allocation2], 16
      %393 = vst.msk [vmem:[%s392 + $0x1] sm:$0xff] %vm302, %v377
      %394 = vst.msk [vmem:[%s392 + $0x11] sm:$0xff] %vm302, %v379
      %395 = vst.msk [vmem:[%s392 + $0x21] sm:$0xff] %vm302, %v381
      %396 = vst.msk [vmem:[%s392 + $0x31] sm:$0xff] %vm302, %v383
      %397 = vst.msk [vmem:[%s392 + $0x41] sm:$0xff] %vm302, %v385
      %398 = vst.msk [vmem:[%s392 + $0x51] sm:$0xff] %vm302, %v387
      %399 = vst.msk [vmem:[%s392 + $0x61] sm:$0xff] %vm302, %v389
      %400 = vst.msk [vmem:[%s392 + $0x71] sm:$0xff] %vm302, %v391
      %v401 = vld [vmem:[%s3] sm:$0xff]
      %v402 = vld [vmem:[%s3 + $0x8] sm:$0xff]
      %v403 = vld [vmem:[%s3 + $0x10] sm:$0xff]
      %v404 = vld [vmem:[%s3 + $0x18] sm:$0xff]
      %v405 = vld [vmem:[%s3 + $0x20] sm:$0xff]
      %v406 = vld [vmem:[%s3 + $0x28] sm:$0xff]
      %v407 = vld [vmem:[%s3 + $0x30] sm:$0xff]
      %v408 = vld [vmem:[%s3 + $0x38] sm:$0xff]
      %v409 = vld [vmem:[#allocation2] sm:$0xff]
      %v410 = vld [vmem:[#allocation2 + $0x10] sm:$0xff]
      %v411 = vld [vmem:[#allocation2 + $0x20] sm:$0xff]
      %v412 = vld [vmem:[#allocation2 + $0x30] sm:$0xff]
      %v413 = vld [vmem:[#allocation2 + $0x40] sm:$0xff]
      %v414 = vld [vmem:[#allocation2 + $0x50] sm:$0xff]
      %v415 = vld [vmem:[#allocation2 + $0x60] sm:$0xff]
      %v416 = vld [vmem:[#allocation2 + $0x70] sm:$0xff]
      %v417 = vld [vmem:[#allocation2 + $0x1] sm:$0xff]
      %v418 = vld [vmem:[#allocation2 + $0x11] sm:$0xff]
      %v419 = vld [vmem:[#allocation2 + $0x21] sm:$0xff]
      %v420 = vld [vmem:[#allocation2 + $0x31] sm:$0xff]
      %v421 = vld [vmem:[#allocation2 + $0x41] sm:$0xff]
      %v422 = vld [vmem:[#allocation2 + $0x51] sm:$0xff]
      %v423 = vld [vmem:[#allocation2 + $0x61] sm:$0xff]
      %v424 = vld [vmem:[#allocation2 + $0x71] sm:$0xff]
      %v426 = vsel %vm302, %v417, 0
      %v429 = vsel %vm302, %v418, 0
      %v432 = vsel %vm302, %v419, 0
      %v435 = vsel %vm302, %v420, 0
      %v438 = vsel %vm302, %v421, 0
      %v441 = vsel %vm302, %v422, 0
      %v444 = vsel %vm302, %v423, 0
      %v447 = vsel %vm302, %v424, 0
      %449 = vmatprep.subr.mxu0 0.0
      %450 = vmatpush1.msra.mxu0 %v403
      %451 = vmatprep.subr.mxu0 0.0
      %452 = vmatpush1.msra.mxu0 %v404
      %453 = vmatprep.subr.mxu0 0.0
      %454 = vmatpush1.msra.mxu0 0.0
      %455 = vmatprep.subr.mxu0 0.0
      %456 = vmatpush1.msra.mxu0 0.0
      %457 = vmatprep.subr.mxu0 0.0
      %458 = vmatpush1.msra.mxu0 0.0
      %459 = vmatprep.subr.mxu0 0.0
      %460 = vmatpush1.msra.mxu0 0.0
      %461 = vmatprep.subr.mxu0 0.0
      %462 = vmatpush1.msra.mxu0 0.0
      %463 = vmatprep.subr.mxu0 0.0
      %464 = vmatpush1.msra.mxu0 0.0
      %465 = vmatprep.subr.mxu0 0.0
      %466 = vmatpush1.msra.mxu0 0.0
      %467 = vmatprep.subr.mxu0 0.0
      %468 = vmatpush1.msra.mxu0 0.0
      %469 = vmatprep.subr.mxu0 0.0
      %470 = vmatpush1.msra.mxu0 0.0
      %471 = vmatprep.subr.mxu0 0.0
      %472 = vmatpush1.msra.mxu0 0.0
      %473 = vmatprep.subr.mxu0 0.0
      %474 = vmatpush1.msra.mxu0 0.0
      %475 = vmatprep.subr.mxu0 0.0
      %476 = vmatpush1.msra.mxu0 0.0
      %477 = vmatprep.subr.mxu0 0.0
      %478 = vmatpush1.msra.mxu0 0.0
      %479 = vmatprep.subr.mxu0 0.0
      %480 = vmatpush1.msra.mxu0 0.0
      %481 = vmatprep.subr.mxu0 0.0
      %482 = vmatpush1.msra.mxu0 0.0
      %483 = vmatprep.subr.mxu0 0.0
      %484 = vmatpush1.msra.mxu0 0.0
      %485 = vmatprep.subr.mxu0 0.0
      %486 = vmatpush1.msra.mxu0 0.0
      %487 = vmatprep.subr.mxu0 0.0
      %488 = vmatpush1.msra.mxu0 0.0
      %489 = vmatprep.subr.mxu0 0.0
      %490 = vmatpush1.msra.mxu0 0.0
      %491 = vmatprep.subr.mxu0 0.0
      %492 = vmatpush1.msra.mxu0 0.0
      %493 = vmatprep.subr.mxu0 0.0
      %494 = vmatpush1.msra.mxu0 0.0
      %495 = vmatprep.subr.mxu0 0.0
      %496 = vmatpush1.msra.mxu0 0.0
      %497 = vmatprep.subr.mxu0 0.0
      %498 = vmatpush1.msra.mxu0 0.0
      %499 = vmatprep.subr.mxu0 0.0
      %500 = vmatpush1.msra.mxu0 0.0
      %501 = vmatprep.subr.mxu0 0.0
      %502 = vmatpush1.msra.mxu0 0.0
      %503 = vmatprep.subr.mxu0 0.0
      %504 = vmatpush1.msra.mxu0 0.0
      %505 = vmatprep.subr.mxu0 0.0
      %506 = vmatpush1.msra.mxu0 0.0
      %507 = vmatprep.subr.mxu0 0.0
      %508 = vmatpush1.msra.mxu0 0.0
      %509 = vmatprep.subr.mxu0 0.0
      %510 = vmatpush1.msra.mxu0 0.0
      %511 = vmatprep.subr.mxu0 0.0
      %512 = vmatpush1.msra.mxu0 0.0
      %513 = vmatprep.mubr.f32.mxu0 0.0
      %514 = vmatmul.mubr.f32.gmra.mrb[0].mxu0 %v426
      %v515 = vpop.f32.mrb[0].mxu0
      %v516 = vadd.f32 0.0, %v515
      %v517 = vpop.f32.mrb[0].mxu0
      %518 = vmatprep.mubr.f32.mxu0 0.0
      %519 = vmatmul.mubr.f32.gmra.mrb[0].mxu0 %v429
      %v520 = vpop.f32.mrb[0].mxu0
      %v521 = vadd.f32 0.0, %v520
      %v522 = vpop.f32.mrb[0].mxu0
      %523 = vmatprep.mubr.f32.mxu0 0.0
      %524 = vmatmul.mubr.f32.gmra.mrb[0].mxu0 %v432
      %v525 = vpop.f32.mrb[0].mxu0
      %v526 = vadd.f32 0.0, %v525
      %v527 = vpop.f32.mrb[0].mxu0
      %528 = vmatprep.mubr.f32.mxu0 0.0
      %529 = vmatmul.mubr.f32.gmra.mrb[0].mxu0 %v435
      %v530 = vpop.f32.mrb[0].mxu0
      %v531 = vadd.f32 0.0, %v530
      %v532 = vpop.f32.mrb[0].mxu0
      %533 = vmatprep.mubr.f32.mxu0 0.0
      %534 = vmatmul.mubr.f32.gmra.mrb[0].mxu0 %v438
      %v535 = vpop.f32.mrb[0].mxu0
      %v536 = vadd.f32 0.0, %v535
      %v537 = vpop.f32.mrb[0].mxu0
      %538 = vmatprep.mubr.f32.mxu0 0.0
      %539 = vmatmul.mubr.f32.gmra.mrb[0].mxu0 %v441
      %v540 = vpop.f32.mrb[0].mxu0
      %v541 = vadd.f32 0.0, %v540
      %v542 = vpop.f32.mrb[0].mxu0
      %543 = vmatprep.mubr.f32.mxu0 0.0
      %544 = vmatmul.mubr.f32.gmra.mrb[0].mxu0 %v444
      %v545 = vpop.f32.mrb[0].mxu0
      %v546 = vadd.f32 0.0, %v545
      %v547 = vpop.f32.mrb[0].mxu0
      %548 = vmatprep.mubr.f32.mxu0 0.0
      %549 = vmatmul.mubr.f32.gmra.mrb[0].mxu0 %v447
      %v550 = vpop.f32.mrb[0].mxu0
      %v551 = vadd.f32 0.0, %v550
      %v552 = vpop.f32.mrb[0].mxu0
      %553 = vdwg.mxu0
      %v555 = vsel %vm302, %v409, 0
      %v558 = vsel %vm302, %v410, 0
      %v561 = vsel %vm302, %v411, 0
      %v564 = vsel %vm302, %v412, 0
      %v567 = vsel %vm302, %v413, 0
      %v570 = vsel %vm302, %v414, 0
      %v573 = vsel %vm302, %v415, 0
      %v576 = vsel %vm302, %v416, 0
      %578 = vmatprep.subr.mxu0 0.0
      %579 = vmatpush1.msra.mxu0 %v401
      %580 = vmatprep.subr.mxu0 0.0
      %581 = vmatpush1.msra.mxu0 %v402
      %582 = vmatprep.subr.mxu0 0.0
      %583 = vmatpush1.msra.mxu0 0.0
      %584 = vmatprep.subr.mxu0 0.0
      %585 = vmatpush1.msra.mxu0 0.0
      %586 = vmatprep.subr.mxu0 0.0
      %587 = vmatpush1.msra.mxu0 0.0
      %588 = vmatprep.subr.mxu0 0.0
      %589 = vmatpush1.msra.mxu0 0.0
      %590 = vmatprep.subr.mxu0 0.0
      %591 = vmatpush1.msra.mxu0 0.0
      %592 = vmatprep.subr.mxu0 0.0
      %593 = vmatpush1.msra.mxu0 0.0
      %594 = vmatprep.subr.mxu0 0.0
      %595 = vmatpush1.msra.mxu0 0.0
      %596 = vmatprep.subr.mxu0 0.0
      %597 = vmatpush1.msra.mxu0 0.0
      %598 = vmatprep.subr.mxu0 0.0
      %599 = vmatpush1.msra.mxu0 0.0
      %600 = vmatprep.subr.mxu0 0.0
      %601 = vmatpush1.msra.mxu0 0.0
      %602 = vmatprep.subr.mxu0 0.0
      %603 = vmatpush1.msra.mxu0 0.0
      %604 = vmatprep.subr.mxu0 0.0
      %605 = vmatpush1.msra.mxu0 0.0
      %606 = vmatprep.subr.mxu0 0.0
      %607 = vmatpush1.msra.mxu0 0.0
      %608 = vmatprep.subr.mxu0 0.0
      %609 = vmatpush1.msra.mxu0 0.0
      %610 = vmatprep.subr.mxu0 0.0
      %611 = vmatpush1.msra.mxu0 0.0
      %612 = vmatprep.subr.mxu0 0.0
      %613 = vmatpush1.msra.mxu0 0.0
      %614 = vmatprep.subr.mxu0 0.0
      %615 = vmatpush1.msra.mxu0 0.0
      %616 = vmatprep.subr.mxu0 0.0
      %617 = vmatpush1.msra.mxu0 0.0
      %618 = vmatprep.subr.mxu0 0.0
      %619 = vmatpush1.msra.mxu0 0.0
      %620 = vmatprep.subr.mxu0 0.0
      %621 = vmatpush1.msra.mxu0 0.0
      %622 = vmatprep.subr.mxu0 0.0
      %623 = vmatpush1.msra.mxu0 0.0
      %624 = vmatprep.subr.mxu0 0.0
      %625 = vmatpush1.msra.mxu0 0.0
      %626 = vmatprep.subr.mxu0 0.0
      %627 = vmatpush1.msra.mxu0 0.0
      %628 = vmatprep.subr.mxu0 0.0
      %629 = vmatpush1.msra.mxu0 0.0
      %630 = vmatprep.subr.mxu0 0.0
      %631 = vmatpush1.msra.mxu0 0.0
      %632 = vmatprep.subr.mxu0 0.0
      %633 = vmatpush1.msra.mxu0 0.0
      %634 = vmatprep.subr.mxu0 0.0
      %635 = vmatpush1.msra.mxu0 0.0
      %636 = vmatprep.subr.mxu0 0.0
      %637 = vmatpush1.msra.mxu0 0.0
      %638 = vmatprep.subr.mxu0 0.0
      %639 = vmatpush1.msra.mxu0 0.0
      %640 = vmatprep.subr.mxu0 0.0
      %641 = vmatpush1.msra.mxu0 0.0
      %642 = vmatprep.mubr.f32.mxu0 0.0
      %643 = vmatmul.mubr.f32.gmra.mrb[0].mxu0 %v555
      %v644 = vpop.f32.mrb[0].mxu0
      %v645 = vadd.f32 %v516, %v644
      %v646 = vpop.f32.mrb[0].mxu0
      %647 = vmatprep.mubr.f32.mxu0 0.0
      %648 = vmatmul.mubr.f32.gmra.mrb[0].mxu0 %v558
      %v649 = vpop.f32.mrb[0].mxu0
      %v650 = vadd.f32 %v521, %v649
      %v651 = vpop.f32.mrb[0].mxu0
      %652 = vmatprep.mubr.f32.mxu0 0.0
      %653 = vmatmul.mubr.f32.gmra.mrb[0].mxu0 %v561
      %v654 = vpop.f32.mrb[0].mxu0
      %v655 = vadd.f32 %v526, %v654
      %v656 = vpop.f32.mrb[0].mxu0
      %657 = vmatprep.mubr.f32.mxu0 0.0
      %658 = vmatmul.mubr.f32.gmra.mrb[0].mxu0 %v564
      %v659 = vpop.f32.mrb[0].mxu0
      %v660 = vadd.f32 %v531, %v659
      %v661 = vpop.f32.mrb[0].mxu0
      %662 = vmatprep.mubr.f32.mxu0 0.0
      %663 = vmatmul.mubr.f32.gmra.mrb[0].mxu0 %v567
      %v664 = vpop.f32.mrb[0].mxu0
      %v665 = vadd.f32 %v536, %v664
      %v666 = vpop.f32.mrb[0].mxu0
      %667 = vmatprep.mubr.f32.mxu0 0.0
      %668 = vmatmul.mubr.f32.gmra.mrb[0].mxu0 %v570
      %v669 = vpop.f32.mrb[0].mxu0
      %v670 = vadd.f32 %v541, %v669
      %v671 = vpop.f32.mrb[0].mxu0
      %672 = vmatprep.mubr.f32.mxu0 0.0
      %673 = vmatmul.mubr.f32.gmra.mrb[0].mxu0 %v573
      %v674 = vpop.f32.mrb[0].mxu0
      %v675 = vadd.f32 %v546, %v674
      %v676 = vpop.f32.mrb[0].mxu0
      %677 = vmatprep.mubr.f32.mxu0 0.0
      %678 = vmatmul.mubr.f32.gmra.mrb[0].mxu0 %v576
      %v679 = vpop.f32.mrb[0].mxu0
      %v680 = vadd.f32 %v551, %v679
      %v681 = vpop.f32.mrb[0].mxu0
      %682 = vdwg.mxu0
      %v683 = vld [vmem:[%s392] sm:$0xff]
      %v684 = vld [vmem:[%s392 + $0x10] sm:$0xff]
      %v685 = vld [vmem:[%s392 + $0x20] sm:$0xff]
      %v686 = vld [vmem:[%s392 + $0x30] sm:$0xff]
      %v687 = vld [vmem:[%s392 + $0x40] sm:$0xff]
      %v688 = vld [vmem:[%s392 + $0x50] sm:$0xff]
      %v689 = vld [vmem:[%s392 + $0x60] sm:$0xff]
      %v690 = vld [vmem:[%s392 + $0x70] sm:$0xff]
      %v692 = vsel %vm302, %v683, 0
      %v695 = vsel %vm302, %v684, 0
      %v698 = vsel %vm302, %v685, 0
      %v701 = vsel %vm302, %v686, 0
      %v704 = vsel %vm302, %v687, 0
      %v707 = vsel %vm302, %v688, 0
      %v710 = vsel %vm302, %v689, 0
      %v713 = vsel %vm302, %v690, 0
      %715 = vmatprep.subr.mxu0 0.0
      %716 = vmatpush1.msra.mxu0 %v405
      %717 = vmatprep.subr.mxu0 0.0
      %718 = vmatpush1.msra.mxu0 %v406
      %719 = vmatprep.subr.mxu0 0.0
      %720 = vmatpush1.msra.mxu0 0.0
      %721 = vmatprep.subr.mxu0 0.0
      %722 = vmatpush1.msra.mxu0 0.0
      %723 = vmatprep.subr.mxu0 0.0
      %724 = vmatpush1.msra.mxu0 0.0
      %725 = vmatprep.subr.mxu0 0.0
      %726 = vmatpush1.msra.mxu0 0.0
      %727 = vmatprep.subr.mxu0 0.0
      %728 = vmatpush1.msra.mxu0 0.0
      %729 = vmatprep.subr.mxu0 0.0
      %730 = vmatpush1.msra.mxu0 0.0
      %731 = vmatprep.subr.mxu0 0.0
      %732 = vmatpush1.msra.mxu0 0.0
      %733 = vmatprep.subr.mxu0 0.0
      %734 = vmatpush1.msra.mxu0 0.0
      %735 = vmatprep.subr.mxu0 0.0
      %736 = vmatpush1.msra.mxu0 0.0
      %737 = vmatprep.subr.mxu0 0.0
      %738 = vmatpush1.msra.mxu0 0.0
      %739 = vmatprep.subr.mxu0 0.0
      %740 = vmatpush1.msra.mxu0 0.0
      %741 = vmatprep.subr.mxu0 0.0
      %742 = vmatpush1.msra.mxu0 0.0
      %743 = vmatprep.subr.mxu0 0.0
      %744 = vmatpush1.msra.mxu0 0.0
      %745 = vmatprep.subr.mxu0 0.0
      %746 = vmatpush1.msra.mxu0 0.0
      %747 = vmatprep.subr.mxu0 0.0
      %748 = vmatpush1.msra.mxu0 0.0
      %749 = vmatprep.subr.mxu0 0.0
      %750 = vmatpush1.msra.mxu0 0.0
      %751 = vmatprep.subr.mxu0 0.0
      %752 = vmatpush1.msra.mxu0 0.0
      %753 = vmatprep.subr.mxu0 0.0
      %754 = vmatpush1.msra.mxu0 0.0
      %755 = vmatprep.subr.mxu0 0.0
      %756 = vmatpush1.msra.mxu0 0.0
      %757 = vmatprep.subr.mxu0 0.0
      %758 = vmatpush1.msra.mxu0 0.0
      %759 = vmatprep.subr.mxu0 0.0
      %760 = vmatpush1.msra.mxu0 0.0
      %761 = vmatprep.subr.mxu0 0.0
      %762 = vmatpush1.msra.mxu0 0.0
      %763 = vmatprep.subr.mxu0 0.0
      %764 = vmatpush1.msra.mxu0 0.0
      %765 = vmatprep.subr.mxu0 0.0
      %766 = vmatpush1.msra.mxu0 0.0
      %767 = vmatprep.subr.mxu0 0.0
      %768 = vmatpush1.msra.mxu0 0.0
      %769 = vmatprep.subr.mxu0 0.0
      %770 = vmatpush1.msra.mxu0 0.0
      %771 = vmatprep.subr.mxu0 0.0
      %772 = vmatpush1.msra.mxu0 0.0
      %773 = vmatprep.subr.mxu0 0.0
      %774 = vmatpush1.msra.mxu0 0.0
      %775 = vmatprep.subr.mxu0 0.0
      %776 = vmatpush1.msra.mxu0 0.0
      %777 = vmatprep.subr.mxu0 0.0
      %778 = vmatpush1.msra.mxu0 0.0
      %779 = vmatprep.mubr.f32.mxu0 0.0
      %780 = vmatmul.mubr.f32.gmra.mrb[0].mxu0 %v692
      %v781 = vpop.f32.mrb[0].mxu0
      %v782 = vadd.f32 0.0, %v781
      %v783 = vpop.f32.mrb[0].mxu0
      %784 = vmatprep.mubr.f32.mxu0 0.0
      %785 = vmatmul.mubr.f32.gmra.mrb[0].mxu0 %v695
      %v786 = vpop.f32.mrb[0].mxu0
      %v787 = vadd.f32 0.0, %v786
      %v788 = vpop.f32.mrb[0].mxu0
      %789 = vmatprep.mubr.f32.mxu0 0.0
      %790 = vmatmul.mubr.f32.gmra.mrb[0].mxu0 %v698
      %v791 = vpop.f32.mrb[0].mxu0
      %v792 = vadd.f32 0.0, %v791
      %v793 = vpop.f32.mrb[0].mxu0
      %794 = vmatprep.mubr.f32.mxu0 0.0
      %795 = vmatmul.mubr.f32.gmra.mrb[0].mxu0 %v701
      %v796 = vpop.f32.mrb[0].mxu0
      %v797 = vadd.f32 0.0, %v796
      %v798 = vpop.f32.mrb[0].mxu0
      %799 = vmatprep.mubr.f32.mxu0 0.0
      %800 = vmatmul.mubr.f32.gmra.mrb[0].mxu0 %v704
      %v801 = vpop.f32.mrb[0].mxu0
      %v802 = vadd.f32 0.0, %v801
      %v803 = vpop.f32.mrb[0].mxu0
      %804 = vmatprep.mubr.f32.mxu0 0.0
      %805 = vmatmul.mubr.f32.gmra.mrb[0].mxu0 %v707
      %v806 = vpop.f32.mrb[0].mxu0
      %v807 = vadd.f32 0.0, %v806
      %v808 = vpop.f32.mrb[0].mxu0
      %809 = vmatprep.mubr.f32.mxu0 0.0
      %810 = vmatmul.mubr.f32.gmra.mrb[0].mxu0 %v710
      %v811 = vpop.f32.mrb[0].mxu0
      %v812 = vadd.f32 0.0, %v811
      %v813 = vpop.f32.mrb[0].mxu0
      %814 = vmatprep.mubr.f32.mxu0 0.0
      %815 = vmatmul.mubr.f32.gmra.mrb[0].mxu0 %v713
      %v816 = vpop.f32.mrb[0].mxu0
      %v817 = vadd.f32 0.0, %v816
      %v818 = vpop.f32.mrb[0].mxu0
      %819 = vdwg.mxu0
      %v820 = vadd.f32 %v645, %v782
      %v821 = vadd.f32 %v650, %v787
      %v822 = vadd.f32 %v655, %v792
      %v823 = vadd.f32 %v660, %v797
      %v824 = vadd.f32 %v665, %v802
      %v825 = vadd.f32 %v670, %v807
      %v826 = vadd.f32 %v675, %v812
      %v827 = vadd.f32 %v680, %v817
      %v828 = vld [vmem:[%s392 + $0x1] sm:$0xff]
      %v829 = vld [vmem:[%s392 + $0x11] sm:$0xff]
      %v830 = vld [vmem:[%s392 + $0x21] sm:$0xff]
      %v831 = vld [vmem:[%s392 + $0x31] sm:$0xff]
      %v832 = vld [vmem:[%s392 + $0x41] sm:$0xff]
      %v833 = vld [vmem:[%s392 + $0x51] sm:$0xff]
      %v834 = vld [vmem:[%s392 + $0x61] sm:$0xff]
      %v835 = vld [vmem:[%s392 + $0x71] sm:$0xff]
      %v837 = vsel %vm302, %v828, 0
      %v840 = vsel %vm302, %v829, 0
      %v843 = vsel %vm302, %v830, 0
      %v846 = vsel %vm302, %v831, 0
      %v849 = vsel %vm302, %v832, 0
      %v852 = vsel %vm302, %v833, 0
      %v855 = vsel %vm302, %v834, 0
      %v858 = vsel %vm302, %v835, 0
      %860 = vmatprep.subr.mxu0 0.0
      %861 = vmatpush1.msra.mxu0 %v407
      %862 = vmatprep.subr.mxu0 0.0
      %863 = vmatpush1.msra.mxu0 %v408
      %864 = vmatprep.subr.mxu0 0.0
      %865 = vmatpush1.msra.mxu0 0.0
      %866 = vmatprep.subr.mxu0 0.0
      %867 = vmatpush1.msra.mxu0 0.0
      %868 = vmatprep.subr.mxu0 0.0
      %869 = vmatpush1.msra.mxu0 0.0
      %870 = vmatprep.subr.mxu0 0.0
      %871 = vmatpush1.msra.mxu0 0.0
      %872 = vmatprep.subr.mxu0 0.0
      %873 = vmatpush1.msra.mxu0 0.0
      %874 = vmatprep.subr.mxu0 0.0
      %875 = vmatpush1.msra.mxu0 0.0
      %876 = vmatprep.subr.mxu0 0.0
      %877 = vmatpush1.msra.mxu0 0.0
      %878 = vmatprep.subr.mxu0 0.0
      %879 = vmatpush1.msra.mxu0 0.0
      %880 = vmatprep.subr.mxu0 0.0
      %881 = vmatpush1.msra.mxu0 0.0
      %882 = vmatprep.subr.mxu0 0.0
      %883 = vmatpush1.msra.mxu0 0.0
      %884 = vmatprep.subr.mxu0 0.0
      %885 = vmatpush1.msra.mxu0 0.0
      %886 = vmatprep.subr.mxu0 0.0
      %887 = vmatpush1.msra.mxu0 0.0
      %888 = vmatprep.subr.mxu0 0.0
      %889 = vmatpush1.msra.mxu0 0.0
      %890 = vmatprep.subr.mxu0 0.0
      %891 = vmatpush1.msra.mxu0 0.0
      %892 = vmatprep.subr.mxu0 0.0
      %893 = vmatpush1.msra.mxu0 0.0
      %894 = vmatprep.subr.mxu0 0.0
      %895 = vmatpush1.msra.mxu0 0.0
      %896 = vmatprep.subr.mxu0 0.0
      %897 = vmatpush1.msra.mxu0 0.0
      %898 = vmatprep.subr.mxu0 0.0
      %899 = vmatpush1.msra.mxu0 0.0
      %900 = vmatprep.subr.mxu0 0.0
      %901 = vmatpush1.msra.mxu0 0.0
      %902 = vmatprep.subr.mxu0 0.0
      %903 = vmatpush1.msra.mxu0 0.0
      %904 = vmatprep.subr.mxu0 0.0
      %905 = vmatpush1.msra.mxu0 0.0
      %906 = vmatprep.subr.mxu0 0.0
      %907 = vmatpush1.msra.mxu0 0.0
      %908 = vmatprep.subr.mxu0 0.0
      %909 = vmatpush1.msra.mxu0 0.0
      %910 = vmatprep.subr.mxu0 0.0
      %911 = vmatpush1.msra.mxu0 0.0
      %912 = vmatprep.subr.mxu0 0.0
      %913 = vmatpush1.msra.mxu0 0.0
      %914 = vmatprep.subr.mxu0 0.0
      %915 = vmatpush1.msra.mxu0 0.0
      %916 = vmatprep.subr.mxu0 0.0
      %917 = vmatpush1.msra.mxu0 0.0
      %918 = vmatprep.subr.mxu0 0.0
      %919 = vmatpush1.msra.mxu0 0.0
      %920 = vmatprep.subr.mxu0 0.0
      %921 = vmatpush1.msra.mxu0 0.0
      %922 = vmatprep.subr.mxu0 0.0
      %923 = vmatpush1.msra.mxu0 0.0
      %924 = vmatprep.mubr.f32.mxu0 0.0
      %925 = vmatmul.mubr.f32.gmra.mrb[0].mxu0 %v837
      %v926 = vpop.f32.mrb[0].mxu0
      %v927 = vadd.f32 0.0, %v926
      %v928 = vpop.f32.mrb[0].mxu0
      %929 = vmatprep.mubr.f32.mxu0 0.0
      %930 = vmatmul.mubr.f32.gmra.mrb[0].mxu0 %v840
      %v931 = vpop.f32.mrb[0].mxu0
      %v932 = vadd.f32 0.0, %v931
      %v933 = vpop.f32.mrb[0].mxu0
      %934 = vmatprep.mubr.f32.mxu0 0.0
      %935 = vmatmul.mubr.f32.gmra.mrb[0].mxu0 %v843
      %v936 = vpop.f32.mrb[0].mxu0
      %v937 = vadd.f32 0.0, %v936
      %v938 = vpop.f32.mrb[0].mxu0
      %939 = vmatprep.mubr.f32.mxu0 0.0
      %940 = vmatmul.mubr.f32.gmra.mrb[0].mxu0 %v846
      %v941 = vpop.f32.mrb[0].mxu0
      %v942 = vadd.f32 0.0, %v941
      %v943 = vpop.f32.mrb[0].mxu0
      %944 = vmatprep.mubr.f32.mxu0 0.0
      %945 = vmatmul.mubr.f32.gmra.mrb[0].mxu0 %v849
      %v946 = vpop.f32.mrb[0].mxu0
      %v947 = vadd.f32 0.0, %v946
      %v948 = vpop.f32.mrb[0].mxu0
      %949 = vmatprep.mubr.f32.mxu0 0.0
      %950 = vmatmul.mubr.f32.gmra.mrb[0].mxu0 %v852
      %v951 = vpop.f32.mrb[0].mxu0
      %v952 = vadd.f32 0.0, %v951
      %v953 = vpop.f32.mrb[0].mxu0
      %954 = vmatprep.mubr.f32.mxu0 0.0
      %955 = vmatmul.mubr.f32.gmra.mrb[0].mxu0 %v855
      %v956 = vpop.f32.mrb[0].mxu0
      %v957 = vadd.f32 0.0, %v956
      %v958 = vpop.f32.mrb[0].mxu0
      %959 = vmatprep.mubr.f32.mxu0 0.0
      %960 = vmatmul.mubr.f32.gmra.mrb[0].mxu0 %v858
      %v961 = vpop.f32.mrb[0].mxu0
      %v962 = vadd.f32 0.0, %v961
      %v963 = vpop.f32.mrb[0].mxu0
      %964 = vdwg.mxu0
      %v965 = vadd.f32 %v820, %v927
      %v966 = vadd.f32 %v821, %v932
      %v967 = vadd.f32 %v822, %v937
      %v968 = vadd.f32 %v823, %v942
      %v969 = vadd.f32 %v824, %v947
      %v970 = vadd.f32 %v825, %v952
      %v971 = vadd.f32 %v826, %v957
      %v972 = vadd.f32 %v827, %v962
      %vm973 = vcmask 64512
      %974 = vst.msk [vmem:[%s292] sm:$0xff] %vm973, %v965
      %975 = vst.msk [vmem:[%s292 + $0x8] sm:$0xff] %vm973, %v966
      %976 = vst.msk [vmem:[%s292 + $0x10] sm:$0xff] %vm973, %v967
      %977 = vst.msk [vmem:[%s292 + $0x18] sm:$0xff] %vm973, %v968
      %978 = vst.msk [vmem:[%s292 + $0x20] sm:$0xff] %vm973, %v969
      %979 = vst.msk [vmem:[%s292 + $0x28] sm:$0xff] %vm973, %v970
      %980 = vst.msk [vmem:[%s292 + $0x30] sm:$0xff] %vm973, %v971
      %981 = vst.msk [vmem:[%s292 + $0x38] sm:$0xff] %vm973, %v972
      %982 = vst.msk [vmem:[%s301] sm:$0xff] %vm973, 0.0
      %v983 = vsel %vm973, %v965, 0.0
      %v984 = vsel %vm973, %v966, 0.0
      %v985 = vadd.f32 %v983, %v984
      %v986 = vsel %vm973, %v967, 0.0
      %v987 = vadd.f32 %v985, %v986
      %v988 = vsel %vm973, %v968, 0.0
      %v989 = vadd.f32 %v987, %v988
      %v990 = vsel %vm973, %v969, 0.0
      %v991 = vadd.f32 %v989, %v990
      %v992 = vsel %vm973, %v970, 0.0
      %v993 = vadd.f32 %v991, %v992
      %v994 = vsel %vm973, %v971, 0.0
      %v995 = vadd.f32 %v993, %v994
      %v996 = vsel %vm973, %v972, 0.0
      %v997 = vadd.f32 %v995, %v996
      %v998 = vrot.slane %v997, 4
      %v999 = vadd.f32 %v997, %v998
      %v1000 = vrot.slane %v999, 2
      %v1001 = vadd.f32 %v999, %v1000
      %v1002 = vrot.slane %v1001, 1
      %v1003 = vadd.f32 %v1001, %v1002
      %vm1004 = vcmask 57344
      %1005 = vst.msk [vmem:[%s301] sm:$0x1] %vm1004, %v1003
      %v1006 = vmul.f32 %v965, %v965
      %v1007 = vmul.f32 %v966, %v966
      %v1008 = vmul.f32 %v967, %v967
      %v1009 = vmul.f32 %v968, %v968
      %v1010 = vmul.f32 %v969, %v969
      %v1011 = vmul.f32 %v970, %v970
      %v1012 = vmul.f32 %v971, %v971
      %v1013 = vmul.f32 %v972, %v972
      %v1014 = vsel %vm973, %v1006, 0.0
      %v1015 = vsel %vm973, %v1007, 0.0
      %v1016 = vadd.f32 %v1014, %v1015
      %v1017 = vsel %vm973, %v1008, 0.0
      %v1018 = vadd.f32 %v1016, %v1017
      %v1019 = vsel %vm973, %v1009, 0.0
      %v1020 = vadd.f32 %v1018, %v1019
      %v1021 = vsel %vm973, %v1010, 0.0
      %v1022 = vadd.f32 %v1020, %v1021
      %v1023 = vsel %vm973, %v1011, 0.0
      %v1024 = vadd.f32 %v1022, %v1023
      %v1025 = vsel %vm973, %v1012, 0.0
      %v1026 = vadd.f32 %v1024, %v1025
      %v1027 = vsel %vm973, %v1013, 0.0
      %v1028 = vadd.f32 %v1026, %v1027
      %v1029 = vrot.slane %v1028, 4
      %v1030 = vadd.f32 %v1028, %v1029
      %v1031 = vrot.slane %v1030, 2
      %v1032 = vadd.f32 %v1030, %v1031
      %v1033 = vrot.slane %v1032, 1
      %v1034 = vadd.f32 %v1032, %v1033
      %1035 = vst.msk [vmem:[%s301 + $0x1] sm:$0x1] %vm1004, %v1034
      %v1036 = vld [vmem:[%s392 + $0x1] sm:$0xff]
      %v1037 = vld [vmem:[%s392 + $0x11] sm:$0xff]
      %v1038 = vld [vmem:[%s392 + $0x21] sm:$0xff]
      %v1039 = vld [vmem:[%s392 + $0x31] sm:$0xff]
      %v1040 = vld [vmem:[%s392 + $0x41] sm:$0xff]
      %v1041 = vld [vmem:[%s392 + $0x51] sm:$0xff]
      %v1042 = vld [vmem:[%s392 + $0x61] sm:$0xff]
      %v1043 = vld [vmem:[%s392 + $0x71] sm:$0xff]
      %v1044 = vld [vmem:[%s4] sm:$0xf]
      %vm1045 = vcmask 31744
      %v1047 = vsel %vm1045, %v1036, 0
      %v1050 = vsel %vm1045, %v1037, 0
      %v1053 = vsel %vm1045, %v1038, 0
      %v1056 = vsel %vm1045, %v1039, 0
      %v1059 = vsel %vm1045, %v1040, 0
      %v1062 = vsel %vm1045, %v1041, 0
      %v1065 = vsel %vm1045, %v1042, 0
      %v1068 = vsel %vm1045, %v1043, 0
      %vm1070 = vcmask 1043456
      %v1072 = vsel %vm1070, %v1044, 0
      %1074 = vmatprep.subr.mxu0 0.0
      %1075 = vmatpush1.msra.mxu0 %v1072
      %1076 = vmatprep.subr.mxu0 0.0
      %1077 = vmatpush1.msra.mxu0 0.0
      %1078 = vmatprep.subr.mxu0 0.0
      %1079 = vmatpush1.msra.mxu0 0.0
      %1080 = vmatprep.subr.mxu0 0.0
      %1081 = vmatpush1.msra.mxu0 0.0
      %1082 = vmatprep.subr.mxu0 0.0
      %1083 = vmatpush1.msra.mxu0 0.0
      %1084 = vmatprep.subr.mxu0 0.0
      %1085 = vmatpush1.msra.mxu0 0.0
      %1086 = vmatprep.subr.mxu0 0.0
      %1087 = vmatpush1.msra.mxu0 0.0
      %1088 = vmatprep.subr.mxu0 0.0
      %1089 = vmatpush1.msra.mxu0 0.0
      %1090 = vmatprep.subr.mxu0 0.0
      %1091 = vmatpush1.msra.mxu0 0.0
      %1092 = vmatprep.subr.mxu0 0.0
      %1093 = vmatpush1.msra.mxu0 0.0
      %1094 = vmatprep.subr.mxu0 0.0
      %1095 = vmatpush1.msra.mxu0 0.0
      %1096 = vmatprep.subr.mxu0 0.0
      %1097 = vmatpush1.msra.mxu0 0.0
      %1098 = vmatprep.subr.mxu0 0.0
      %1099 = vmatpush1.msra.mxu0 0.0
      %1100 = vmatprep.subr.mxu0 0.0
      %1101 = vmatpush1.msra.mxu0 0.0
      %1102 = vmatprep.subr.mxu0 0.0
      %1103 = vmatpush1.msra.mxu0 0.0
      %1104 = vmatprep.subr.mxu0 0.0
      %1105 = vmatpush1.msra.mxu0 0.0
      %1106 = vmatprep.subr.mxu0 0.0
      %1107 = vmatpush1.msra.mxu0 0.0
      %1108 = vmatprep.subr.mxu0 0.0
      %1109 = vmatpush1.msra.mxu0 0.0
      %1110 = vmatprep.subr.mxu0 0.0
      %1111 = vmatpush1.msra.mxu0 0.0
      %1112 = vmatprep.subr.mxu0 0.0
      %1113 = vmatpush1.msra.mxu0 0.0
      %1114 = vmatprep.subr.mxu0 0.0
      %1115 = vmatpush1.msra.mxu0 0.0
      %1116 = vmatprep.subr.mxu0 0.0
      %1117 = vmatpush1.msra.mxu0 0.0
      %1118 = vmatprep.subr.mxu0 0.0
      %1119 = vmatpush1.msra.mxu0 0.0
      %1120 = vmatprep.subr.mxu0 0.0
      %1121 = vmatpush1.msra.mxu0 0.0
      %1122 = vmatprep.subr.mxu0 0.0
      %1123 = vmatpush1.msra.mxu0 0.0
      %1124 = vmatprep.subr.mxu0 0.0
      %1125 = vmatpush1.msra.mxu0 0.0
      %1126 = vmatprep.subr.mxu0 0.0
      %1127 = vmatpush1.msra.mxu0 0.0
      %1128 = vmatprep.subr.mxu0 0.0
      %1129 = vmatpush1.msra.mxu0 0.0
      %1130 = vmatprep.subr.mxu0 0.0
      %1131 = vmatpush1.msra.mxu0 0.0
      %1132 = vmatprep.subr.mxu0 0.0
      %1133 = vmatpush1.msra.mxu0 0.0
      %1134 = vmatprep.subr.mxu0 0.0
      %1135 = vmatpush1.msra.mxu0 0.0
      %1136 = vmatprep.subr.mxu0 0.0
      %1137 = vmatpush1.msra.mxu0 0.0
      %1138 = vmatprep.mubr.f32.mxu0 0.0
      %1139 = vmatmul.mubr.f32.gmra.mrb[0].mxu0 %v1047
      %v1140 = vpop.f32.mrb[0].mxu0
      %v1141 = vadd.f32 0.0, %v1140
      %v1142 = vpop.f32.mrb[0].mxu0
      %1143 = vmatprep.mubr.f32.mxu0 0.0
      %1144 = vmatmul.mubr.f32.gmra.mrb[0].mxu0 %v1050
      %v1145 = vpop.f32.mrb[0].mxu0
      %v1146 = vadd.f32 0.0, %v1145
      %v1147 = vpop.f32.mrb[0].mxu0
      %1148 = vmatprep.mubr.f32.mxu0 0.0
      %1149 = vmatmul.mubr.f32.gmra.mrb[0].mxu0 %v1053
      %v1150 = vpop.f32.mrb[0].mxu0
      %v1151 = vadd.f32 0.0, %v1150
      %v1152 = vpop.f32.mrb[0].mxu0
      %1153 = vmatprep.mubr.f32.mxu0 0.0
      %1154 = vmatmul.mubr.f32.gmra.mrb[0].mxu0 %v1056
      %v1155 = vpop.f32.mrb[0].mxu0
      %v1156 = vadd.f32 0.0, %v1155
      %v1157 = vpop.f32.mrb[0].mxu0
      %1158 = vmatprep.mubr.f32.mxu0 0.0
      %1159 = vmatmul.mubr.f32.gmra.mrb[0].mxu0 %v1059
      %v1160 = vpop.f32.mrb[0].mxu0
      %v1161 = vadd.f32 0.0, %v1160
      %v1162 = vpop.f32.mrb[0].mxu0
      %1163 = vmatprep.mubr.f32.mxu0 0.0
      %1164 = vmatmul.mubr.f32.gmra.mrb[0].mxu0 %v1062
      %v1165 = vpop.f32.mrb[0].mxu0
      %v1166 = vadd.f32 0.0, %v1165
      %v1167 = vpop.f32.mrb[0].mxu0
      %1168 = vmatprep.mubr.f32.mxu0 0.0
      %1169 = vmatmul.mubr.f32.gmra.mrb[0].mxu0 %v1065
      %v1170 = vpop.f32.mrb[0].mxu0
      %v1171 = vadd.f32 0.0, %v1170
      %v1172 = vpop.f32.mrb[0].mxu0
      %1173 = vmatprep.mubr.f32.mxu0 0.0
      %1174 = vmatmul.mubr.f32.gmra.mrb[0].mxu0 %v1068
      %v1175 = vpop.f32.mrb[0].mxu0
      %v1176 = vadd.f32 0.0, %v1175
      %v1177 = vpop.f32.mrb[0].mxu0
      %1178 = vdwg.mxu0
      %1179 = vst.msk [vmem:[%s297] sm:$0xff] %vm973, %v1141
      %1180 = vst.msk [vmem:[%s297 + $0x8] sm:$0xff] %vm973, %v1146
      %1181 = vst.msk [vmem:[%s297 + $0x10] sm:$0xff] %vm973, %v1151
      %1182 = vst.msk [vmem:[%s297 + $0x18] sm:$0xff] %vm973, %v1156
      %1183 = vst.msk [vmem:[%s297 + $0x20] sm:$0xff] %vm973, %v1161
      %1184 = vst.msk [vmem:[%s297 + $0x28] sm:$0xff] %vm973, %v1166
      %1185 = vst.msk [vmem:[%s297 + $0x30] sm:$0xff] %vm973, %v1171
      %1186 = vst.msk [vmem:[%s297 + $0x38] sm:$0xff] %vm973, %v1176
      %p1187 = scmp.lt.s32.totalorder %s19, 1
      %s1188 = scalar_select %p1187, %s19, 1
      %s1189 = smul.addr %s1188, 8
      %s1190 = smul.addr %s1189, 8
      %s1191 = scalar_lea.vmem %s5, %s1190
      %p1192 = scmp.lt.s32.totalorder %s19, 1
      %s1193 = scalar_select %p1192, %s19, 1
      %s1194 = smul.addr %s1193, 8
      %s1195 = smul.addr %s1194, 8
      %s1196 = scalar_lea.vmem %s6, %s1195
      %p1197 = scmp.lt.s32.totalorder %s19, 1
      %s1198 = scalar_select %p1197, %s19, 1
      %s1199 = smul.addr %s1198, 8
      %s1200 = scalar_lea.vmem %s7, %s1199
      // Predicated region
      $region41: #{preact_block_forward.4} parent=39 // pred_check
        %p1201 = pneg %p147
      $region42: #{preact_block_forward.4} parent=39 // pred_check_branch
        %1203 = sbr.rel (%p1201) target = $region44
      $region43: #{preact_block_forward.4} parent=39 // pred_region
        _
      $region44: #{preact_block_forward.4} parent=39 // pred_fallthru
        _
      // Predicated region
      $region45: #{preact_block_forward.4} parent=39 // pred_check
        %p1204 = pneg %p173
      $region46: #{preact_block_forward.4} parent=39 // pred_check_branch
        %1206 = sbr.rel (%p1204) target = $region48
      $region47: #{preact_block_forward.4} parent=39 // pred_region
        _
      $region48: #{preact_block_forward.4} parent=39 // pred_fallthru
        _
      // Predicated region
      $region49: #{preact_block_forward.4} parent=39 // pred_check
        %p1207 = pneg %p199
      $region50: #{preact_block_forward.4} parent=39 // pred_check_branch
        %1209 = sbr.rel (%p1207) target = $region52
      $region51: #{preact_block_forward.4} parent=39 // pred_region
        _
      $region52: #{preact_block_forward.4} parent=39 // pred_fallthru
        _
    $region40: #{preact_block_forward.4} parent=5 // pred_fallthru
      _
    %p1210 = scmp.le.s32.totalorder 2, %s14
    // Predicated region
    $region53: #{preact_block_forward.4} parent=5 // pred_check
      %p1211 = pneg %p1210
    $region54: #{preact_block_forward.4} parent=5 // pred_check_branch
      %1213 = sbr.rel (%p1211) target = $region56
    $region55: #{preact_block_forward.4} parent=5 // pred_region
      %s1214 = ssub.s32 %s14, 2
      // Predicated region
      $region57: #{preact_block_forward.4} parent=55 // pred_check
        %p1215 = pneg %p153
      $region58: #{preact_block_forward.4} parent=55 // pred_check_branch
        %1217 = sbr.rel (%p1215) target = $region60
      $region59: #{preact_block_forward.4} parent=55 // pred_region
        %p1218 = scmp.lt.s32.totalorder %s20, 1
        %s1219 = scalar_select %p1218, %s20, 1
        %s1220 = smul.addr %s1219, 8
        %s1221 = smul.addr %s1220, 8
        %s1222 = scalar_lea.vmem %s5, %s1221
      $region60: #{preact_block_forward.4} parent=55 // pred_fallthru
        _
      // Predicated region
      $region61: #{preact_block_forward.4} parent=55 // pred_check
        %p1223 = pneg %p179
      $region62: #{preact_block_forward.4} parent=55 // pred_check_branch
        %1225 = sbr.rel (%p1223) target = $region64
      $region63: #{preact_block_forward.4} parent=55 // pred_region
        %p1226 = scmp.lt.s32.totalorder %s20, 1
        %s1227 = scalar_select %p1226, %s20, 1
        %s1228 = smul.addr %s1227, 8
        %s1229 = smul.addr %s1228, 8
        %s1230 = scalar_lea.vmem %s6, %s1229
      $region64: #{preact_block_forward.4} parent=55 // pred_fallthru
        _
      // Predicated region
      $region65: #{preact_block_forward.4} parent=55 // pred_check
        %p1231 = pneg %p205
      $region66: #{preact_block_forward.4} parent=55 // pred_check_branch
        %1233 = sbr.rel (%p1231) target = $region68
      $region67: #{preact_block_forward.4} parent=55 // pred_region
        %p1234 = scmp.lt.s32.totalorder %s20, 1
        %s1235 = scalar_select %p1234, %s20, 1
        %s1236 = smul.addr %s1235, 8
        %s1237 = scalar_lea.vmem %s7, %s1236
      $region68: #{preact_block_forward.4} parent=55 // pred_fallthru
        _
    $region56: #{preact_block_forward.4} parent=5 // pred_fallthru
      _
  $region6: #{preact_block_forward.4} parent=0 // loop_footer
    %s18 = sadd.s32 1, %s14
  $region7: #{preact_block_forward.4} parent=0 // loop_footer_branch
    %13 = sbr.rel target = $region3
  $region8: #{preact_block_forward.4} parent=0 // loop_exit
    _

// kernel: preact_block_forward.5
$region0: #{preact_block_forward.5}
  #allocation0 [shape = 'u32[]', space=smem, size = 0x4, offset = 0x4, fixed_abs, tag = 'smem constant byte address 0x4 - core index']
  #allocation1 [shape = 'u32[144,128]{1,0:T(1,128)}', space=vmem, size = 0x12000, scoped, tag = 'internal scratch']
  #allocation2 [shape = 'f32[10,10,8]{2,1,0:T(8,128)}', space=vmem, size = 0x14000, scoped, tag = 'scratch operand']
  %s0 = inlined_call_operand.vmem [shape: f32[2,8,8,8], index: 0, kind: input, shape index: {}]
  %s1 = inlined_call_operand.vmem [shape: f32[1,1,8], index: 1, kind: input, shape index: {}]
  %s2 = inlined_call_operand.vmem [shape: f32[1,1,8], index: 2, kind: input, shape index: {}]
  %s3 = inlined_call_operand.vmem [shape: f32[3,3,8,8], index: 3, kind: input, shape index: {}]
  %s4 = inlined_call_operand.vmem [shape: f32[2,8,8,8], index: 4, kind: input, shape index: {}, may-alias: {4,5}]
  %s5 = inlined_call_operand.vmem [shape: f32[2,8,8,8], index: 5, kind: output, shape index: {}, may-alias: {4,5}]
  %s6 = sld [smem:[#allocation0]]
  $region53: #{preact_block_forward.5} parent=0
    _
  %s8 = ssub.s32 1, %s6
  %s9 = scalar_select 0, %s8, %s6
  loop: start=0, step=1, limit=4
  $region2: #{preact_block_forward.5} parent=0 // loop_pre_header
    _
  $region3: #{preact_block_forward.5} parent=0 // loop_header
    %s11 = sphi 0, %s15
    %p12 = scmp.ge.s32.totalorder %s11, 4
    %s21 = sphi 0, %s23
    %s24 = sphi 0, %s21
    %s25 = sphi 0, %s24
    %s41 = sphi 0, %s25
    %s45 = sphi 0, %s45
    %s47 = sphi 0, %s45
    %s48 = sphi 0, %s47
    %s62 = sphi 0, %s48
    %s66 = sphi 0, %s66
    %s68 = sphi 0, %s66
    %s69 = sphi 0, %s68
    %s83 = sphi 0, %s69
    %s87 = sphi 0, %s87
    %s89 = sphi 0, %s87
    %s90 = sphi 0, %s89
    %s104 = sphi 0, %s90
    %s110 = sphi 0, %s112
    %s113 = sphi 0, %s110
    %s114 = sphi 0, %s113
    %s130 = sphi 0, %s114
    %s136 = sphi 0, %s138
    %s139 = sphi 0, %s136
    %s140 = sphi 0, %s139
    %s156 = sphi 0, %s140
  $region4: #{preact_block_forward.5} parent=0 // loop_header_branch
    %14 = sbr.rel (%p12) target = $region8
  $region5: #{preact_block_forward.5} parent=0 // loop_body
    %s16 = ssub.s32 %s11, 1
    %s17 = ssub.s32 %s11, 2
    %s18 = sadd.s32 %s11, 1
    %s19 = ssub.s32 %s11, %s18
    %p20 = scmp.eq.s32.totalorder %s19, 0
    %s22 = sadd.s32 %s21, 1
    %s23 = scalar_select %p20, %s21, %s22
    %p26 = pneg %p20
    %p27 = scmp.eq.s32.totalorder %s11, 1
    %p28 = por %p26, %p27
    %p29 = scmp.ne.s32.totalorder %s21, %s24
    %p30 = scmp.eq.s32.totalorder %s11, 0
    %p31 = por %p29, %p30
    %p32 = scmp.ne.s32.totalorder %s21, %s24
    %p33 = scmp.eq.s32.totalorder %s16, 1
    %p34 = por %p32, %p33
    %p35 = scmp.ne.s32.totalorder %s24, %s25
    %p36 = scmp.eq.s32.totalorder %s16, 0
    %p37 = por %p35, %p36
    %p38 = scmp.ne.s32.totalorder %s24, %s25
    %p39 = scmp.eq.s32.totalorder %s17, 1
    %p40 = por %p38, %p39
    %p42 = scmp.ne.s32.totalorder %s25, %s41
    %p43 = scmp.eq.s32.totalorder %s17, 0
    %p44 = por %p42, %p43
    %s46 = sadd.s32 %s45, 1
    %p49 = scmp.eq.s32.totalorder %s11, 1
    %p50 = scmp.ne.s32.totalorder %s45, %s47
    %p51 = scmp.eq.s32.totalorder %s11, 0
    %p52 = por %p50, %p51
    %p53 = scmp.ne.s32.totalorder %s45, %s47
    %p54 = scmp.eq.s32.totalorder %s16, 1
    %p55 = por %p53, %p54
    %p56 = scmp.ne.s32.totalorder %s47, %s48
    %p57 = scmp.eq.s32.totalorder %s16, 0
    %p58 = por %p56, %p57
    %p59 = scmp.ne.s32.totalorder %s47, %s48
    %p60 = scmp.eq.s32.totalorder %s17, 1
    %p61 = por %p59, %p60
    %p63 = scmp.ne.s32.totalorder %s48, %s62
    %p64 = scmp.eq.s32.totalorder %s17, 0
    %p65 = por %p63, %p64
    %s67 = sadd.s32 %s66, 1
    %p70 = scmp.eq.s32.totalorder %s11, 1
    %p71 = scmp.ne.s32.totalorder %s66, %s68
    %p72 = scmp.eq.s32.totalorder %s11, 0
    %p73 = por %p71, %p72
    %p74 = scmp.ne.s32.totalorder %s66, %s68
    %p75 = scmp.eq.s32.totalorder %s16, 1
    %p76 = por %p74, %p75
    %p77 = scmp.ne.s32.totalorder %s68, %s69
    %p78 = scmp.eq.s32.totalorder %s16, 0
    %p79 = por %p77, %p78
    %p80 = scmp.ne.s32.totalorder %s68, %s69
    %p81 = scmp.eq.s32.totalorder %s17, 1
    %p82 = por %p80, %p81
    %p84 = scmp.ne.s32.totalorder %s69, %s83
    %p85 = scmp.eq.s32.totalorder %s17, 0
    %p86 = por %p84, %p85
    %s88 = sadd.s32 %s87, 1
    %p91 = scmp.eq.s32.totalorder %s11, 1
    %p92 = scmp.ne.s32.totalorder %s87, %s89
    %p93 = scmp.eq.s32.totalorder %s11, 0
    %p94 = por %p92, %p93
    %p95 = scmp.ne.s32.totalorder %s87, %s89
    %p96 = scmp.eq.s32.totalorder %s16, 1
    %p97 = por %p95, %p96
    %p98 = scmp.ne.s32.totalorder %s89, %s90
    %p99 = scmp.eq.s32.totalorder %s16, 0
    %p100 = por %p98, %p99
    %p101 = scmp.ne.s32.totalorder %s89, %s90
    %p102 = scmp.eq.s32.totalorder %s17, 1
    %p103 = por %p101, %p102
    %p105 = scmp.ne.s32.totalorder %s90, %s104
    %p106 = scmp.eq.s32.totalorder %s17, 0
    %p107 = por %p105, %p106
    %s108 = ssub.s32 %s11, %s18
    %p109 = scmp.eq.s32.totalorder %s108, 0
    %s111 = sadd.s32 %s110, 1
    %s112 = scalar_select %p109, %s110, %s111
    %p115 = pneg %p109
    %p116 = scmp.eq.s32.totalorder %s11, 1
    %p117 = por %p115, %p116
    %p118 = scmp.ne.s32.totalorder %s110, %s113
    %p119 = scmp.eq.s32.totalorder %s11, 0
    %p120 = por %p118, %p119
    %p121 = scmp.ne.s32.totalorder %s110, %s113
    %p122 = scmp.eq.s32.totalorder %s16, 1
    %p123 = por %p121, %p122
    %p124 = scmp.ne.s32.totalorder %s113, %s114
    %p125 = scmp.eq.s32.totalorder %s16, 0
    %p126 = por %p124, %p125
    %p127 = scmp.ne.s32.totalorder %s113, %s114
    %p128 = scmp.eq.s32.totalorder %s17, 1
    %p129 = por %p127, %p128
    %p131 = scmp.ne.s32.totalorder %s114, %s130
    %p132 = scmp.eq.s32.totalorder %s17, 0
    %p133 = por %p131, %p132
    %s134 = ssub.s32 %s11, %s18
    %p135 = scmp.eq.s32.totalorder %s134, 0
    %s137 = sadd.s32 %s136, 1
    %s138 = scalar_select %p135, %s136, %s137
    %p141 = pneg %p135
    %p142 = scmp.eq.s32.totalorder %s11, 1
    %p143 = por %p141, %p142
    %p144 = scmp.ne.s32.totalorder %s136, %s139
    %p145 = scmp.eq.s32.totalorder %s11, 0
    %p146 = por %p144, %p145
    %p147 = scmp.ne.s32.totalorder %s136, %s139
    %p148 = scmp.eq.s32.totalorder %s16, 1
    %p149 = por %p147, %p148
    %p150 = scmp.ne.s32.totalorder %s139, %s140
    %p151 = scmp.eq.s32.totalorder %s16, 0
    %p152 = por %p150, %p151
    %p153 = scmp.ne.s32.totalorder %s139, %s140
    %p154 = scmp.eq.s32.totalorder %s17, 1
    %p155 = por %p153, %p154
    %p157 = scmp.ne.s32.totalorder %s140, %s156
    %p158 = scmp.eq.s32.totalorder %s17, 0
    %p159 = por %p157, %p158
    %p160 = scmp.le.s32.totalorder 1, %s11
    %p161 = scmp.lt.s32.totalorder %s11, 3
    %p162 = pnand %p160, %p161
    %p163 = pneg %p162
    // Predicated region
    $region9: #{preact_block_forward.5} parent=5 // pred_check
      _
    $region10: #{preact_block_forward.5} parent=5 // pred_check_branch
      %165 = sbr.rel (%p162) target = $region12
    $region11: #{preact_block_forward.5} parent=5 // pred_region
      %s166 = ssub.s32 %s11, 1
      // Predicated region
      $region13: #{preact_block_forward.5} parent=11 // pred_check
        %p167 = pneg %p58
      $region14: #{preact_block_forward.5} parent=11 // pred_check_branch
        %169 = sbr.rel (%p167) target = $region16
      $region15: #{preact_block_forward.5} parent=11 // pred_region
        _
      $region16: #{preact_block_forward.5} parent=11 // pred_fallthru
        _
      // Predicated region
      $region17: #{preact_block_forward.5} parent=11 // pred_check
        %p170 = pneg %p79
      $region18: #{preact_block_forward.5} parent=11 // pred_check_branch
        %172 = sbr.rel (%p170) target = $region20
      $region19: #{preact_block_forward.5} parent=11 // pred_region
        _
      $region20: #{preact_block_forward.5} parent=11 // pred_fallthru
        _
      // Predicated region
      $region21: #{preact_block_forward.5} parent=11 // pred_check
        %p173 = pneg %p100
      $region22: #{preact_block_forward.5} parent=11 // pred_check_branch
        %175 = sbr.rel (%p173) target = $region24
      $region23: #{preact_block_forward.5} parent=11 // pred_region
        _
      $region24: #{preact_block_forward.5} parent=11 // pred_fallthru
        _
    $region12: #{preact_block_forward.5} parent=5 // pred_fallthru
      _
    %p176 = scmp.lt.s32.totalorder %s11, 2
    // Predicated region
    $region25: #{preact_block_forward.5} parent=5 // pred_check
      %p177 = pneg %p176
    $region26: #{preact_block_forward.5} parent=5 // pred_check_branch
      %179 = sbr.rel (%p177) target = $region28
    $region27: #{preact_block_forward.5} parent=5 // pred_region
      // Predicated region
      $region29: #{preact_block_forward.5} parent=27 // pred_check
        %p180 = pneg %p31
      $region30: #{preact_block_forward.5} parent=27 // pred_check_branch
        %182 = sbr.rel (%p180) target = $region32
      $region31: #{preact_block_forward.5} parent=27 // pred_region
        %p183 = scmp.lt.s32.totalorder %s11, 1
        %s184 = scalar_select %p183, %s11, 1
        %s185 = smul.addr %s184, 8
        %s186 = smul.addr %s185, 8
        %s187 = scalar_lea.vmem %s0, %s186
      $region32: #{preact_block_forward.5} parent=27 // pred_fallthru
        _
      // Predicated region
      $region33: #{preact_block_forward.5} parent=27 // pred_check
        %p188 = pneg %p120
      $region34: #{preact_block_forward.5} parent=27 // pred_check_branch
        %190 = sbr.rel (%p188) target = $region36
      $region35: #{preact_block_forward.5} parent=27 // pred_region
        %p191 = scmp.lt.s32.totalorder %s11, 1
        %s192 = scalar_select %p191, %s11, 1
        %s193 = smul.addr %s192, 8
        %s194 = smul.addr %s193, 8
        %s195 = scalar_lea.vmem %s4, %s194
      $region36: #{preact_block_forward.5} parent=27 // pred_fallthru
        _
    $region28: #{preact_block_forward.5} parent=5 // pred_fallthru
      _
    %p196 = scmp.le.s32.totalorder 1, %s11
    %p197 = scmp.lt.s32.totalorder %s11, 3
    %p198 = pnand %p196, %p197
    %p199 = pneg %p198
    // Predicated region
    $region37: #{preact_block_forward.5} parent=5 // pred_check
      _
    $region38: #{preact_block_forward.5} parent=5 // pred_check_branch
      %201 = sbr.rel (%p198) target = $region40
    $region39: #{preact_block_forward.5} parent=5 // pred_region
      %s202 = ssub.s32 %s11, 1
      %p203 = scmp.lt.s32.totalorder %s16, 1
      %s204 = scalar_select %p203, %s16, 1
      %s205 = smul.addr %s204, 8
      %s206 = smul.addr %s205, 8
      %s207 = scalar_lea.vmem %s0, %s206
      %p208 = pneg %p37
      %p209 = pneg %p34
      %p210 = pneg %p58
      %p211 = pneg %p55
      %p212 = pneg %p79
      %p213 = pneg %p76
      %p214 = pneg %p100
      %p215 = pneg %p97
      %p216 = scmp.lt.s32.totalorder %s16, 1
      %s217 = scalar_select %p216, %s16, 1
      %s218 = smul.addr %s217, 8
      %s219 = smul.addr %s218, 8
      %s220 = scalar_lea.vmem %s4, %s219
      %p221 = pneg %p126
      %p222 = pneg %p123
      %p223 = pneg %p152
      %p224 = pneg %p149
      %p225 = scmp.lt.s32.totalorder %s16, 1
      %s226 = scalar_select %p225, %s16, 1
      %s227 = smul.addr %s226, 8
      %s228 = smul.addr %s227, 8
      %s229 = scalar_lea.vmem %s5, %s228
      %p230 = scmp.lt.s32.totalorder %s16, 1
      %s231 = scalar_select %p230, %s16, 1
      %s232 = smul.addr %s231, 8
      %s233 = smul.addr %s232, 8
      %s234 = scalar_lea.vmem %s0, %s233
      %p235 = scmp.lt.s32.totalorder %s16, 1
      %s236 = scalar_select %p235, %s16, 1
      %s237 = smul.addr %s236, 8
      %s238 = smul.addr %s237, 8
      %s239 = scalar_lea.vmem %s4, %s238
      %p240 = scmp.lt.s32.totalorder %s16, 1
      %s241 = scalar_select %p240, %s16, 1
      %s242 = smul.addr %s241, 8
      %s243 = smul.addr %s242, 8
      %s244 = scalar_lea.vmem %s5, %s243
      %vm245 = vcmask 64512
      %246 = vst.msk [vmem:[#allocation2] sm:$0xff] %vm245, 0.0
      %vm247 = vcmask 58368
      %248 = vst.msk [vmem:[#allocation2 + $0x8] sm:$0x3] %vm247, 0.0
      %249 = vst.msk [vmem:[#allocation2 + $0x10] sm:$0xff] %vm245, 0.0
      %250 = vst.msk [vmem:[#allocation2 + $0x18] sm:$0x3] %vm247, 0.0
      %251 = vst.msk [vmem:[#allocation2 + $0x20] sm:$0xff] %vm245, 0.0
      %252 = vst.msk [vmem:[#allocation2 + $0x28] sm:$0x3] %vm247, 0.0
      %253 = vst.msk [vmem:[#allocation2 + $0x30] sm:$0xff] %vm245, 0.0
      %254 = vst.msk [vmem:[#allocation2 + $0x38] sm:$0x3] %vm247, 0.0
      %255 = vst.msk [vmem:[#allocation2 + $0x40] sm:$0xff] %vm245, 0.0
      %256 = vst.msk [vmem:[#allocation2 + $0x48] sm:$0x3] %vm247, 0.0
      %257 = vst.msk [vmem:[#allocation2 + $0x50] sm:$0xff] %vm245, 0.0
      %258 = vst.msk [vmem:[#allocation2 + $0x58] sm:$0x3] %vm247, 0.0
      %259 = vst.msk [vmem:[#allocation2 + $0x60] sm:$0xff] %vm245, 0.0
      %260 = vst.msk [vmem:[#allocation2 + $0x68] sm:$0x3] %vm247, 0.0
      %261 = vst.msk [vmem:[#allocation2 + $0x70] sm:$0xff] %vm245, 0.0
      %262 = vst.msk [vmem:[#allocation2 + $0x78] sm:$0x3] %vm247, 0.0
      %263 = vst.msk [vmem:[#allocation2 + $0x80] sm:$0xff] %vm245, 0.0
      %264 = vst.msk [vmem:[#allocation2 + $0x88] sm:$0x3] %vm247, 0.0
      %265 = vst.msk [vmem:[#allocation2 + $0x90] sm:$0xff] %vm245, 0.0
      %266 = vst.msk [vmem:[#allocation2 + $0x98] sm:$0x3] %vm247, 0.0
      %v267 = vld [vmem:[%s234] sm:$0xff]
      %v268 = vld [vmem:[%s234 + $0x8] sm:$0xff]
      %v269 = vld [vmem:[%s234 + $0x10] sm:$0xff]
      %v270 = vld [vmem:[%s234 + $0x18] sm:$0xff]
      %v271 = vld [vmem:[%s234 + $0x20] sm:$0xff]
      %v272 = vld [vmem:[%s234 + $0x28] sm:$0xff]
      %v273 = vld [vmem:[%s234 + $0x30] sm:$0xff]
      %v274 = vld [vmem:[%s234 + $0x38] sm:$0xff]
      %v275 = vld [vmem:[%s1] sm:$0x1]
      %v277 = vlaneseq
      %v278 = vshrl.u32 %v277, 7
      %v279 = vsub.s32 0, %v278
      %v280 = vrot.slane %v275, %v279
      %v282 = vmul.f32 %v267, %v280
      %v283 = vmul.f32 %v268, %v280
      %v284 = vmul.f32 %v269, %v280
      %v285 = vmul.f32 %v270, %v280
      %v286 = vmul.f32 %v271, %v280
      %v287 = vmul.f32 %v272, %v280
      %v288 = vmul.f32 %v273, %v280
      %v289 = vmul.f32 %v274, %v280
      %v290 = vld [vmem:[%s2] sm:$0x1]
      %v292 = vlaneseq
      %v293 = vshrl.u32 %v292, 7
      %v294 = vsub.s32 0, %v293
      %v295 = vrot.slane %v290, %v294
      %v297 = vadd.f32 %v282, %v295
      %v298 = vadd.f32 %v283, %v295
      %v299 = vadd.f32 %v284, %v295
      %v300 = vadd.f32 %v285, %v295
      %v301 = vadd.f32 %v286, %v295
      %v302 = vadd.f32 %v287, %v295
      %v303 = vadd.f32 %v288, %v295
      %v304 = vadd.f32 %v289, %v295
      %s305 = scalar_lea.vmem [#allocation2], 16
      %306 = vst.msk [vmem:[%s305 + $0x1] sm:$0xff] %vm245, %v297
      %307 = vst.msk [vmem:[%s305 + $0x11] sm:$0xff] %vm245, %v298
      %308 = vst.msk [vmem:[%s305 + $0x21] sm:$0xff] %vm245, %v299
      %309 = vst.msk [vmem:[%s305 + $0x31] sm:$0xff] %vm245, %v300
      %310 = vst.msk [vmem:[%s305 + $0x41] sm:$0xff] %vm245, %v301
      %311 = vst.msk [vmem:[%s305 + $0x51] sm:$0xff] %vm245, %v302
      %312 = vst.msk [vmem:[%s305 + $0x61] sm:$0xff] %vm245, %v303
      %313 = vst.msk [vmem:[%s305 + $0x71] sm:$0xff] %vm245, %v304
      %v314 = vld [vmem:[%s3] sm:$0xff]
      %v315 = vld [vmem:[%s3 + $0x8] sm:$0xff]
      %v316 = vld [vmem:[%s3 + $0x10] sm:$0xff]
      %v317 = vld [vmem:[%s3 + $0x18] sm:$0xff]
      %v318 = vld [vmem:[%s3 + $0x20] sm:$0xff]
      %v319 = vld [vmem:[%s3 + $0x28] sm:$0xff]
      %v320 = vld [vmem:[%s3 + $0x30] sm:$0xff]
      %v321 = vld [vmem:[%s3 + $0x38] sm:$0xff]
      %v322 = vld [vmem:[%s3 + $0x40] sm:$0xff]
      %v323 = vld [vmem:[#allocation2] sm:$0xff]
      %v324 = vld [vmem:[#allocation2 + $0x10] sm:$0xff]
      %v325 = vld [vmem:[#allocation2 + $0x20] sm:$0xff]
      %v326 = vld [vmem:[#allocation2 + $0x30] sm:$0xff]
      %v327 = vld [vmem:[#allocation2 + $0x40] sm:$0xff]
      %v328 = vld [vmem:[#allocation2 + $0x50] sm:$0xff]
      %v329 = vld [vmem:[#allocation2 + $0x60] sm:$0xff]
      %v330 = vld [vmem:[#allocation2 + $0x70] sm:$0xff]
      %v331 = vld [vmem:[#allocation2 + $0x1] sm:$0xff]
      %v332 = vld [vmem:[#allocation2 + $0x11] sm:$0xff]
      %v333 = vld [vmem:[#allocation2 + $0x21] sm:$0xff]
      %v334 = vld [vmem:[#allocation2 + $0x31] sm:$0xff]
      %v335 = vld [vmem:[#allocation2 + $0x41] sm:$0xff]
      %v336 = vld [vmem:[#allocation2 + $0x51] sm:$0xff]
      %v337 = vld [vmem:[#allocation2 + $0x61] sm:$0xff]
      %v338 = vld [vmem:[#allocation2 + $0x71] sm:$0xff]
      %v340 = vsel %vm245, %v331, 0
      %v343 = vsel %vm245, %v332, 0
      %v346 = vsel %vm245, %v333, 0
      %v349 = vsel %vm245, %v334, 0
      %v352 = vsel %vm245, %v335, 0
      %v355 = vsel %vm245, %v336, 0
      %v358 = vsel %vm245, %v337, 0
      %v361 = vsel %vm245, %v338, 0
      %363 = vmatprep.subr.mxu0 0.0
      %364 = vmatpush1.msra.mxu0 %v315
      %365 = vmatprep.subr.mxu0 0.0
      %366 = vmatpush1.msra.mxu0 0.0
      %367 = vmatprep.subr.mxu0 0.0
      %368 = vmatpush1.msra.mxu0 0.0
      %369 = vmatprep.subr.mxu0 0.0
      %370 = vmatpush1.msra.mxu0 0.0
      %371 = vmatprep.subr.mxu0 0.0
      %372 = vmatpush1.msra.mxu0 0.0
      %373 = vmatprep.subr.mxu0 0.0
      %374 = vmatpush1.msra.mxu0 0.0
      %375 = vmatprep.subr.mxu0 0.0
      %376 = vmatpush1.msra.mxu0 0.0
      %377 = vmatprep.subr.mxu0 0.0
      %378 = vmatpush1.msra.mxu0 0.0
      %379 = vmatprep.subr.mxu0 0.0
      %380 = vmatpush1.msra.mxu0 0.0
      %381 = vmatprep.subr.mxu0 0.0
      %382 = vmatpush1.msra.mxu0 0.0
      %383 = vmatprep.subr.mxu0 0.0
      %384 = vmatpush1.msra.mxu0 0.0
      %385 = vmatprep.subr.mxu0 0.0
      %386 = vmatpush1.msra.mxu0 0.0
      %387 = vmatprep.subr.mxu0 0.0
      %388 = vmatpush1.msra.mxu0 0.0
      %389 = vmatprep.subr.mxu0 0.0
      %390 = vmatpush1.msra.mxu0 0.0
      %391 = vmatprep.subr.mxu0 0.0
      %392 = vmatpush1.msra.mxu0 0.0
      %393 = vmatprep.subr.mxu0 0.0
      %394 = vmatpush1.msra.mxu0 0.0
      %395 = vmatprep.subr.mxu0 0.0
      %396 = vmatpush1.msra.mxu0 0.0
      %397 = vmatprep.subr.mxu0 0.0
      %398 = vmatpush1.msra.mxu0 0.0
      %399 = vmatprep.subr.mxu0 0.0
      %400 = vmatpush1.msra.mxu0 0.0
      %401 = vmatprep.subr.mxu0 0.0
      %402 = vmatpush1.msra.mxu0 0.0
      %403 = vmatprep.subr.mxu0 0.0
      %404 = vmatpush1.msra.mxu0 0.0
      %405 = vmatprep.subr.mxu0 0.0
      %406 = vmatpush1.msra.mxu0 0.0
      %407 = vmatprep.subr.mxu0 0.0
      %408 = vmatpush1.msra.mxu0 0.0
      %409 = vmatprep.subr.mxu0 0.0
      %410 = vmatpush1.msra.mxu0 0.0
      %411 = vmatprep.subr.mxu0 0.0
      %412 = vmatpush1.msra.mxu0 0.0
      %413 = vmatprep.subr.mxu0 0.0
      %414 = vmatpush1.msra.mxu0 0.0
      %415 = vmatprep.subr.mxu0 0.0
      %416 = vmatpush1.msra.mxu0 0.0
      %417 = vmatprep.subr.mxu0 0.0
      %418 = vmatpush1.msra.mxu0 0.0
      %419 = vmatprep.subr.mxu0 0.0
      %420 = vmatpush1.msra.mxu0 0.0
      %421 = vmatprep.subr.mxu0 0.0
      %422 = vmatpush1.msra.mxu0 0.0
      %423 = vmatprep.subr.mxu0 0.0
      %424 = vmatpush1.msra.mxu0 0.0
      %425 = vmatprep.subr.mxu0 0.0
      %426 = vmatpush1.msra.mxu0 0.0
      %427 = vmatprep.mubr.f32.mxu0 0.0
      %428 = vmatmul.mubr.f32.gmra.mrb[0].mxu0 %v340
      %v429 = vpop.f32.mrb[0].mxu0
      %v430 = vadd.f32 0.0, %v429
      %v431 = vpop.f32.mrb[0].mxu0
      %432 = vmatprep.mubr.f32.mxu0 0.0
      %433 = vmatmul.mubr.f32.gmra.mrb[0].mxu0 %v343
      %v434 = vpop.f32.mrb[0].mxu0
      %v435 = vadd.f32 0.0, %v434
      %v436 = vpop.f32.mrb[0].mxu0
      %437 = vmatprep.mubr.f32.mxu0 0.0
      %438 = vmatmul.mubr.f32.gmra.mrb[0].mxu0 %v346
      %v439 = vpop.f32.mrb[0].mxu0
      %v440 = vadd.f32 0.0, %v439
      %v441 = vpop.f32.mrb[0].mxu0
      %442 = vmatprep.mubr.f32.mxu0 0.0
      %443 = vmatmul.mubr.f32.gmra.mrb[0].mxu0 %v349
      %v444 = vpop.f32.mrb[0].mxu0
      %v445 = vadd.f32 0.0, %v444
      %v446 = vpop.f32.mrb[0].mxu0
      %447 = vmatprep.mubr.f32.mxu0 0.0
      %448 = vmatmul.mubr.f32.gmra.mrb[0].mxu0 %v352
      %v449 = vpop.f32.mrb[0].mxu0
      %v450 = vadd.f32 0.0, %v449
      %v451 = vpop.f32.mrb[0].mxu0
      %452 = vmatprep.mubr.f32.mxu0 0.0
      %453 = vmatmul.mubr.f32.gmra.mrb[0].mxu0 %v355
      %v454 = vpop.f32.mrb[0].mxu0
      %v455 = vadd.f32 0.0, %v454
      %v456 = vpop.f32.mrb[0].mxu0
      %457 = vmatprep.mubr.f32.mxu0 0.0
      %458 = vmatmul.mubr.f32.gmra.mrb[0].mxu0 %v358
      %v459 = vpop.f32.mrb[0].mxu0
      %v460 = vadd.f32 0.0, %v459
      %v461 = vpop.f32.mrb[0].mxu0
      %462 = vmatprep.mubr.f32.mxu0 0.0
      %463 = vmatmul.mubr.f32.gmra.mrb[0].mxu0 %v361
      %v464 = vpop.f32.mrb[0].mxu0
      %v465 = vadd.f32 0.0, %v464
      %v466 = vpop.f32.mrb[0].mxu0
      %467 = vdwg.mxu0
      %v469 = vsel %vm245, %v323, 0
      %v472 = vsel %vm245, %v324, 0
      %v475 = vsel %vm245, %v325, 0
      %v478 = vsel %vm245, %v326, 0
      %v481 = vsel %vm245, %v327, 0
      %v484 = vsel %vm245, %v328, 0
      %v487 = vsel %vm245, %v329, 0
      %v490 = vsel %vm245, %v330, 0
      %492 = vmatprep.subr.mxu0 0.0
      %493 = vmatpush1.msra.mxu0 %v314
      %494 = vmatprep.subr.mxu0 0.0
      %495 = vmatpush1.msra.mxu0 0.0
      %496 = vmatprep.subr.mxu0 0.0
      %497 = vmatpush1.msra.mxu0 0.0
      %498 = vmatprep.subr.mxu0 0.0
      %499 = vmatpush1.msra.mxu0 0.0
      %500 = vmatprep.subr.mxu0 0.0
      %501 = vmatpush1.msra.mxu0 0.0
      %502 = vmatprep.subr.mxu0 0.0
      %503 = vmatpush1.msra.mxu0 0.0
      %504 = vmatprep.subr.mxu0 0.0
      %505 = vmatpush1.msra.mxu0 0.0
      %506 = vmatprep.subr.mxu0 0.0
      %507 = vmatpush1.msra.mxu0 0.0
      %508 = vmatprep.subr.mxu0 0.0
      %509 = vmatpush1.msra.mxu0 0.0
      %510 = vmatprep.subr.mxu0 0.0
      %511 = vmatpush1.msra.mxu0 0.0
      %512 = vmatprep.subr.mxu0 0.0
      %513 = vmatpush1.msra.mxu0 0.0
      %514 = vmatprep.subr.mxu0 0.0
      %515 = vmatpush1.msra.mxu0 0.0
      %516 = vmatprep.subr.mxu0 0.0
      %517 = vmatpush1.msra.mxu0 0.0
      %518 = vmatprep.subr.mxu0 0.0
      %519 = vmatpush1.msra.mxu0 0.0
      %520 = vmatprep.subr.mxu0 0.0
      %521 = vmatpush1.msra.mxu0 0.0
      %522 = vmatprep.subr.mxu0 0.0
      %523 = vmatpush1.msra.mxu0 0.0
      %524 = vmatprep.subr.mxu0 0.0
      %525 = vmatpush1.msra.mxu0 0.0
      %526 = vmatprep.subr.mxu0 0.0
      %527 = vmatpush1.msra.mxu0 0.0
      %528 = vmatprep.subr.mxu0 0.0
      %529 = vmatpush1.msra.mxu0 0.0
      %530 = vmatprep.subr.mxu0 0.0
      %531 = vmatpush1.msra.mxu0 0.0
      %532 = vmatprep.subr.mxu0 0.0
      %533 = vmatpush1.msra.mxu0 0.0
      %534 = vmatprep.subr.mxu0 0.0
      %535 = vmatpush1.msra.mxu0 0.0
      %536 = vmatprep.subr.mxu0 0.0
      %537 = vmatpush1.msra.mxu0 0.0
      %538 = vmatprep.subr.mxu0 0.0
      %539 = vmatpush1.msra.mxu0 0.0
      %540 = vmatprep.subr.mxu0 0.0
      %541 = vmatpush1.msra.mxu0 0.0
      %542 = vmatprep.subr.mxu0 0.0
      %543 = vmatpush1.msra.mxu0 0.0
      %544 = vmatprep.subr.mxu0 0.0
      %545 = vmatpush1.msra.mxu0 0.0
      %546 = vmatprep.subr.mxu0 0.0
      %547 = vmatpush1.msra.mxu0 0.0
      %548 = vmatprep.subr.mxu0 0.0
      %549 = vmatpush1.msra.mxu0 0.0
      %550 = vmatprep.subr.mxu0 0.0
      %551 = vmatpush1.msra.mxu0 0.0
      %552 = vmatprep.subr.mxu0 0.0
      %553 = vmatpush1.msra.mxu0 0.0
      %554 = vmatprep.subr.mxu0 0.0
      %555 = vmatpush1.msra.mxu0 0.0
      %556 = vmatprep.mubr.f32.mxu0 0.0
      %557 = vmatmul.mubr.f32.gmra.mrb[0].mxu0 %v469
      %v558 = vpop.f32.mrb[0].mxu0
      %v559 = vadd.f32 %v430, %v558
      %v560 = vpop.f32.mrb[0].mxu0
      %561 = vmatprep.mubr.f32.mxu0 0.0
      %562 = vmatmul.mubr.f32.gmra.mrb[0].mxu0 %v472
      %v563 = vpop.f32.mrb[0].mxu0
      %v564 = vadd.f32 %v435, %v563
      %v565 = vpop.f32.mrb[0].mxu0
      %566 = vmatprep.mubr.f32.mxu0 0.0
      %567 = vmatmul.mubr.f32.gmra.mrb[0].mxu0 %v475
      %v568 = vpop.f32.mrb[0].mxu0
      %v569 = vadd.f32 %v440, %v568
      %v570 = vpop.f32.mrb[0].mxu0
      %571 = vmatprep.mubr.f32.mxu0 0.0
      %572 = vmatmul.mubr.f32.gmra.mrb[0].mxu0 %v478
      %v573 = vpop.f32.mrb[0].mxu0
      %v574 = vadd.f32 %v445, %v573
      %v575 = vpop.f32.mrb[0].mxu0
      %576 = vmatprep.mubr.f32.mxu0 0.0
      %577 = vmatmul.mubr.f32.gmra.mrb[0].mxu0 %v481
      %v578 = vpop.f32.mrb[0].mxu0
      %v579 = vadd.f32 %v450, %v578
      %v580 = vpop.f32.mrb[0].mxu0
      %581 = vmatprep.mubr.f32.mxu0 0.0
      %582 = vmatmul.mubr.f32.gmra.mrb[0].mxu0 %v484
      %v583 = vpop.f32.mrb[0].mxu0
      %v584 = vadd.f32 %v455, %v583
      %v585 = vpop.f32.mrb[0].mxu0
      %586 = vmatprep.mubr.f32.mxu0 0.0
      %587 = vmatmul.mubr.f32.gmra.mrb[0].mxu0 %v487
      %v588 = vpop.f32.mrb[0].mxu0
      %v589 = vadd.f32 %v460, %v588
      %v590 = vpop.f32.mrb[0].mxu0
      %591 = vmatprep.mubr.f32.mxu0 0.0
      %592 = vmatmul.mubr.f32.gmra.mrb[0].mxu0 %v490
      %v593 = vpop.f32.mrb[0].mxu0
      %v594 = vadd.f32 %v465, %v593
      %v595 = vpop.f32.mrb[0].mxu0
      %596 = vdwg.mxu0
      %v597 = vld [vmem:[#allocation2 + $0x2] sm:$0xff]
      %v598 = vld [vmem:[#allocation2 + $0x12] sm:$0xff]
      %v599 = vld [vmem:[#allocation2 + $0x22] sm:$0xff]
      %v600 = vld [vmem:[#allocation2 + $0x32] sm:$0xff]
      %v601 = vld [vmem:[#allocation2 + $0x42] sm:$0xff]
      %v602 = vld [vmem:[#allocation2 + $0x52] sm:$0xff]
      %v603 = vld [vmem:[#allocation2 + $0x62] sm:$0xff]
      %v604 = vld [vmem:[#allocation2 + $0x72] sm:$0xff]
      %v606 = vsel %vm245, %v597, 0
      %v609 = vsel %vm245, %v598, 0
      %v612 = vsel %vm245, %v599, 0
      %v615 = vsel %vm245, %v600, 0
      %v618 = vsel %vm245, %v601, 0
      %v621 = vsel %vm245, %v602, 0
      %v624 = vsel %vm245, %v603, 0
      %v627 = vsel %vm245, %v604, 0
      %629 = vmatprep.subr.mxu0 0.0
      %630 = vmatpush1.msra.mxu0 %v316
      %631 = vmatprep.subr.mxu0 0.0
      %632 = vmatpush1.msra.mxu0 0.0
      %633 = vmatprep.subr.mxu0 0.0
      %634 = vmatpush1.msra.mxu0 0.0
      %635 = vmatprep.subr.mxu0 0.0
      %636 = vmatpush1.msra.mxu0 0.0
      %637 = vmatprep.subr.mxu0 0.0
      %638 = vmatpush1.msra.mxu0 0.0
      %639 = vmatprep.subr.mxu0 0.0
      %640 = vmatpush1.msra.mxu0 0.0
      %641 = vmatprep.subr.mxu0 0.0
      %642 = vmatpush1.msra.mxu0 0.0
      %643 = vmatprep.subr.mxu0 0.0
      %644 = vmatpush1.msra.mxu0 0.0
      %645 = vmatprep.subr.mxu0 0.0
      %646 = vmatpush1.msra.mxu0 0.0
      %647 = vmatprep.subr.mxu0 0.0
      %648 = vmatpush1.msra.mxu0 0.0
      %649 = vmatprep.subr.mxu0 0.0
      %650 = vmatpush1.msra.mxu0 0.0
      %651 = vmatprep.subr.mxu0 0.0
      %652 = vmatpush1.msra.mxu0 0.0
      %653 = vmatprep.subr.mxu0 0.0
      %654 = vmatpush1.msra.mxu0 0.0
      %655 = vmatprep.subr.mxu0 0.0
      %656 = vmatpush1.msra.mxu0 0.0
      %657 = vmatprep.subr.mxu0 0.0
      %658 = vmatpush1.msra.mxu0 0.0
      %659 = vmatprep.subr.mxu0 0.0
      %660 = vmatpush1.msra.mxu0 0.0
      %661 = vmatprep.subr.mxu0 0.0
      %662 = vmatpush1.msra.mxu0 0.0
      %663 = vmatprep.subr.mxu0 0.0
      %664 = vmatpush1.msra.mxu0 0.0
      %665 = vmatprep.subr.mxu0 0.0
      %666 = vmatpush1.msra.mxu0 0.0
      %667 = vmatprep.subr.mxu0 0.0
      %668 = vmatpush1.msra.mxu0 0.0
      %669 = vmatprep.subr.mxu0 0.0
      %670 = vmatpush1.msra.mxu0 0.0
      %671 = vmatprep.subr.mxu0 0.0
      %672 = vmatpush1.msra.mxu0 0.0
      %673 = vmatprep.subr.mxu0 0.0
      %674 = vmatpush1.msra.mxu0 0.0
      %675 = vmatprep.subr.mxu0 0.0
      %676 = vmatpush1.msra.mxu0 0.0
      %677 = vmatprep.subr.mxu0 0.0
      %678 = vmatpush1.msra.mxu0 0.0
      %679 = vmatprep.subr.mxu0 0.0
      %680 = vmatpush1.msra.mxu0 0.0
      %681 = vmatprep.subr.mxu0 0.0
      %682 = vmatpush1.msra.mxu0 0.0
      %683 = vmatprep.subr.mxu0 0.0
      %684 = vmatpush1.msra.mxu0 0.0
      %685 = vmatprep.subr.mxu0 0.0
      %686 = vmatpush1.msra.mxu0 0.0
      %687 = vmatprep.subr.mxu0 0.0
      %688 = vmatpush1.msra.mxu0 0.0
      %689 = vmatprep.subr.mxu0 0.0
      %690 = vmatpush1.msra.mxu0 0.0
      %691 = vmatprep.subr.mxu0 0.0
      %692 = vmatpush1.msra.mxu0 0.0
      %693 = vmatprep.mubr.f32.mxu0 0.0
      %694 = vmatmul.mubr.f32.gmra.mrb[0].mxu0 %v606
      %v695 = vpop.f32.mrb[0].mxu0
      %v696 = vadd.f32 0.0, %v695
      %v697 = vpop.f32.mrb[0].mxu0
      %698 = vmatprep.mubr.f32.mxu0 0.0
      %699 = vmatmul.mubr.f32.gmra.mrb[0].mxu0 %v609
      %v700 = vpop.f32.mrb[0].mxu0
      %v701 = vadd.f32 0.0, %v700
      %v702 = vpop.f32.mrb[0].mxu0
      %703 = vmatprep.mubr.f32.mxu0 0.0
      %704 = vmatmul.mubr.f32.gmra.mrb[0].mxu0 %v612
      %v705 = vpop.f32.mrb[0].mxu0
      %v706 = vadd.f32 0.0, %v705
      %v707 = vpop.f32.mrb[0].mxu0
      %708 = vmatprep.mubr.f32.mxu0 0.0
      %709 = vmatmul.mubr.f32.gmra.mrb[0].mxu0 %v615
      %v710 = vpop.f32.mrb[0].mxu0
      %v711 = vadd.f32 0.0, %v710
      %v712 = vpop.f32.mrb[0].mxu0
      %713 = vmatprep.mubr.f32.mxu0 0.0
      %714 = vmatmul.mubr.f32.gmra.mrb[0].mxu0 %v618
      %v715 = vpop.f32.mrb[0].mxu0
      %v716 = vadd.f32 0.0, %v715
      %v717 = vpop.f32.mrb[0].mxu0
      %718 = vmatprep.mubr.f32.mxu0 0.0
      %719 = vmatmul.mubr.f32.gmra.mrb[0].mxu0 %v621
      %v720 = vpop.f32.mrb[0].mxu0
      %v721 = vadd.f32 0.0, %v720
      %v722 = vpop.f32.mrb[0].mxu0
      %723 = vmatprep.mubr.f32.mxu0 0.0
      %724 = vmatmul.mubr.f32.gmra.mrb[0].mxu0 %v624
      %v725 = vpop.f32.mrb[0].mxu0
      %v726 = vadd.f32 0.0, %v725
      %v727 = vpop.f32.mrb[0].mxu0
      %728 = vmatprep.mubr.f32.mxu0 0.0
      %729 = vmatmul.mubr.f32.gmra.mrb[0].mxu0 %v627
      %v730 = vpop.f32.mrb[0].mxu0
      %v731 = vadd.f32 0.0, %v730
      %v732 = vpop.f32.mrb[0].mxu0
      %733 = vdwg.mxu0
      %v734 = vadd.f32 %v559, %v696
      %v735 = vadd.f32 %v564, %v701
      %v736 = vadd.f32 %v569, %v706
      %v737 = vadd.f32 %v574, %v711
      %v738 = vadd.f32 %v579, %v716
      %v739 = vadd.f32 %v584, %v721
      %v740 = vadd.f32 %v589, %v726
      %v741 = vadd.f32 %v594, %v731
      %v742 = vld [vmem:[%s305] sm:$0xff]
      %v743 = vld [vmem:[%s305 + $0x10] sm:$0xff]
      %v744 = vld [vmem:[%s305 + $0x20] sm:$0xff]
      %v745 = vld [vmem:[%s305 + $0x30] sm:$0xff]
      %v746 = vld [vmem:[%s305 + $0x40] sm:$0xff]
      %v747 = vld [vmem:[%s305 + $0x50] sm:$0xff]
      %v748 = vld [vmem:[%s305 + $0x60] sm:$0xff]
      %v749 = vld [vmem:[%s305 + $0x70] sm:$0xff]
      %v751 = vsel %vm245, %v742, 0
      %v754 = vsel %vm245, %v743, 0
      %v757 = vsel %vm245, %v744, 0
      %v760 = vsel %vm245, %v745, 0
      %v763 = vsel %vm245, %v746, 0
      %v766 = vsel %vm245, %v747, 0
      %v769 = vsel %vm245, %v748, 0
      %v772 = vsel %vm245, %v749, 0
      %774 = vmatprep.subr.mxu0 0.0
      %775 = vmatpush1.msra.mxu0 %v317
      %776 = vmatprep.subr.mxu0 0.0
      %777 = vmatpush1.msra.mxu0 0.0
      %778 = vmatprep.subr.mxu0 0.0
      %779 = vmatpush1.msra.mxu0 0.0
      %780 = vmatprep.subr.mxu0 0.0
      %781 = vmatpush1.msra.mxu0 0.0
      %782 = vmatprep.subr.mxu0 0.0
      %783 = vmatpush1.msra.mxu0 0.0
      %784 = vmatprep.subr.mxu0 0.0
      %785 = vmatpush1.msra.mxu0 0.0
      %786 = vmatprep.subr.mxu0 0.0
      %787 = vmatpush1.msra.mxu0 0.0
      %788 = vmatprep.subr.mxu0 0.0
      %789 = vmatpush1.msra.mxu0 0.0
      %790 = vmatprep.subr.mxu0 0.0
      %791 = vmatpush1.msra.mxu0 0.0
      %792 = vmatprep.subr.mxu0 0.0
      %793 = vmatpush1.msra.mxu0 0.0
      %794 = vmatprep.subr.mxu0 0.0
      %795 = vmatpush1.msra.mxu0 0.0
      %796 = vmatprep.subr.mxu0 0.0
      %797 = vmatpush1.msra.mxu0 0.0
      %798 = vmatprep.subr.mxu0 0.0
      %799 = vmatpush1.msra.mxu0 0.0
      %800 = vmatprep.subr.mxu0 0.0
      %801 = vmatpush1.msra.mxu0 0.0
      %802 = vmatprep.subr.mxu0 0.0
      %803 = vmatpush1.msra.mxu0 0.0
      %804 = vmatprep.subr.mxu0 0.0
      %805 = vmatpush1.msra.mxu0 0.0
      %806 = vmatprep.subr.mxu0 0.0
      %807 = vmatpush1.msra.mxu0 0.0
      %808 = vmatprep.subr.mxu0 0.0
      %809 = vmatpush1.msra.mxu0 0.0
      %810 = vmatprep.subr.mxu0 0.0
      %811 = vmatpush1.msra.mxu0 0.0
      %812 = vmatprep.subr.mxu0 0.0
      %813 = vmatpush1.msra.mxu0 0.0
      %814 = vmatprep.subr.mxu0 0.0
      %815 = vmatpush1.msra.mxu0 0.0
      %816 = vmatprep.subr.mxu0 0.0
      %817 = vmatpush1.msra.mxu0 0.0
      %818 = vmatprep.subr.mxu0 0.0
      %819 = vmatpush1.msra.mxu0 0.0
      %820 = vmatprep.subr.mxu0 0.0
      %821 = vmatpush1.msra.mxu0 0.0
      %822 = vmatprep.subr.mxu0 0.0
      %823 = vmatpush1.msra.mxu0 0.0
      %824 = vmatprep.subr.mxu0 0.0
      %825 = vmatpush1.msra.mxu0 0.0
      %826 = vmatprep.subr.mxu0 0.0
      %827 = vmatpush1.msra.mxu0 0.0
      %828 = vmatprep.subr.mxu0 0.0
      %829 = vmatpush1.msra.mxu0 0.0
      %830 = vmatprep.subr.mxu0 0.0
      %831 = vmatpush1.msra.mxu0 0.0
      %832 = vmatprep.subr.mxu0 0.0
      %833 = vmatpush1.msra.mxu0 0.0
      %834 = vmatprep.subr.mxu0 0.0
      %835 = vmatpush1.msra.mxu0 0.0
      %836 = vmatprep.subr.mxu0 0.0
      %837 = vmatpush1.msra.mxu0 0.0
      %838 = vmatprep.mubr.f32.mxu0 0.0
      %839 = vmatmul.mubr.f32.gmra.mrb[0].mxu0 %v751
      %v840 = vpop.f32.mrb[0].mxu0
      %v841 = vadd.f32 0.0, %v840
      %v842 = vpop.f32.mrb[0].mxu0
      %843 = vmatprep.mubr.f32.mxu0 0.0
      %844 = vmatmul.mubr.f32.gmra.mrb[0].mxu0 %v754
      %v845 = vpop.f32.mrb[0].mxu0
      %v846 = vadd.f32 0.0, %v845
      %v847 = vpop.f32.mrb[0].mxu0
      %848 = vmatprep.mubr.f32.mxu0 0.0
      %849 = vmatmul.mubr.f32.gmra.mrb[0].mxu0 %v757
      %v850 = vpop.f32.mrb[0].mxu0
      %v851 = vadd.f32 0.0, %v850
      %v852 = vpop.f32.mrb[0].mxu0
      %853 = vmatprep.mubr.f32.mxu0 0.0
      %854 = vmatmul.mubr.f32.gmra.mrb[0].mxu0 %v760
      %v855 = vpop.f32.mrb[0].mxu0
      %v856 = vadd.f32 0.0, %v855
      %v857 = vpop.f32.mrb[0].mxu0
      %858 = vmatprep.mubr.f32.mxu0 0.0
      %859 = vmatmul.mubr.f32.gmra.mrb[0].mxu0 %v763
      %v860 = vpop.f32.mrb[0].mxu0
      %v861 = vadd.f32 0.0, %v860
      %v862 = vpop.f32.mrb[0].mxu0
      %863 = vmatprep.mubr.f32.mxu0 0.0
      %864 = vmatmul.mubr.f32.gmra.mrb[0].mxu0 %v766
      %v865 = vpop.f32.mrb[0].mxu0
      %v866 = vadd.f32 0.0, %v865
      %v867 = vpop.f32.mrb[0].mxu0
      %868 = vmatprep.mubr.f32.mxu0 0.0
      %869 = vmatmul.mubr.f32.gmra.mrb[0].mxu0 %v769
      %v870 = vpop.f32.mrb[0].mxu0
      %v871 = vadd.f32 0.0, %v870
      %v872 = vpop.f32.mrb[0].mxu0
      %873 = vmatprep.mubr.f32.mxu0 0.0
      %874 = vmatmul.mubr.f32.gmra.mrb[0].mxu0 %v772
      %v875 = vpop.f32.mrb[0].mxu0
      %v876 = vadd.f32 0.0, %v875
      %v877 = vpop.f32.mrb[0].mxu0
      %878 = vdwg.mxu0
      %v879 = vadd.f32 %v734, %v841
      %v880 = vadd.f32 %v735, %v846
      %v881 = vadd.f32 %v736, %v851
      %v882 = vadd.f32 %v737, %v856
      %v883 = vadd.f32 %v738, %v861
      %v884 = vadd.f32 %v739, %v866
      %v885 = vadd.f32 %v740, %v871
      %v886 = vadd.f32 %v741, %v876
      %v887 = vld [vmem:[%s305 + $0x1] sm:$0xff]
      %v888 = vld [vmem:[%s305 + $0x11] sm:$0xff]
      %v889 = vld [vmem:[%s305 + $0x21] sm:$0xff]
      %v890 = vld [vmem:[%s305 + $0x31] sm:$0xff]
      %v891 = vld [vmem:[%s305 + $0x41] sm:$0xff]
      %v892 = vld [vmem:[%s305 + $0x51] sm:$0xff]
      %v893 = vld [vmem:[%s305 + $0x61] sm:$0xff]
      %v894 = vld [vmem:[%s305 + $0x71] sm:$0xff]
      %v896 = vsel %vm245, %v887, 0
      %v899 = vsel %vm245, %v888, 0
      %v902 = vsel %vm245, %v889, 0
      %v905 = vsel %vm245, %v890, 0
      %v908 = vsel %vm245, %v891, 0
      %v911 = vsel %vm245, %v892, 0
      %v914 = vsel %vm245, %v893, 0
      %v917 = vsel %vm245, %v894, 0
      %919 = vmatprep.subr.mxu0 0.0
      %920 = vmatpush1.msra.mxu0 %v318
      %921 = vmatprep.subr.mxu0 0.0
      %922 = vmatpush1.msra.mxu0 0.0
      %923 = vmatprep.subr.mxu0 0.0
      %924 = vmatpush1.msra.mxu0 0.0
      %925 = vmatprep.subr.mxu0 0.0
      %926 = vmatpush1.msra.mxu0 0.0
      %927 = vmatprep.subr.mxu0 0.0
      %928 = vmatpush1.msra.mxu0 0.0
      %929 = vmatprep.subr.mxu0 0.0
      %930 = vmatpush1.msra.mxu0 0.0
      %931 = vmatprep.subr.mxu0 0.0
      %932 = vmatpush1.msra.mxu0 0.0
      %933 = vmatprep.subr.mxu0 0.0
      %934 = vmatpush1.msra.mxu0 0.0
      %935 = vmatprep.subr.mxu0 0.0
      %936 = vmatpush1.msra.mxu0 0.0
      %937 = vmatprep.subr.mxu0 0.0
      %938 = vmatpush1.msra.mxu0 0.0
      %939 = vmatprep.subr.mxu0 0.0
      %940 = vmatpush1.msra.mxu0 0.0
      %941 = vmatprep.subr.mxu0 0.0
      %942 = vmatpush1.msra.mxu0 0.0
      %943 = vmatprep.subr.mxu0 0.0
      %944 = vmatpush1.msra.mxu0 0.0
      %945 = vmatprep.subr.mxu0 0.0
      %946 = vmatpush1.msra.mxu0 0.0
      %947 = vmatprep.subr.mxu0 0.0
      %948 = vmatpush1.msra.mxu0 0.0
      %949 = vmatprep.subr.mxu0 0.0
      %950 = vmatpush1.msra.mxu0 0.0
      %951 = vmatprep.subr.mxu0 0.0
      %952 = vmatpush1.msra.mxu0 0.0
      %953 = vmatprep.subr.mxu0 0.0
      %954 = vmatpush1.msra.mxu0 0.0
      %955 = vmatprep.subr.mxu0 0.0
      %956 = vmatpush1.msra.mxu0 0.0
      %957 = vmatprep.subr.mxu0 0.0
      %958 = vmatpush1.msra.mxu0 0.0
      %959 = vmatprep.subr.mxu0 0.0
      %960 = vmatpush1.msra.mxu0 0.0
      %961 = vmatprep.subr.mxu0 0.0
      %962 = vmatpush1.msra.mxu0 0.0
      %963 = vmatprep.subr.mxu0 0.0
      %964 = vmatpush1.msra.mxu0 0.0
      %965 = vmatprep.subr.mxu0 0.0
      %966 = vmatpush1.msra.mxu0 0.0
      %967 = vmatprep.subr.mxu0 0.0
      %968 = vmatpush1.msra.mxu0 0.0
      %969 = vmatprep.subr.mxu0 0.0
      %970 = vmatpush1.msra.mxu0 0.0
      %971 = vmatprep.subr.mxu0 0.0
      %972 = vmatpush1.msra.mxu0 0.0
      %973 = vmatprep.subr.mxu0 0.0
      %974 = vmatpush1.msra.mxu0 0.0
      %975 = vmatprep.subr.mxu0 0.0
      %976 = vmatpush1.msra.mxu0 0.0
      %977 = vmatprep.subr.mxu0 0.0
      %978 = vmatpush1.msra.mxu0 0.0
      %979 = vmatprep.subr.mxu0 0.0
      %980 = vmatpush1.msra.mxu0 0.0
      %981 = vmatprep.subr.mxu0 0.0
      %982 = vmatpush1.msra.mxu0 0.0
      %983 = vmatprep.mubr.f32.mxu0 0.0
      %984 = vmatmul.mubr.f32.gmra.mrb[0].mxu0 %v896
      %v985 = vpop.f32.mrb[0].mxu0
      %v986 = vadd.f32 0.0, %v985
      %v987 = vpop.f32.mrb[0].mxu0
      %988 = vmatprep.mubr.f32.mxu0 0.0
      %989 = vmatmul.mubr.f32.gmra.mrb[0].mxu0 %v899
      %v990 = vpop.f32.mrb[0].mxu0
      %v991 = vadd.f32 0.0, %v990
      %v992 = vpop.f32.mrb[0].mxu0
      %993 = vmatprep.mubr.f32.mxu0 0.0
      %994 = vmatmul.mubr.f32.gmra.mrb[0].mxu0 %v902
      %v995 = vpop.f32.mrb[0].mxu0
      %v996 = vadd.f32 0.0, %v995
      %v997 = vpop.f32.mrb[0].mxu0
      %998 = vmatprep.mubr.f32.mxu0 0.0
      %999 = vmatmul.mubr.f32.gmra.mrb[0].mxu0 %v905
      %v1000 = vpop.f32.mrb[0].mxu0
      %v1001 = vadd.f32 0.0, %v1000
      %v1002 = vpop.f32.mrb[0].mxu0
      %1003 = vmatprep.mubr.f32.mxu0 0.0
      %1004 = vmatmul.mubr.f32.gmra.mrb[0].mxu0 %v908
      %v1005 = vpop.f32.mrb[0].mxu0
      %v1006 = vadd.f32 0.0, %v1005
      %v1007 = vpop.f32.mrb[0].mxu0
      %1008 = vmatprep.mubr.f32.mxu0 0.0
      %1009 = vmatmul.mubr.f32.gmra.mrb[0].mxu0 %v911
      %v1010 = vpop.f32.mrb[0].mxu0
      %v1011 = vadd.f32 0.0, %v1010
      %v1012 = vpop.f32.mrb[0].mxu0
      %1013 = vmatprep.mubr.f32.mxu0 0.0
      %1014 = vmatmul.mubr.f32.gmra.mrb[0].mxu0 %v914
      %v1015 = vpop.f32.mrb[0].mxu0
      %v1016 = vadd.f32 0.0, %v1015
      %v1017 = vpop.f32.mrb[0].mxu0
      %1018 = vmatprep.mubr.f32.mxu0 0.0
      %1019 = vmatmul.mubr.f32.gmra.mrb[0].mxu0 %v917
      %v1020 = vpop.f32.mrb[0].mxu0
      %v1021 = vadd.f32 0.0, %v1020
      %v1022 = vpop.f32.mrb[0].mxu0
      %1023 = vdwg.mxu0
      %v1024 = vadd.f32 %v879, %v986
      %v1025 = vadd.f32 %v880, %v991
      %v1026 = vadd.f32 %v881, %v996
      %v1027 = vadd.f32 %v882, %v1001
      %v1028 = vadd.f32 %v883, %v1006
      %v1029 = vadd.f32 %v884, %v1011
      %v1030 = vadd.f32 %v885, %v1016
      %v1031 = vadd.f32 %v886, %v1021
      %v1032 = vld [vmem:[%s305 + $0x2] sm:$0xff]
      %v1033 = vld [vmem:[%s305 + $0x12] sm:$0xff]
      %v1034 = vld [vmem:[%s305 + $0x22] sm:$0xff]
      %v1035 = vld [vmem:[%s305 + $0x32] sm:$0xff]
      %v1036 = vld [vmem:[%s305 + $0x42] sm:$0xff]
      %v1037 = vld [vmem:[%s305 + $0x52] sm:$0xff]
      %v1038 = vld [vmem:[%s305 + $0x62] sm:$0xff]
      %v1039 = vld [vmem:[%s305 + $0x72] sm:$0xff]
      %v1041 = vsel %vm245, %v1032, 0
      %v1044 = vsel %vm245, %v1033, 0
      %v1047 = vsel %vm245, %v1034, 0
      %v1050 = vsel %vm245, %v1035, 0
      %v1053 = vsel %vm245, %v1036, 0
      %v1056 = vsel %vm245, %v1037, 0
      %v1059 = vsel %vm245, %v1038, 0
      %v1062 = vsel %vm245, %v1039, 0
      %1064 = vmatprep.subr.mxu0 0.0
      %1065 = vmatpush1.msra.mxu0 %v319
      %1066 = vmatprep.subr.mxu0 0.0
      %1067 = vmatpush1.msra.mxu0 0.0
      %1068 = vmatprep.subr.mxu0 0.0
      %1069 = vmatpush1.msra.mxu0 0.0
      %1070 = vmatprep.subr.mxu0 0.0
      %1071 = vmatpush1.msra.mxu0 0.0
      %1072 = vmatprep.subr.mxu0 0.0
      %1073 = vmatpush1.msra.mxu0 0.0
      %1074 = vmatprep.subr.mxu0 0.0
      %1075 = vmatpush1.msra.mxu0 0.0
      %1076 = vmatprep.subr.mxu0 0.0
      %1077 = vmatpush1.msra.mxu0 0.0
      %1078 = vmatprep.subr.mxu0 0.0
      %1079 = vmatpush1.msra.mxu0 0.0
      %1080 = vmatprep.subr.mxu0 0.0
      %1081 = vmatpush1.msra.mxu0 0.0
      %1082 = vmatprep.subr.mxu0 0.0
      %1083 = vmatpush1.msra.mxu0 0.0
      %1084 = vmatprep.subr.mxu0 0.0
      %1085 = vmatpush1.msra.mxu0 0.0
      %1086 = vmatprep.subr.mxu0 0.0
      %1087 = vmatpush1.msra.mxu0 0.0
      %1088 = vmatprep.subr.mxu0 0.0
      %1089 = vmatpush1.msra.mxu0 0.0
      %1090 = vmatprep.subr.mxu0 0.0
      %1091 = vmatpush1.msra.mxu0 0.0
      %1092 = vmatprep.subr.mxu0 0.0
      %1093 = vmatpush1.msra.mxu0 0.0
      %1094 = vmatprep.subr.mxu0 0.0
      %1095 = vmatpush1.msra.mxu0 0.0
      %1096 = vmatprep.subr.mxu0 0.0
      %1097 = vmatpush1.msra.mxu0 0.0
      %1098 = vmatprep.subr.mxu0 0.0
      %1099 = vmatpush1.msra.mxu0 0.0
      %1100 = vmatprep.subr.mxu0 0.0
      %1101 = vmatpush1.msra.mxu0 0.0
      %1102 = vmatprep.subr.mxu0 0.0
      %1103 = vmatpush1.msra.mxu0 0.0
      %1104 = vmatprep.subr.mxu0 0.0
      %1105 = vmatpush1.msra.mxu0 0.0
      %1106 = vmatprep.subr.mxu0 0.0
      %1107 = vmatpush1.msra.mxu0 0.0
      %1108 = vmatprep.subr.mxu0 0.0
      %1109 = vmatpush1.msra.mxu0 0.0
      %1110 = vmatprep.subr.mxu0 0.0
      %1111 = vmatpush1.msra.mxu0 0.0
      %1112 = vmatprep.subr.mxu0 0.0
      %1113 = vmatpush1.msra.mxu0 0.0
      %1114 = vmatprep.subr.mxu0 0.0
      %1115 = vmatpush1.msra.mxu0 0.0
      %1116 = vmatprep.subr.mxu0 0.0
      %1117 = vmatpush1.msra.mxu0 0.0
      %1118 = vmatprep.subr.mxu0 0.0
      %1119 = vmatpush1.msra.mxu0 0.0
      %1120 = vmatprep.subr.mxu0 0.0
      %1121 = vmatpush1.msra.mxu0 0.0
      %1122 = vmatprep.subr.mxu0 0.0
      %1123 = vmatpush1.msra.mxu0 0.0
      %1124 = vmatprep.subr.mxu0 0.0
      %1125 = vmatpush1.msra.mxu0 0.0
      %1126 = vmatprep.subr.mxu0 0.0
      %1127 = vmatpush1.msra.mxu0 0.0
      %1128 = vmatprep.mubr.f32.mxu0 0.0
      %1129 = vmatmul.mubr.f32.gmra.mrb[0].mxu0 %v1041
      %v1130 = vpop.f32.mrb[0].mxu0
      %v1131 = vadd.f32 0.0, %v1130
      %v1132 = vpop.f32.mrb[0].mxu0
      %1133 = vmatprep.mubr.f32.mxu0 0.0
      %1134 = vmatmul.mubr.f32.gmra.mrb[0].mxu0 %v1044
      %v1135 = vpop.f32.mrb[0].mxu0
      %v1136 = vadd.f32 0.0, %v1135
      %v1137 = vpop.f32.mrb[0].mxu0
      %1138 = vmatprep.mubr.f32.mxu0 0.0
      %1139 = vmatmul.mubr.f32.gmra.mrb[0].mxu0 %v1047
      %v1140 = vpop.f32.mrb[0].mxu0
      %v1141 = vadd.f32 0.0, %v1140
      %v1142 = vpop.f32.mrb[0].mxu0
      %1143 = vmatprep.mubr.f32.mxu0 0.0
      %1144 = vmatmul.mubr.f32.gmra.mrb[0].mxu0 %v1050
      %v1145 = vpop.f32.mrb[0].mxu0
      %v1146 = vadd.f32 0.0, %v1145
      %v1147 = vpop.f32.mrb[0].mxu0
      %1148 = vmatprep.mubr.f32.mxu0 0.0
      %1149 = vmatmul.mubr.f32.gmra.mrb[0].mxu0 %v1053
      %v1150 = vpop.f32.mrb[0].mxu0
      %v1151 = vadd.f32 0.0, %v1150
      %v1152 = vpop.f32.mrb[0].mxu0
      %1153 = vmatprep.mubr.f32.mxu0 0.0
      %1154 = vmatmul.mubr.f32.gmra.mrb[0].mxu0 %v1056
      %v1155 = vpop.f32.mrb[0].mxu0
      %v1156 = vadd.f32 0.0, %v1155
      %v1157 = vpop.f32.mrb[0].mxu0
      %1158 = vmatprep.mubr.f32.mxu0 0.0
      %1159 = vmatmul.mubr.f32.gmra.mrb[0].mxu0 %v1059
      %v1160 = vpop.f32.mrb[0].mxu0
      %v1161 = vadd.f32 0.0, %v1160
      %v1162 = vpop.f32.mrb[0].mxu0
      %1163 = vmatprep.mubr.f32.mxu0 0.0
      %1164 = vmatmul.mubr.f32.gmra.mrb[0].mxu0 %v1062
      %v1165 = vpop.f32.mrb[0].mxu0
      %v1166 = vadd.f32 0.0, %v1165
      %v1167 = vpop.f32.mrb[0].mxu0
      %1168 = vdwg.mxu0
      %v1169 = vadd.f32 %v1024, %v1131
      %v1170 = vadd.f32 %v1025, %v1136
      %v1171 = vadd.f32 %v1026, %v1141
      %v1172 = vadd.f32 %v1027, %v1146
      %v1173 = vadd.f32 %v1028, %v1151
      %v1174 = vadd.f32 %v1029, %v1156
      %v1175 = vadd.f32 %v1030, %v1161
      %v1176 = vadd.f32 %v1031, %v1166
      %s1177 = scalar_lea.vmem [#allocation2], 32
      %v1178 = vld [vmem:[%s1177] sm:$0xff]
      %v1179 = vld [vmem:[%s1177 + $0x10] sm:$0xff]
      %v1180 = vld [vmem:[%s1177 + $0x20] sm:$0xff]
      %v1181 = vld [vmem:[%s1177 + $0x30] sm:$0xff]
      %v1182 = vld [vmem:[%s1177 + $0x40] sm:$0xff]
      %v1183 = vld [vmem:[%s1177 + $0x50] sm:$0xff]
      %v1184 = vld [vmem:[%s1177 + $0x60] sm:$0xff]
      %v1185 = vld [vmem:[%s1177 + $0x70] sm:$0xff]
      %v1187 = vsel %vm245, %v1178, 0
      %v1190 = vsel %vm245, %v1179, 0
      %v1193 = vsel %vm245, %v1180, 0
      %v1196 = vsel %vm245, %v1181, 0
      %v1199 = vsel %vm245, %v1182, 0
      %v1202 = vsel %vm245, %v1183, 0
      %v1205 = vsel %vm245, %v1184, 0
      %v1208 = vsel %vm245, %v1185, 0
      %1210 = vmatprep.subr.mxu0 0.0
      %1211 = vmatpush1.msra.mxu0 %v320
      %1212 = vmatprep.subr.mxu0 0.0
      %1213 = vmatpush1.msra.mxu0 0.0
      %1214 = vmatprep.subr.mxu0 0.0
      %1215 = vmatpush1.msra.mxu0 0.0
      %1216 = vmatprep.subr.mxu0 0.0
      %1217 = vmatpush1.msra.mxu0 0.0
      %1218 = vmatprep.subr.mxu0 0.0
      %1219 = vmatpush1.msra.mxu0 0.0
      %1220 = vmatprep.subr.mxu0 0.0
      %1221 = vmatpush1.msra.mxu0 0.0
      %1222 = vmatprep.subr.mxu0 0.0
      %1223 = vmatpush1.msra.mxu0 0.0
      %1224 = vmatprep.subr.mxu0 0.0
      %1225 = vmatpush1.msra.mxu0 0.0
      %1226 = vmatprep.subr.mxu0 0.0
      %1227 = vmatpush1.msra.mxu0 0.0
      %1228 = vmatprep.subr.mxu0 0.0
      %1229 = vmatpush1.msra.mxu0 0.0
      %1230 = vmatprep.subr.mxu0 0.0
      %1231 = vmatpush1.msra.mxu0 0.0
      %1232 = vmatprep.subr.mxu0 0.0
      %1233 = vmatpush1.msra.mxu0 0.0
      %1234 = vmatprep.subr.mxu0 0.0
      %1235 = vmatpush1.msra.mxu0 0.0
      %1236 = vmatprep.subr.mxu0 0.0
      %1237 = vmatpush1.msra.mxu0 0.0
      %1238 = vmatprep.subr.mxu0 0.0
      %1239 = vmatpush1.msra.mxu0 0.0
      %1240 = vmatprep.subr.mxu0 0.0
      %1241 = vmatpush1.msra.mxu0 0.0
      %1242 = vmatprep.subr.mxu0 0.0
      %1243 = vmatpush1.msra.mxu0 0.0
      %1244 = vmatprep.subr.mxu0 0.0
      %1245 = vmatpush1.msra.mxu0 0.0
      %1246 = vmatprep.subr.mxu0 0.0
      %1247 = vmatpush1.msra.mxu0 0.0
      %1248 = vmatprep.subr.mxu0 0.0
      %1249 = vmatpush1.msra.mxu0 0.0
      %1250 = vmatprep.subr.mxu0 0.0
      %1251 = vmatpush1.msra.mxu0 0.0
      %1252 = vmatprep.subr.mxu0 0.0
      %1253 = vmatpush1.msra.mxu0 0.0
      %1254 = vmatprep.subr.mxu0 0.0
      %1255 = vmatpush1.msra.mxu0 0.0
      %1256 = vmatprep.subr.mxu0 0.0
      %1257 = vmatpush1.msra.mxu0 0.0
      %1258 = vmatprep.subr.mxu0 0.0
      %1259 = vmatpush1.msra.mxu0 0.0
      %1260 = vmatprep.subr.mxu0 0.0
      %1261 = vmatpush1.msra.mxu0 0.0
      %1262 = vmatprep.subr.mxu0 0.0
      %1263 = vmatpush1.msra.mxu0 0.0
      %1264 = vmatprep.subr.mxu0 0.0
      %1265 = vmatpush1.msra.mxu0 0.0
      %1266 = vmatprep.subr.mxu0 0.0
      %1267 = vmatpush1.msra.mxu0 0.0
      %1268 = vmatprep.subr.mxu0 0.0
      %1269 = vmatpush1.msra.mxu0 0.0
      %1270 = vmatprep.subr.mxu0 0.0
      %1271 = vmatpush1.msra.mxu0 0.0
      %1272 = vmatprep.subr.mxu0 0.0
      %1273 = vmatpush1.msra.mxu0 0.0
      %1274 = vmatprep.mubr.f32.mxu0 0.0
      %1275 = vmatmul.mubr.f32.gmra.mrb[0].mxu0 %v1187
      %v1276 = vpop.f32.mrb[0].mxu0
      %v1277 = vadd.f32 0.0, %v1276
      %v1278 = vpop.f32.mrb[0].mxu0
      %1279 = vmatprep.mubr.f32.mxu0 0.0
      %1280 = vmatmul.mubr.f32.gmra.mrb[0].mxu0 %v1190
      %v1281 = vpop.f32.mrb[0].mxu0
      %v1282 = vadd.f32 0.0, %v1281
      %v1283 = vpop.f32.mrb[0].mxu0
      %1284 = vmatprep.mubr.f32.mxu0 0.0
      %1285 = vmatmul.mubr.f32.gmra.mrb[0].mxu0 %v1193
      %v1286 = vpop.f32.mrb[0].mxu0
      %v1287 = vadd.f32 0.0, %v1286
      %v1288 = vpop.f32.mrb[0].mxu0
      %1289 = vmatprep.mubr.f32.mxu0 0.0
      %1290 = vmatmul.mubr.f32.gmra.mrb[0].mxu0 %v1196
      %v1291 = vpop.f32.mrb[0].mxu0
      %v1292 = vadd.f32 0.0, %v1291
      %v1293 = vpop.f32.mrb[0].mxu0
      %1294 = vmatprep.mubr.f32.mxu0 0.0
      %1295 = vmatmul.mubr.f32.gmra.mrb[0].mxu0 %v1199
      %v1296 = vpop.f32.mrb[0].mxu0
      %v1297 = vadd.f32 0.0, %v1296
      %v1298 = vpop.f32.mrb[0].mxu0
      %1299 = vmatprep.mubr.f32.mxu0 0.0
      %1300 = vmatmul.mubr.f32.gmra.mrb[0].mxu0 %v1202
      %v1301 = vpop.f32.mrb[0].mxu0
      %v1302 = vadd.f32 0.0, %v1301
      %v1303 = vpop.f32.mrb[0].mxu0
      %1304 = vmatprep.mubr.f32.mxu0 0.0
      %1305 = vmatmul.mubr.f32.gmra.mrb[0].mxu0 %v1205
      %v1306 = vpop.f32.mrb[0].mxu0
      %v1307 = vadd.f32 0.0, %v1306
      %v1308 = vpop.f32.mrb[0].mxu0
      %1309 = vmatprep.mubr.f32.mxu0 0.0
      %1310 = vmatmul.mubr.f32.gmra.mrb[0].mxu0 %v1208
      %v1311 = vpop.f32.mrb[0].mxu0
      %v1312 = vadd.f32 0.0, %v1311
      %v1313 = vpop.f32.mrb[0].mxu0
      %1314 = vdwg.mxu0
      %v1315 = vadd.f32 %v1169, %v1277
      %v1316 = vadd.f32 %v1170, %v1282
      %v1317 = vadd.f32 %v1171, %v1287
      %v1318 = vadd.f32 %v1172, %v1292
      %v1319 = vadd.f32 %v1173, %v1297
      %v1320 = vadd.f32 %v1174, %v1302
      %v1321 = vadd.f32 %v1175, %v1307
      %v1322 = vadd.f32 %v1176, %v1312
      %v1323 = vld [vmem:[%s1177 + $0x1] sm:$0xff]
      %v1324 = vld [vmem:[%s1177 + $0x11] sm:$0xff]
      %v1325 = vld [vmem:[%s1177 + $0x21] sm:$0xff]
      %v1326 = vld [vmem:[%s1177 + $0x31] sm:$0xff]
      %v1327 = vld [vmem:[%s1177 + $0x41] sm:$0xff]
      %v1328 = vld [vmem:[%s1177 + $0x51] sm:$0xff]
      %v1329 = vld [vmem:[%s1177 + $0x61] sm:$0xff]
      %v1330 = vld [vmem:[%s1177 + $0x71] sm:$0xff]
      %v1332 = vsel %vm245, %v1323, 0
      %v1335 = vsel %vm245, %v1324, 0
      %v1338 = vsel %vm245, %v1325, 0
      %v1341 = vsel %vm245, %v1326, 0
      %v1344 = vsel %vm245, %v1327, 0
      %v1347 = vsel %vm245, %v1328, 0
      %v1350 = vsel %vm245, %v1329, 0
      %v1353 = vsel %vm245, %v1330, 0
      %1355 = vmatprep.subr.mxu0 0.0
      %1356 = vmatpush1.msra.mxu0 %v321
      %1357 = vmatprep.subr.mxu0 0.0
      %1358 = vmatpush1.msra.mxu0 0.0
      %1359 = vmatprep.subr.mxu0 0.0
      %1360 = vmatpush1.msra.mxu0 0.0
      %1361 = vmatprep.subr.mxu0 0.0
      %1362 = vmatpush1.msra.mxu0 0.0
      %1363 = vmatprep.subr.mxu0 0.0
      %1364 = vmatpush1.msra.mxu0 0.0
      %1365 = vmatprep.subr.mxu0 0.0
      %1366 = vmatpush1.msra.mxu0 0.0
      %1367 = vmatprep.subr.mxu0 0.0
      %1368 = vmatpush1.msra.mxu0 0.0
      %1369 = vmatprep.subr.mxu0 0.0
      %1370 = vmatpush1.msra.mxu0 0.0
      %1371 = vmatprep.subr.mxu0 0.0
      %1372 = vmatpush1.msra.mxu0 0.0
      %1373 = vmatprep.subr.mxu0 0.0
      %1374 = vmatpush1.msra.mxu0 0.0
      %1375 = vmatprep.subr.mxu0 0.0
      %1376 = vmatpush1.msra.mxu0 0.0
      %1377 = vmatprep.subr.mxu0 0.0
      %1378 = vmatpush1.msra.mxu0 0.0
      %1379 = vmatprep.subr.mxu0 0.0
      %1380 = vmatpush1.msra.mxu0 0.0
      %1381 = vmatprep.subr.mxu0 0.0
      %1382 = vmatpush1.msra.mxu0 0.0
      %1383 = vmatprep.subr.mxu0 0.0
      %1384 = vmatpush1.msra.mxu0 0.0
      %1385 = vmatprep.subr.mxu0 0.0
      %1386 = vmatpush1.msra.mxu0 0.0
      %1387 = vmatprep.subr.mxu0 0.0
      %1388 = vmatpush1.msra.mxu0 0.0
      %1389 = vmatprep.subr.mxu0 0.0
      %1390 = vmatpush1.msra.mxu0 0.0
      %1391 = vmatprep.subr.mxu0 0.0
      %1392 = vmatpush1.msra.mxu0 0.0
      %1393 = vmatprep.subr.mxu0 0.0
      %1394 = vmatpush1.msra.mxu0 0.0
      %1395 = vmatprep.subr.mxu0 0.0
      %1396 = vmatpush1.msra.mxu0 0.0
      %1397 = vmatprep.subr.mxu0 0.0
      %1398 = vmatpush1.msra.mxu0 0.0
      %1399 = vmatprep.subr.mxu0 0.0
      %1400 = vmatpush1.msra.mxu0 0.0
      %1401 = vmatprep.subr.mxu0 0.0
      %1402 = vmatpush1.msra.mxu0 0.0
      %1403 = vmatprep.subr.mxu0 0.0
      %1404 = vmatpush1.msra.mxu0 0.0
      %1405 = vmatprep.subr.mxu0 0.0
      %1406 = vmatpush1.msra.mxu0 0.0
      %1407 = vmatprep.subr.mxu0 0.0
      %1408 = vmatpush1.msra.mxu0 0.0
      %1409 = vmatprep.subr.mxu0 0.0
      %1410 = vmatpush1.msra.mxu0 0.0
      %1411 = vmatprep.subr.mxu0 0.0
      %1412 = vmatpush1.msra.mxu0 0.0
      %1413 = vmatprep.subr.mxu0 0.0
      %1414 = vmatpush1.msra.mxu0 0.0
      %1415 = vmatprep.subr.mxu0 0.0
      %1416 = vmatpush1.msra.mxu0 0.0
      %1417 = vmatprep.subr.mxu0 0.0
      %1418 = vmatpush1.msra.mxu0 0.0
      %1419 = vmatprep.mubr.f32.mxu0 0.0
      %1420 = vmatmul.mubr.f32.gmra.mrb[0].mxu0 %v1332
      %v1421 = vpop.f32.mrb[0].mxu0
      %v1422 = vadd.f32 0.0, %v1421
      %v1423 = vpop.f32.mrb[0].mxu0
      %1424 = vmatprep.mubr.f32.mxu0 0.0
      %1425 = vmatmul.mubr.f32.gmra.mrb[0].mxu0 %v1335
      %v1426 = vpop.f32.mrb[0].mxu0
      %v1427 = vadd.f32 0.0, %v1426
      %v1428 = vpop.f32.mrb[0].mxu0
      %1429 = vmatprep.mubr.f32.mxu0 0.0
      %1430 = vmatmul.mubr.f32.gmra.mrb[0].mxu0 %v1338
      %v1431 = vpop.f32.mrb[0].mxu0
      %v1432 = vadd.f32 0.0, %v1431
      %v1433 = vpop.f32.mrb[0].mxu0
      %1434 = vmatprep.mubr.f32.mxu0 0.0
      %1435 = vmatmul.mubr.f32.gmra.mrb[0].mxu0 %v1341
      %v1436 = vpop.f32.mrb[0].mxu0
      %v1437 = vadd.f32 0.0, %v1436
      %v1438 = vpop.f32.mrb[0].mxu0
      %1439 = vmatprep.mubr.f32.mxu0 0.0
      %1440 = vmatmul.mubr.f32.gmra.mrb[0].mxu0 %v1344
      %v1441 = vpop.f32.mrb[0].mxu0
      %v1442 = vadd.f32 0.0, %v1441
      %v1443 = vpop.f32.mrb[0].mxu0
      %1444 = vmatprep.mubr.f32.mxu0 0.0
      %1445 = vmatmul.mubr.f32.gmra.mrb[0].mxu0 %v1347
      %v1446 = vpop.f32.mrb[0].mxu0
      %v1447 = vadd.f32 0.0, %v1446
      %v1448 = vpop.f32.mrb[0].mxu0
      %1449 = vmatprep.mubr.f32.mxu0 0.0
      %1450 = vmatmul.mubr.f32.gmra.mrb[0].mxu0 %v1350
      %v1451 = vpop.f32.mrb[0].mxu0
      %v1452 = vadd.f32 0.0, %v1451
      %v1453 = vpop.f32.mrb[0].mxu0
      %1454 = vmatprep.mubr.f32.mxu0 0.0
      %1455 = vmatmul.mubr.f32.gmra.mrb[0].mxu0 %v1353
      %v1456 = vpop.f32.mrb[0].mxu0
      %v1457 = vadd.f32 0.0, %v1456
      %v1458 = vpop.f32.mrb[0].mxu0
      %1459 = vdwg.mxu0
      %v1460 = vadd.f32 %v1315, %v1422
      %v1461 = vadd.f32 %v1316, %v1427
      %v1462 = vadd.f32 %v1317, %v1432
      %v1463 = vadd.f32 %v1318, %v1437
      %v1464 = vadd.f32 %v1319, %v1442
      %v1465 = vadd.f32 %v1320, %v1447
      %v1466 = vadd.f32 %v1321, %v1452
      %v1467 = vadd.f32 %v1322, %v1457
      %v1468 = vld [vmem:[%s1177 + $0x2] sm:$0xff]
      %v1469 = vld [vmem:[%s1177 + $0x12] sm:$0xff]
      %v1470 = vld [vmem:[%s1177 + $0x22] sm:$0xff]
      %v1471 = vld [vmem:[%s1177 + $0x32] sm:$0xff]
      %v1472 = vld [vmem:[%s1177 + $0x42] sm:$0xff]
      %v1473 = vld [vmem:[%s1177 + $0x52] sm:$0xff]
      %v1474 = vld [vmem:[%s1177 + $0x62] sm:$0xff]
      %v1475 = vld [vmem:[%s1177 + $0x72] sm:$0xff]
      %v1477 = vsel %vm245, %v1468, 0
      %v1480 = vsel %vm245, %v1469, 0
      %v1483 = vsel %vm245, %v1470, 0
      %v1486 = vsel %vm245, %v1471, 0
      %v1489 = vsel %vm245, %v1472, 0
      %v1492 = vsel %vm245, %v1473, 0
      %v1495 = vsel %vm245, %v1474, 0
      %v1498 = vsel %vm245, %v1475, 0
      %1500 = vmatprep.subr.mxu0 0.0
      %1501 = vmatpush1.msra.mxu0 %v322
      %1502 = vmatprep.subr.mxu0 0.0
      %1503 = vmatpush1.msra.mxu0 0.0
      %1504 = vmatprep.subr.mxu0 0.0
      %1505 = vmatpush1.msra.mxu0 0.0
      %1506 = vmatprep.subr.mxu0 0.0
      %1507 = vmatpush1.msra.mxu0 0.0
      %1508 = vmatprep.subr.mxu0 0.0
      %1509 = vmatpush1.msra.mxu0 0.0
      %1510 = vmatprep.subr.mxu0 0.0
      %1511 = vmatpush1.msra.mxu0 0.0
      %1512 = vmatprep.subr.mxu0 0.0
      %1513 = vmatpush1.msra.mxu0 0.0
      %1514 = vmatprep.subr.mxu0 0.0
      %1515 = vmatpush1.msra.mxu0 0.0
      %1516 = vmatprep.subr.mxu0 0.0
      %1517 = vmatpush1.msra.mxu0 0.0
      %1518 = vmatprep.subr.mxu0 0.0
      %1519 = vmatpush1.msra.mxu0 0.0
      %1520 = vmatprep.subr.mxu0 0.0
      %1521 = vmatpush1.msra.mxu0 0.0
      %1522 = vmatprep.subr.mxu0 0.0
      %1523 = vmatpush1.msra.mxu0 0.0
      %1524 = vmatprep.subr.mxu0 0.0
      %1525 = vmatpush1.msra.mxu0 0.0
      %1526 = vmatprep.subr.mxu0 0.0
      %1527 = vmatpush1.msra.mxu0 0.0
      %1528 = vmatprep.subr.mxu0 0.0
      %1529 = vmatpush1.msra.mxu0 0.0
      %1530 = vmatprep.subr.mxu0 0.0
      %1531 = vmatpush1.msra.mxu0 0.0
      %1532 = vmatprep.subr.mxu0 0.0
      %1533 = vmatpush1.msra.mxu0 0.0
      %1534 = vmatprep.subr.mxu0 0.0
      %1535 = vmatpush1.msra.mxu0 0.0
      %1536 = vmatprep.subr.mxu0 0.0
      %1537 = vmatpush1.msra.mxu0 0.0
      %1538 = vmatprep.subr.mxu0 0.0
      %1539 = vmatpush1.msra.mxu0 0.0
      %1540 = vmatprep.subr.mxu0 0.0
      %1541 = vmatpush1.msra.mxu0 0.0
      %1542 = vmatprep.subr.mxu0 0.0
      %1543 = vmatpush1.msra.mxu0 0.0
      %1544 = vmatprep.subr.mxu0 0.0
      %1545 = vmatpush1.msra.mxu0 0.0
      %1546 = vmatprep.subr.mxu0 0.0
      %1547 = vmatpush1.msra.mxu0 0.0
      %1548 = vmatprep.subr.mxu0 0.0
      %1549 = vmatpush1.msra.mxu0 0.0
      %1550 = vmatprep.subr.mxu0 0.0
      %1551 = vmatpush1.msra.mxu0 0.0
      %1552 = vmatprep.subr.mxu0 0.0
      %1553 = vmatpush1.msra.mxu0 0.0
      %1554 = vmatprep.subr.mxu0 0.0
      %1555 = vmatpush1.msra.mxu0 0.0
      %1556 = vmatprep.subr.mxu0 0.0
      %1557 = vmatpush1.msra.mxu0 0.0
      %1558 = vmatprep.subr.mxu0 0.0
      %1559 = vmatpush1.msra.mxu0 0.0
      %1560 = vmatprep.subr.mxu0 0.0
      %1561 = vmatpush1.msra.mxu0 0.0
      %1562 = vmatprep.subr.mxu0 0.0
      %1563 = vmatpush1.msra.mxu0 0.0
      %1564 = vmatprep.mubr.f32.mxu0 0.0
      %1565 = vmatmul.mubr.f32.gmra.mrb[0].mxu0 %v1477
      %v1566 = vpop.f32.mrb[0].mxu0
      %v1567 = vadd.f32 0.0, %v1566
      %v1568 = vpop.f32.mrb[0].mxu0
      %1569 = vmatprep.mubr.f32.mxu0 0.0
      %1570 = vmatmul.mubr.f32.gmra.mrb[0].mxu0 %v1480
      %v1571 = vpop.f32.mrb[0].mxu0
      %v1572 = vadd.f32 0.0, %v1571
      %v1573 = vpop.f32.mrb[0].mxu0
      %1574 = vmatprep.mubr.f32.mxu0 0.0
      %1575 = vmatmul.mubr.f32.gmra.mrb[0].mxu0 %v1483
      %v1576 = vpop.f32.mrb[0].mxu0
      %v1577 = vadd.f32 0.0, %v1576
      %v1578 = vpop.f32.mrb[0].mxu0
      %1579 = vmatprep.mubr.f32.mxu0 0.0
      %1580 = vmatmul.mubr.f32.gmra.mrb[0].mxu0 %v1486
      %v1581 = vpop.f32.mrb[0].mxu0
      %v1582 = vadd.f32 0.0, %v1581
      %v1583 = vpop.f32.mrb[0].mxu0
      %1584 = vmatprep.mubr.f32.mxu0 0.0
      %1585 = vmatmul.mubr.f32.gmra.mrb[0].mxu0 %v1489
      %v1586 = vpop.f32.mrb[0].mxu0
      %v1587 = vadd.f32 0.0, %v1586
      %v1588 = vpop.f32.mrb[0].mxu0
      %1589 = vmatprep.mubr.f32.mxu0 0.0
      %1590 = vmatmul.mubr.f32.gmra.mrb[0].mxu0 %v1492
      %v1591 = vpop.f32.mrb[0].mxu0
      %v1592 = vadd.f32 0.0, %v1591
      %v1593 = vpop.f32.mrb[0].mxu0
      %1594 = vmatprep.mubr.f32.mxu0 0.0
      %1595 = vmatmul.mubr.f32.gmra.mrb[0].mxu0 %v1495
      %v1596 = vpop.f32.mrb[0].mxu0
      %v1597 = vadd.f32 0.0, %v1596
      %v1598 = vpop.f32.mrb[0].mxu0
      %1599 = vmatprep.mubr.f32.mxu0 0.0
      %1600 = vmatmul.mubr.f32.gmra.mrb[0].mxu0 %v1498
      %v1601 = vpop.f32.mrb[0].mxu0
      %v1602 = vadd.f32 0.0, %v1601
      %v1603 = vpop.f32.mrb[0].mxu0
      %1604 = vdwg.mxu0
      %v1605 = vadd.f32 %v1460, %v1567
      %v1606 = vadd.f32 %v1461, %v1572
      %v1607 = vadd.f32 %v1462, %v1577
      %v1608 = vadd.f32 %v1463, %v1582
      %v1609 = vadd.f32 %v1464, %v1587
      %v1610 = vadd.f32 %v1465, %v1592
      %v1611 = vadd.f32 %v1466, %v1597
      %v1612 = vadd.f32 %v1467, %v1602
      %v1613 = vand.u32 2147483647, %v1605
      %v1614 = vand.u32 2147483647, %v1606
      %v1615 = vand.u32 2147483647, %v1607
      %v1616 = vand.u32 2147483647, %v1608
      %v1617 = vand.u32 2147483647, %v1609
      %v1618 = vand.u32 2147483647, %v1610
      %v1619 = vand.u32 2147483647, %v1611
      %v1620 = vand.u32 2147483647, %v1612
      %v1621 = vadd.f32 %v1613, 1.0
      %v1622 = vadd.f32 %v1614, 1.0
      %v1623 = vadd.f32 %v1615, 1.0
      %v1624 = vadd.f32 %v1616, 1.0
      %v1625 = vadd.f32 %v1617, 1.0
      %v1626 = vadd.f32 %v1618, 1.0
      %v1627 = vadd.f32 %v1619, 1.0
      %v1628 = vadd.f32 %v1620, 1.0
      %v1629 = vrcp.pop %v1621
      %v1630 = vmul.f32 %v1605, %v1629
      %v1631 = vrcp.pop %v1622
      %v1632 = vmul.f32 %v1606, %v1631
      %v1633 = vrcp.pop %v1623
      %v1634 = vmul.f32 %v1607, %v1633
      %v1635 = vrcp.pop %v1624
      %v1636 = vmul.f32 %v1608, %v1635
      %v1637 = vrcp.pop %v1625
      %v1638 = vmul.f32 %v1609, %v1637
      %v1639 = vrcp.pop %v1626
      %v1640 = vmul.f32 %v1610, %v1639
      %v1641 = vrcp.pop %v1627
      %v1642 = vmul.f32 %v1611, %v1641
      %v1643 = vrcp.pop %v1628
      %v1644 = vmul.f32 %v1612, %v1643
      %v1645 = vld [vmem:[%s239] sm:$0xff]
      %v1646 = vld [vmem:[%s239 + $0x8] sm:$0xff]
      %v1647 = vld [vmem:[%s239 + $0x10] sm:$0xff]
      %v1648 = vld [vmem:[%s239 + $0x18] sm:$0xff]
      %v1649 = vld [vmem:[%s239 + $0x20] sm:$0xff]
      %v1650 = vld [vmem:[%s239 + $0x28] sm:$0xff]
      %v1651 = vld [vmem:[%s239 + $0x30] sm:$0xff]
      %v1652 = vld [vmem:[%s239 + $0x38] sm:$0xff]
      %v1653 = vadd.f32 %v1630, %v1645
      %v1654 = vadd.f32 %v1632, %v1646
      %v1655 = vadd.f32 %v1634, %v1647
      %v1656 = vadd.f32 %v1636, %v1648
      %v1657 = vadd.f32 %v1638, %v1649
      %v1658 = vadd.f32 %v1640, %v1650
      %v1659 = vadd.f32 %v1642, %v1651
      %v1660 = vadd.f32 %v1644, %v1652
      %1661 = vst.msk [vmem:[%s244] sm:$0xff] %vm245, %v1653
      %1662 = vst.msk [vmem:[%s244 + $0x8] sm:$0xff] %vm245, %v1654
      %1663 = vst.msk [vmem:[%s244 + $0x10] sm:$0xff] %vm245, %v1655
      %1664 = vst.msk [vmem:[%s244 + $0x18] sm:$0xff] %vm245, %v1656
      %1665 = vst.msk [vmem:[%s244 + $0x20] sm:$0xff] %vm245, %v1657
      %1666 = vst.msk [vmem:[%s244 + $0x28] sm:$0xff] %vm245, %v1658
      %1667 = vst.msk [vmem:[%s244 + $0x30] sm:$0xff] %vm245, %v1659
      %1668 = vst.msk [vmem:[%s244 + $0x38] sm:$0xff] %vm245, %v1660
      %p1669 = scmp.lt.s32.totalorder %s16, 1
      %s1670 = scalar_select %p1669, %s16, 1
      %s1671 = smul.addr %s1670, 8
      %s1672 = smul.addr %s1671, 8
      %s1673 = scalar_lea.vmem %s5, %s1672
      // Predicated region
      $region41: #{preact_block_forward.5} parent=39 // pred_check
        %p1674 = pneg %p149
      $region42: #{preact_block_forward.5} parent=39 // pred_check_branch
        %1676 = sbr.rel (%p1674) target = $region44
      $region43: #{preact_block_forward.5} parent=39 // pred_region
        _
      $region44: #{preact_block_forward.5} parent=39 // pred_fallthru
        _
    $region40: #{preact_block_forward.5} parent=5 // pred_fallthru
      _
    %p1677 = scmp.le.s32.totalorder 2, %s11
    // Predicated region
    $region45: #{preact_block_forward.5} parent=5 // pred_check
      %p1678 = pneg %p1677
    $region46: #{preact_block_forward.5} parent=5 // pred_check_branch
      %1680 = sbr.rel (%p1678) target = $region48
    $region47: #{preact_block_forward.5} parent=5 // pred_region
      %s1681 = ssub.s32 %s11, 2
      // Predicated region
      $region49: #{preact_block_forward.5} parent=47 // pred_check
        %p1682 = pneg %p155
      $region50: #{preact_block_forward.5} parent=47 // pred_check_branch
        %1684 = sbr.rel (%p1682) target = $region52
      $region51: #{preact_block_forward.5} parent=47 // pred_region
        %p1685 = scmp.lt.s32.totalorder %s17, 1
        %s1686 = scalar_select %p1685, %s17, 1
        %s1687 = smul.addr %s1686, 8
        %s1688 = smul.addr %s1687, 8
        %s1689 = scalar_lea.vmem %s5, %s1688
      $region52: #{preact_block_forward.5} parent=47 // pred_fallthru
        _
    $region48: #{preact_block_forward.5} parent=5 // pred_fallthru
      _
  $region6: #{preact_block_forward.5} parent=0 // loop_footer
    %s15 = sadd.s32 1, %s11
  $region7: #{preact_block_forward.5} parent=0 // loop_footer_branch
    %10 = sbr.rel target = $region3
  $region8: #{preact_block_forward.5} parent=0 // loop_exit
    _

</llo_original>
